<compile_context>
chip_gen: v6e
topology: v6e:2x2x1
jax: 0.10.0
libtpu: 0.0.40
codegen_flags: <defaults>
</compile_context>

<pallas_src>
import math
import functools

import jax
import jax.numpy as jnp
from jax.experimental import pallas as pl
from jax.experimental.pallas import tpu as pltpu


# ----------------------------- fused Pallas kernel ---------------------------

def _layer_norm(x, gamma, beta, eps=1e-5):
    mu = jnp.mean(x, axis=-1, keepdims=True)
    var = jnp.mean((x - mu) ** 2, axis=-1, keepdims=True)
    return (x - mu) * jax.lax.rsqrt(var + eps) * gamma + beta


def style_extractor_kernel(x_ref, mask_ref,
                           wqk_ref, bqk_ref, wvo_ref, bvo_ref,
                           ln1g_ref, ln1b_ref,
                           w1_ref, b1_ref, w2_ref, b2_ref,
                           ln2g_ref, ln2b_ref,
                           denw_ref, denb_ref, out_ref, *, num_heads):
    f32 = jnp.float32
    B, S, D = x_ref.shape
    n_blocks = wqk_ref.shape[0]
    hd = D // num_heads
    scale = 1.0 / math.sqrt(hd)

    S1 = S + 1                              # real length incl. prepended mask token
    Sp = ((S1 + 7) // 8) * 8                # pad sequence to a sublane multiple of 8
    BS = B * Sp

    # ---- build the padded activation in VMEM (prepend mask token, zero padding) ----
    x = x_ref[...].astype(f32)                                         # (B, S, D)
    mask_tok = jnp.broadcast_to(mask_ref[...].astype(f32).reshape(1, 1, D), (B, 1, D))
    pad = jnp.zeros((B, Sp - S1, D), f32)
    h3 = jnp.concatenate([mask_tok, x, pad], axis=1)                   # (B, Sp, D)

    # additive bias that removes the padded key rows from every attention softmax
    key_pos = jax.lax.broadcasted_iota(jnp.int32, (1, Sp), 1)
    attn_bias = jnp.where(key_pos < S1, 0.0, -1e30).astype(f32).reshape(1, 1, Sp)

    # ---- static unroll over transformer blocks (activation stays resident) ----
    for l in range(n_blocks):
        wqk, bqk = wqk_ref[l], bqk_ref[l]           # (D, 2D), (1, 2D)
        wvo, bvo = wvo_ref[l], bvo_ref[l]           # (D, H*D), (1, D)
        ln1g, ln1b = ln1g_ref[l], ln1b_ref[l]
        w1, b1 = w1_ref[l], b1_ref[l]
        w2, b2 = w2_ref[l], b2_ref[l]
        ln2g, ln2b = ln2g_ref[l], ln2b_ref[l]

        h2 = h3.reshape(BS, D)                                         # (B*Sp, D)
        qk = jnp.dot(h2, wqk, preferred_element_type=f32) + bqk        # (BS, 2D)
        vo = jnp.dot(h2, wvo, preferred_element_type=f32)              # (BS, H*D)
        q3 = qk[:, :D].reshape(B, Sp, D)
        k3 = qk[:, D:].reshape(B, Sp, D)

        att = jnp.zeros((B, Sp, D), f32)
        for hh in range(num_heads):
            lo = hh * hd
            s = jnp.einsum('bqd,bkd->bqk',
                           q3[..., lo:lo + hd], k3[..., lo:lo + hd],
                           preferred_element_type=f32) * scale + attn_bias
            s = s - jnp.max(s, axis=-1, keepdims=True)
            p = jnp.exp(s)
            p = p * pl.reciprocal(jnp.sum(p, axis=-1, keepdims=True), approx=True)
            # value path already carries Wo folded in: (P @ V_h) @ Wo_h == P @ (V_h @ Wo_h)
            vo_h = vo[:, hh * D:(hh + 1) * D].reshape(B, Sp, D)
            att = att + jnp.einsum('bqk,bkd->bqd', p, vo_h, preferred_element_type=f32)

        att2 = att.reshape(BS, D) + bvo                                # bvo = bv@Wo + bo
        x1 = _layer_norm(h2 + att2, ln1g, ln1b)
        ff = jnp.maximum(jnp.dot(x1, w1, preferred_element_type=f32) + b1, 0.0)
        ff = jnp.dot(ff, w2, preferred_element_type=f32) + b2
        x2 = _layer_norm(x1 + ff, ln2g, ln2b)
        h3 = x2.reshape(B, Sp, D)

    # ---- final dense projection of the mask/CLS token (row 0 of each batch) ----
    cls = h3[:, 0:1, :].reshape(B, D)
    out = jnp.dot(cls, denw_ref[...], preferred_element_type=f32) + denb_ref[...]
    out_ref[...] = out.astype(out_ref.dtype)


# ----------------------------- wrapper ---------------------------------------

def style_extractor_forward(x, params, num_heads):
    """x: (B, S, D). Returns (B, dim_output). Single fused pallas_call."""
    B, S, D = x.shape
    L = params["wq"].shape[0]
    H = num_heads
    hd = D // H
    Dout = params["den_w"].shape[1]

    # Trace-time weight prep (tiny; done once per call outside the kernel):
    #  * fuse Q/K projections into one lane-width-2D matmul,
    #  * fold each head's Wo slice into Wv -> one lane-width-(H*D) value matmul.
    wqk = jnp.concatenate([params["wq"], params["wk"]], axis=-1)        # (L, D, 2D)
    bqk = jnp.concatenate([params["bq"], params["bk"]], axis=-1)        # (L, 1, 2D)
    wv4 = params["wv"].reshape(L, D, H, hd)
    wo4 = params["wo"].reshape(L, H, hd, D)
    wvo = jnp.einsum('ldhe,lhef->ldhf', wv4, wo4).reshape(L, D, H * D)  # (L, D, H*D)
    bvo = jnp.matmul(params["bv"], params["wo"]) + params["bo"]         # (L, 1, D)

    args = [x, params["mask_ebd"],
            wqk, bqk, wvo, bvo,
            params["ln1_g"], params["ln1_b"],
            params["w1"], params["b1"], params["w2"], params["b2"],
            params["ln2_g"], params["ln2_b"],
            params["den_w"], params["den_b"]]

    def full_spec(a):
        idx = (0,) * a.ndim
        return pl.BlockSpec(a.shape, lambda *_, _idx=idx: _idx)

    return pl.pallas_call(
        functools.partial(style_extractor_kernel, num_heads=num_heads),
        out_shape=jax.ShapeDtypeStruct((B, Dout), x.dtype),
        in_specs=[full_spec(a) for a in args],
        out_specs=pl.BlockSpec((B, Dout), lambda *_: (0, 0)),
        compiler_params=pltpu.CompilerParams(vmem_limit_bytes=32 * 1024 * 1024),
    )(*args)


# ----------------------------- param init ------------------------------------

def xavier_uniform(key, shape):
    fan_in, fan_out = shape[-2], shape[-1]
    lim = math.sqrt(6.0 / (fan_in + fan_out))
    return jax.random.uniform(key, shape, jnp.float32, -lim, lim)


def init_params(key, dim_hidden, dim_output, n_blocks):
    D, F, L = dim_hidden, dim_hidden * 4, n_blocks
    keys = jax.random.split(key, 8)
    params = dict(
        wq=xavier_uniform(keys[0], (L, D, D)), bq=jnp.zeros((L, 1, D), jnp.float32),
        wk=xavier_uniform(keys[1], (L, D, D)), bk=jnp.zeros((L, 1, D), jnp.float32),
        wv=xavier_uniform(keys[2], (L, D, D)), bv=jnp.zeros((L, 1, D), jnp.float32),
        wo=xavier_uniform(keys[3], (L, D, D)), bo=jnp.zeros((L, 1, D), jnp.float32),
        ln1_g=jnp.ones((L, 1, D), jnp.float32), ln1_b=jnp.zeros((L, 1, D), jnp.float32),
        w1=xavier_uniform(keys[4], (L, D, F)), b1=jnp.zeros((L, 1, F), jnp.float32),
        w2=xavier_uniform(keys[5], (L, F, D)), b2=jnp.zeros((L, 1, D), jnp.float32),
        ln2_g=jnp.ones((L, 1, D), jnp.float32), ln2_b=jnp.zeros((L, 1, D), jnp.float32),
    )
    lim = math.sqrt(6.0 / (1 + D))  # xavier_uniform_ on (1,1,D) -> fans (1, D)
    params["mask_ebd"] = jax.random.uniform(keys[6], (1, D), jnp.float32, -lim, lim)
    params["den_w"] = xavier_uniform(keys[7], (D, dim_output))
    params["den_b"] = jnp.zeros((1, dim_output), jnp.float32)
    return params


# ----------------------------- pure-JAX reference ----------------------------

def reference_forward(x, params, num_heads):
    B, S, D = x.shape
    hd = D // num_heads
    h = jnp.concatenate(
        [jnp.broadcast_to(params["mask_ebd"].reshape(1, 1, D), (B, 1, D)), x], axis=1)
    L = params["wq"].shape[0]
    for l in range(L):
        q = h @ params["wq"][l] + params["bq"][l]
        k = h @ params["wk"][l] + params["bk"][l]
        v = h @ params["wv"][l] + params["bv"][l]
        T = h.shape[1]
        qs = q.reshape(B, T, num_heads, hd).transpose(0, 2, 1, 3)
        ks = k.reshape(B, T, num_heads, hd).transpose(0, 2, 1, 3)
        vs = v.reshape(B, T, num_heads, hd).transpose(0, 2, 1, 3)
        s = jnp.einsum("bhqd,bhkd->bhqk", qs, ks) / math.sqrt(hd)
        a = jax.nn.softmax(s, axis=-1)
        o = jnp.einsum("bhqk,bhkd->bhqd", a, vs).transpose(0, 2, 1, 3).reshape(B, T, D)
        o = o @ params["wo"][l] + params["bo"][l]
        h1 = h + o
        h1 = (h1 - h1.mean(-1, keepdims=True)) / jnp.sqrt(h1.var(-1, keepdims=True) + 1e-5)
        h1 = h1 * params["ln1_g"][l] + params["ln1_b"][l]
        f = jnp.maximum(h1 @ params["w1"][l] + params["b1"][l], 0.0) @ params["w2"][l] + params["b2"][l]
        h2 = h1 + f
        h2 = (h2 - h2.mean(-1, keepdims=True)) / jnp.sqrt(h2.var(-1, keepdims=True) + 1e-5)
        h = h2 * params["ln2_g"][l] + params["ln2_b"][l]
    return h[:, 0, :] @ params["den_w"] + params["den_b"]


# ----------------------------- main -------------------------------------------

if __name__ == "__main__":
    B, S, dim_hidden, dim_output, num_heads, n_blocks = 2, 8, 32, 16, 4, 2

    key = jax.random.PRNGKey(0)
    k_x, k_p = jax.random.split(key)
    x = jax.random.normal(k_x, (B, S, dim_hidden), jnp.float32)
    params = init_params(k_p, dim_hidden, dim_output, n_blocks)

    out = style_extractor_forward(x, params, num_heads)
    out = jax.block_until_ready(out)
    assert out.shape == (B, dim_output)

    ref = reference_forward(x, params, num_heads)
    # tolerance slightly relaxed for the approx (EUP) reciprocal in the softmax
    assert jnp.allclose(out, ref, atol=5e-3, rtol=5e-3), "mismatch vs pure-JAX reference"

    print("KERNEL_OK")
</pallas_src>

<mosaic_0001>
module attributes {stable_mosaic.version = 11 : i64} {
  func.func @style_extractor_kernel(%arg0: memref<2x8x32xf32, #tpu.memory_space<vmem>>, %arg1: memref<1x32xf32, #tpu.memory_space<vmem>>, %arg2: memref<2x32x64xf32, #tpu.memory_space<vmem>>, %arg3: memref<2x1x64xf32, #tpu.memory_space<vmem>>, %arg4: memref<2x32x128xf32, #tpu.memory_space<vmem>>, %arg5: memref<2x1x32xf32, #tpu.memory_space<vmem>>, %arg6: memref<2x1x32xf32, #tpu.memory_space<vmem>>, %arg7: memref<2x1x32xf32, #tpu.memory_space<vmem>>, %arg8: memref<2x32x128xf32, #tpu.memory_space<vmem>>, %arg9: memref<2x1x128xf32, #tpu.memory_space<vmem>>, %arg10: memref<2x128x32xf32, #tpu.memory_space<vmem>>, %arg11: memref<2x1x32xf32, #tpu.memory_space<vmem>>, %arg12: memref<2x1x32xf32, #tpu.memory_space<vmem>>, %arg13: memref<2x1x32xf32, #tpu.memory_space<vmem>>, %arg14: memref<32x16xf32, #tpu.memory_space<vmem>>, %arg15: memref<1x16xf32, #tpu.memory_space<vmem>>, %arg16: memref<2x16xf32, #tpu.memory_space<vmem>>) attributes {dimension_semantics = [], scalar_prefetch = 0 : i64, scratch_operands = 0 : i64, tpu.core_type = #tpu.core_type<tc>} {
    %c0 = arith.constant 0 : index
    %c0_0 = arith.constant 0 : index
    %c0_1 = arith.constant 0 : index
    %0 = vector.load %arg0[%c0, %c0_0, %c0_1] : memref<2x8x32xf32, #tpu.memory_space<vmem>>, vector<2x8x32xf32>
    %c0_2 = arith.constant 0 : index
    %c0_3 = arith.constant 0 : index
    %1 = vector.load %arg1[%c0_2, %c0_3] : memref<1x32xf32, #tpu.memory_space<vmem>>, vector<1x32xf32>
    %2 = vector.shape_cast %1 : vector<1x32xf32> to vector<1x1x32xf32>
    %3 = vector.shape_cast %2 : vector<1x1x32xf32> to vector<1x1x32xf32>
    %4 = vector.broadcast %3 : vector<1x1x32xf32> to vector<2x1x32xf32>
    %cst = arith.constant 0.000000e+00 : f32
    %5 = vector.broadcast %cst : f32 to vector<2x7x32xf32>
    %6 = tpu.concatenate %4, %0, %5 in 1 : vector<2x1x32xf32>, vector<2x8x32xf32>, vector<2x7x32xf32> -> vector<2x16x32xf32>
    %7 = tpu.iota {dimensions = array<i32: 1>} : vector<1x16xi32>
    %c9_i32 = arith.constant 9 : i32
    %8 = vector.broadcast %c9_i32 : i32 to vector<1x16xi32>
    %9 = arith.cmpi slt, %7, %8 : vector<1x16xi32>
    %cst_4 = arith.constant 0.000000e+00 : f32
    %cst_5 = arith.constant -1.000000e+30 : f32
    %10 = vector.broadcast %cst_4 : f32 to vector<1x16xf32>
    %11 = vector.broadcast %cst_5 : f32 to vector<1x16xf32>
    %12 = arith.select %9, %10, %11 : vector<1x16xi1>, vector<1x16xf32>
    %13 = vector.shape_cast %12 : vector<1x16xf32> to vector<1x1x16xf32>
    %c0_6 = arith.constant 0 : index
    %c0_7 = arith.constant 0 : index
    %c0_8 = arith.constant 0 : index
    %14 = vector.load %arg2[%c0_6, %c0_7, %c0_8] : memref<2x32x64xf32, #tpu.memory_space<vmem>>, vector<1x32x64xf32>
    %15 = vector.shape_cast %14 : vector<1x32x64xf32> to vector<32x64xf32>
    %c0_9 = arith.constant 0 : index
    %c0_10 = arith.constant 0 : index
    %c0_11 = arith.constant 0 : index
    %16 = vector.load %arg3[%c0_9, %c0_10, %c0_11] : memref<2x1x64xf32, #tpu.memory_space<vmem>>, vector<1x1x64xf32>
    %17 = vector.shape_cast %16 : vector<1x1x64xf32> to vector<1x64xf32>
    %c0_12 = arith.constant 0 : index
    %c0_13 = arith.constant 0 : index
    %c0_14 = arith.constant 0 : index
    %18 = vector.load %arg4[%c0_12, %c0_13, %c0_14] : memref<2x32x128xf32, #tpu.memory_space<vmem>>, vector<1x32x128xf32>
    %19 = vector.shape_cast %18 : vector<1x32x128xf32> to vector<32x128xf32>
    %c0_15 = arith.constant 0 : index
    %c0_16 = arith.constant 0 : index
    %c0_17 = arith.constant 0 : index
    %20 = vector.load %arg5[%c0_15, %c0_16, %c0_17] : memref<2x1x32xf32, #tpu.memory_space<vmem>>, vector<1x1x32xf32>
    %21 = vector.shape_cast %20 : vector<1x1x32xf32> to vector<1x32xf32>
    %c0_18 = arith.constant 0 : index
    %c0_19 = arith.constant 0 : index
    %c0_20 = arith.constant 0 : index
    %22 = vector.load %arg6[%c0_18, %c0_19, %c0_20] : memref<2x1x32xf32, #tpu.memory_space<vmem>>, vector<1x1x32xf32>
    %23 = vector.shape_cast %22 : vector<1x1x32xf32> to vector<1x32xf32>
    %c0_21 = arith.constant 0 : index
    %c0_22 = arith.constant 0 : index
    %c0_23 = arith.constant 0 : index
    %24 = vector.load %arg7[%c0_21, %c0_22, %c0_23] : memref<2x1x32xf32, #tpu.memory_space<vmem>>, vector<1x1x32xf32>
    %25 = vector.shape_cast %24 : vector<1x1x32xf32> to vector<1x32xf32>
    %c0_24 = arith.constant 0 : index
    %c0_25 = arith.constant 0 : index
    %c0_26 = arith.constant 0 : index
    %26 = vector.load %arg8[%c0_24, %c0_25, %c0_26] : memref<2x32x128xf32, #tpu.memory_space<vmem>>, vector<1x32x128xf32>
    %27 = vector.shape_cast %26 : vector<1x32x128xf32> to vector<32x128xf32>
    %c0_27 = arith.constant 0 : index
    %c0_28 = arith.constant 0 : index
    %c0_29 = arith.constant 0 : index
    %28 = vector.load %arg9[%c0_27, %c0_28, %c0_29] : memref<2x1x128xf32, #tpu.memory_space<vmem>>, vector<1x1x128xf32>
    %29 = vector.shape_cast %28 : vector<1x1x128xf32> to vector<1x128xf32>
    %c0_30 = arith.constant 0 : index
    %c0_31 = arith.constant 0 : index
    %c0_32 = arith.constant 0 : index
    %30 = vector.load %arg10[%c0_30, %c0_31, %c0_32] : memref<2x128x32xf32, #tpu.memory_space<vmem>>, vector<1x128x32xf32>
    %31 = vector.shape_cast %30 : vector<1x128x32xf32> to vector<128x32xf32>
    %c0_33 = arith.constant 0 : index
    %c0_34 = arith.constant 0 : index
    %c0_35 = arith.constant 0 : index
    %32 = vector.load %arg11[%c0_33, %c0_34, %c0_35] : memref<2x1x32xf32, #tpu.memory_space<vmem>>, vector<1x1x32xf32>
    %33 = vector.shape_cast %32 : vector<1x1x32xf32> to vector<1x32xf32>
    %c0_36 = arith.constant 0 : index
    %c0_37 = arith.constant 0 : index
    %c0_38 = arith.constant 0 : index
    %34 = vector.load %arg12[%c0_36, %c0_37, %c0_38] : memref<2x1x32xf32, #tpu.memory_space<vmem>>, vector<1x1x32xf32>
    %35 = vector.shape_cast %34 : vector<1x1x32xf32> to vector<1x32xf32>
    %c0_39 = arith.constant 0 : index
    %c0_40 = arith.constant 0 : index
    %c0_41 = arith.constant 0 : index
    %36 = vector.load %arg13[%c0_39, %c0_40, %c0_41] : memref<2x1x32xf32, #tpu.memory_space<vmem>>, vector<1x1x32xf32>
    %37 = vector.shape_cast %36 : vector<1x1x32xf32> to vector<1x32xf32>
    %38 = vector.shape_cast %6 : vector<2x16x32xf32> to vector<32x32xf32>
    %cst_42 = arith.constant dense<0.000000e+00> : vector<32x64xf32>
    %39 = tpu.matmul %38, %15, %cst_42 {dimension_numbers = #tpu.dot_dimension_numbers<[1], [0], [0], [1], [0, 0, 1, 1], [], []>} : vector<32x32xf32>, vector<32x64xf32>, vector<32x64xf32> -> vector<32x64xf32>
    %40 = vector.broadcast %17 : vector<1x64xf32> to vector<32x64xf32>
    %41 = arith.addf %39, %40 : vector<32x64xf32>
    %cst_43 = arith.constant dense<0.000000e+00> : vector<32x128xf32>
    %42 = tpu.matmul %38, %19, %cst_43 {dimension_numbers = #tpu.dot_dimension_numbers<[1], [0], [0], [1], [0, 0, 1, 1], [], []>} : vector<32x32xf32>, vector<32x128xf32>, vector<32x128xf32> -> vector<32x128xf32>
    %43 = vector.extract_strided_slice %41 {offsets = [0, 0], sizes = [32, 32], strides = [1, 1]} : vector<32x64xf32> to vector<32x32xf32>
    %44 = vector.shape_cast %43 : vector<32x32xf32> to vector<2x16x32xf32>
    %45 = vector.extract_strided_slice %41 {offsets = [0, 32], sizes = [32, 32], strides = [1, 1]} : vector<32x64xf32> to vector<32x32xf32>
    %46 = vector.shape_cast %45 : vector<32x32xf32> to vector<2x16x32xf32>
    %cst_44 = arith.constant 0.000000e+00 : f32
    %47 = vector.broadcast %cst_44 : f32 to vector<2x16x32xf32>
    %48 = vector.extract_strided_slice %44 {offsets = [0, 0, 0], sizes = [2, 16, 8], strides = [1, 1, 1]} : vector<2x16x32xf32> to vector<2x16x8xf32>
    %49 = vector.extract_strided_slice %46 {offsets = [0, 0, 0], sizes = [2, 16, 8], strides = [1, 1, 1]} : vector<2x16x32xf32> to vector<2x16x8xf32>
    "tpu.trace_start"() <{level = 10 : i32, message = "bqd,bkd->bqk"}> : () -> ()
    %cst_45 = arith.constant dense<0.000000e+00> : vector<2x16x16xf32>
    %50 = tpu.matmul %48, %49, %cst_45 {dimension_numbers = #tpu.dot_dimension_numbers<[2], [2], [1], [1], [0, 0, 0, 1, 1, 1], [0], [0]>} : vector<2x16x8xf32>, vector<2x16x8xf32>, vector<2x16x16xf32> -> vector<2x16x16xf32>
    "tpu.trace_stop"() : () -> ()
    %cst_46 = arith.constant 0.353553385 : f32
    %51 = vector.broadcast %cst_46 : f32 to vector<2x16x16xf32>
    %52 = arith.mulf %50, %51 : vector<2x16x16xf32>
    %53 = vector.broadcast %13 : vector<1x1x16xf32> to vector<2x16x16xf32>
    %54 = arith.addf %52, %53 : vector<2x16x16xf32>
    %cst_47 = arith.constant dense<0xFF800000> : vector<2x16xf32>
    %55 = vector.multi_reduction <maximumf>, %54, %cst_47 [2] : vector<2x16x16xf32> to vector<2x16xf32>
    %56 = vector.shape_cast %55 : vector<2x16xf32> to vector<2x16x1xf32>
    %57 = vector.broadcast %56 : vector<2x16x1xf32> to vector<2x16x16xf32>
    %58 = arith.subf %54, %57 : vector<2x16x16xf32>
    %59 = math.exp %58 : vector<2x16x16xf32>
    %cst_48 = arith.constant dense<0.000000e+00> : vector<2x16xf32>
    %60 = vector.multi_reduction <add>, %59, %cst_48 [2] : vector<2x16x16xf32> to vector<2x16xf32>
    %61 = vector.shape_cast %60 : vector<2x16xf32> to vector<2x16x1xf32>
    %62 = tpu.reciprocal %61 {approx = true} : vector<2x16x1xf32> -> vector<2x16x1xf32>
    %63 = vector.broadcast %62 : vector<2x16x1xf32> to vector<2x16x16xf32>
    %64 = arith.mulf %59, %63 : vector<2x16x16xf32>
    %65 = vector.extract_strided_slice %42 {offsets = [0, 0], sizes = [32, 32], strides = [1, 1]} : vector<32x128xf32> to vector<32x32xf32>
    %66 = vector.shape_cast %65 : vector<32x32xf32> to vector<2x16x32xf32>
    "tpu.trace_start"() <{level = 10 : i32, message = "bqk,bkd->bqd"}> : () -> ()
    %cst_49 = arith.constant dense<0.000000e+00> : vector<2x16x32xf32>
    %67 = tpu.matmul %64, %66, %cst_49 {dimension_numbers = #tpu.dot_dimension_numbers<[2], [1], [1], [2], [0, 0, 0, 1, 1, 2], [0], [0]>} : vector<2x16x16xf32>, vector<2x16x32xf32>, vector<2x16x32xf32> -> vector<2x16x32xf32>
    "tpu.trace_stop"() : () -> ()
    %68 = arith.addf %47, %67 : vector<2x16x32xf32>
    %69 = vector.extract_strided_slice %44 {offsets = [0, 0, 8], sizes = [2, 16, 8], strides = [1, 1, 1]} : vector<2x16x32xf32> to vector<2x16x8xf32>
    %70 = vector.extract_strided_slice %46 {offsets = [0, 0, 8], sizes = [2, 16, 8], strides = [1, 1, 1]} : vector<2x16x32xf32> to vector<2x16x8xf32>
    "tpu.trace_start"() <{level = 10 : i32, message = "bqd,bkd->bqk"}> : () -> ()
    %cst_50 = arith.constant dense<0.000000e+00> : vector<2x16x16xf32>
    %71 = tpu.matmul %69, %70, %cst_50 {dimension_numbers = #tpu.dot_dimension_numbers<[2], [2], [1], [1], [0, 0, 0, 1, 1, 1], [0], [0]>} : vector<2x16x8xf32>, vector<2x16x8xf32>, vector<2x16x16xf32> -> vector<2x16x16xf32>
    "tpu.trace_stop"() : () -> ()
    %cst_51 = arith.constant 0.353553385 : f32
    %72 = vector.broadcast %cst_51 : f32 to vector<2x16x16xf32>
    %73 = arith.mulf %71, %72 : vector<2x16x16xf32>
    %74 = vector.broadcast %13 : vector<1x1x16xf32> to vector<2x16x16xf32>
    %75 = arith.addf %73, %74 : vector<2x16x16xf32>
    %cst_52 = arith.constant dense<0xFF800000> : vector<2x16xf32>
    %76 = vector.multi_reduction <maximumf>, %75, %cst_52 [2] : vector<2x16x16xf32> to vector<2x16xf32>
    %77 = vector.shape_cast %76 : vector<2x16xf32> to vector<2x16x1xf32>
    %78 = vector.broadcast %77 : vector<2x16x1xf32> to vector<2x16x16xf32>
    %79 = arith.subf %75, %78 : vector<2x16x16xf32>
    %80 = math.exp %79 : vector<2x16x16xf32>
    %cst_53 = arith.constant dense<0.000000e+00> : vector<2x16xf32>
    %81 = vector.multi_reduction <add>, %80, %cst_53 [2] : vector<2x16x16xf32> to vector<2x16xf32>
    %82 = vector.shape_cast %81 : vector<2x16xf32> to vector<2x16x1xf32>
    %83 = tpu.reciprocal %82 {approx = true} : vector<2x16x1xf32> -> vector<2x16x1xf32>
    %84 = vector.broadcast %83 : vector<2x16x1xf32> to vector<2x16x16xf32>
    %85 = arith.mulf %80, %84 : vector<2x16x16xf32>
    %86 = vector.extract_strided_slice %42 {offsets = [0, 32], sizes = [32, 32], strides = [1, 1]} : vector<32x128xf32> to vector<32x32xf32>
    %87 = vector.shape_cast %86 : vector<32x32xf32> to vector<2x16x32xf32>
    "tpu.trace_start"() <{level = 10 : i32, message = "bqk,bkd->bqd"}> : () -> ()
    %cst_54 = arith.constant dense<0.000000e+00> : vector<2x16x32xf32>
    %88 = tpu.matmul %85, %87, %cst_54 {dimension_numbers = #tpu.dot_dimension_numbers<[2], [1], [1], [2], [0, 0, 0, 1, 1, 2], [0], [0]>} : vector<2x16x16xf32>, vector<2x16x32xf32>, vector<2x16x32xf32> -> vector<2x16x32xf32>
    "tpu.trace_stop"() : () -> ()
    %89 = arith.addf %68, %88 : vector<2x16x32xf32>
    %90 = vector.extract_strided_slice %44 {offsets = [0, 0, 16], sizes = [2, 16, 8], strides = [1, 1, 1]} : vector<2x16x32xf32> to vector<2x16x8xf32>
    %91 = vector.extract_strided_slice %46 {offsets = [0, 0, 16], sizes = [2, 16, 8], strides = [1, 1, 1]} : vector<2x16x32xf32> to vector<2x16x8xf32>
    "tpu.trace_start"() <{level = 10 : i32, message = "bqd,bkd->bqk"}> : () -> ()
    %cst_55 = arith.constant dense<0.000000e+00> : vector<2x16x16xf32>
    %92 = tpu.matmul %90, %91, %cst_55 {dimension_numbers = #tpu.dot_dimension_numbers<[2], [2], [1], [1], [0, 0, 0, 1, 1, 1], [0], [0]>} : vector<2x16x8xf32>, vector<2x16x8xf32>, vector<2x16x16xf32> -> vector<2x16x16xf32>
    "tpu.trace_stop"() : () -> ()
    %cst_56 = arith.constant 0.353553385 : f32
    %93 = vector.broadcast %cst_56 : f32 to vector<2x16x16xf32>
    %94 = arith.mulf %92, %93 : vector<2x16x16xf32>
    %95 = vector.broadcast %13 : vector<1x1x16xf32> to vector<2x16x16xf32>
    %96 = arith.addf %94, %95 : vector<2x16x16xf32>
    %cst_57 = arith.constant dense<0xFF800000> : vector<2x16xf32>
    %97 = vector.multi_reduction <maximumf>, %96, %cst_57 [2] : vector<2x16x16xf32> to vector<2x16xf32>
    %98 = vector.shape_cast %97 : vector<2x16xf32> to vector<2x16x1xf32>
    %99 = vector.broadcast %98 : vector<2x16x1xf32> to vector<2x16x16xf32>
    %100 = arith.subf %96, %99 : vector<2x16x16xf32>
    %101 = math.exp %100 : vector<2x16x16xf32>
    %cst_58 = arith.constant dense<0.000000e+00> : vector<2x16xf32>
    %102 = vector.multi_reduction <add>, %101, %cst_58 [2] : vector<2x16x16xf32> to vector<2x16xf32>
    %103 = vector.shape_cast %102 : vector<2x16xf32> to vector<2x16x1xf32>
    %104 = tpu.reciprocal %103 {approx = true} : vector<2x16x1xf32> -> vector<2x16x1xf32>
    %105 = vector.broadcast %104 : vector<2x16x1xf32> to vector<2x16x16xf32>
    %106 = arith.mulf %101, %105 : vector<2x16x16xf32>
    %107 = vector.extract_strided_slice %42 {offsets = [0, 64], sizes = [32, 32], strides = [1, 1]} : vector<32x128xf32> to vector<32x32xf32>
    %108 = vector.shape_cast %107 : vector<32x32xf32> to vector<2x16x32xf32>
    "tpu.trace_start"() <{level = 10 : i32, message = "bqk,bkd->bqd"}> : () -> ()
    %cst_59 = arith.constant dense<0.000000e+00> : vector<2x16x32xf32>
    %109 = tpu.matmul %106, %108, %cst_59 {dimension_numbers = #tpu.dot_dimension_numbers<[2], [1], [1], [2], [0, 0, 0, 1, 1, 2], [0], [0]>} : vector<2x16x16xf32>, vector<2x16x32xf32>, vector<2x16x32xf32> -> vector<2x16x32xf32>
    "tpu.trace_stop"() : () -> ()
    %110 = arith.addf %89, %109 : vector<2x16x32xf32>
    %111 = vector.extract_strided_slice %44 {offsets = [0, 0, 24], sizes = [2, 16, 8], strides = [1, 1, 1]} : vector<2x16x32xf32> to vector<2x16x8xf32>
    %112 = vector.extract_strided_slice %46 {offsets = [0, 0, 24], sizes = [2, 16, 8], strides = [1, 1, 1]} : vector<2x16x32xf32> to vector<2x16x8xf32>
    "tpu.trace_start"() <{level = 10 : i32, message = "bqd,bkd->bqk"}> : () -> ()
    %cst_60 = arith.constant dense<0.000000e+00> : vector<2x16x16xf32>
    %113 = tpu.matmul %111, %112, %cst_60 {dimension_numbers = #tpu.dot_dimension_numbers<[2], [2], [1], [1], [0, 0, 0, 1, 1, 1], [0], [0]>} : vector<2x16x8xf32>, vector<2x16x8xf32>, vector<2x16x16xf32> -> vector<2x16x16xf32>
    "tpu.trace_stop"() : () -> ()
    %cst_61 = arith.constant 0.353553385 : f32
    %114 = vector.broadcast %cst_61 : f32 to vector<2x16x16xf32>
    %115 = arith.mulf %113, %114 : vector<2x16x16xf32>
    %116 = vector.broadcast %13 : vector<1x1x16xf32> to vector<2x16x16xf32>
    %117 = arith.addf %115, %116 : vector<2x16x16xf32>
    %cst_62 = arith.constant dense<0xFF800000> : vector<2x16xf32>
    %118 = vector.multi_reduction <maximumf>, %117, %cst_62 [2] : vector<2x16x16xf32> to vector<2x16xf32>
    %119 = vector.shape_cast %118 : vector<2x16xf32> to vector<2x16x1xf32>
    %120 = vector.broadcast %119 : vector<2x16x1xf32> to vector<2x16x16xf32>
    %121 = arith.subf %117, %120 : vector<2x16x16xf32>
    %122 = math.exp %121 : vector<2x16x16xf32>
    %cst_63 = arith.constant dense<0.000000e+00> : vector<2x16xf32>
    %123 = vector.multi_reduction <add>, %122, %cst_63 [2] : vector<2x16x16xf32> to vector<2x16xf32>
    %124 = vector.shape_cast %123 : vector<2x16xf32> to vector<2x16x1xf32>
    %125 = tpu.reciprocal %124 {approx = true} : vector<2x16x1xf32> -> vector<2x16x1xf32>
    %126 = vector.broadcast %125 : vector<2x16x1xf32> to vector<2x16x16xf32>
    %127 = arith.mulf %122, %126 : vector<2x16x16xf32>
    %128 = vector.extract_strided_slice %42 {offsets = [0, 96], sizes = [32, 32], strides = [1, 1]} : vector<32x128xf32> to vector<32x32xf32>
    %129 = vector.shape_cast %128 : vector<32x32xf32> to vector<2x16x32xf32>
    "tpu.trace_start"() <{level = 10 : i32, message = "bqk,bkd->bqd"}> : () -> ()
    %cst_64 = arith.constant dense<0.000000e+00> : vector<2x16x32xf32>
    %130 = tpu.matmul %127, %129, %cst_64 {dimension_numbers = #tpu.dot_dimension_numbers<[2], [1], [1], [2], [0, 0, 0, 1, 1, 2], [0], [0]>} : vector<2x16x16xf32>, vector<2x16x32xf32>, vector<2x16x32xf32> -> vector<2x16x32xf32>
    "tpu.trace_stop"() : () -> ()
    %131 = arith.addf %110, %130 : vector<2x16x32xf32>
    %132 = vector.shape_cast %131 : vector<2x16x32xf32> to vector<32x32xf32>
    %133 = vector.broadcast %21 : vector<1x32xf32> to vector<32x32xf32>
    %134 = arith.addf %132, %133 : vector<32x32xf32>
    %135 = arith.addf %38, %134 : vector<32x32xf32>
    %cst_65 = arith.constant dense<0.000000e+00> : vector<32xf32>
    %136 = vector.multi_reduction <add>, %135, %cst_65 [1] : vector<32x32xf32> to vector<32xf32>
    %137 = vector.shape_cast %136 : vector<32xf32> to vector<32x1xf32>
    %cst_66 = arith.constant 3.200000e+01 : f32
    %138 = vector.broadcast %cst_66 : f32 to vector<32x1xf32>
    %139 = arith.divf %137, %138 : vector<32x1xf32>
    %140 = vector.broadcast %139 : vector<32x1xf32> to vector<32x32xf32>
    %141 = arith.subf %135, %140 : vector<32x32xf32>
    %142 = arith.mulf %141, %141 : vector<32x32xf32>
    %cst_67 = arith.constant dense<0.000000e+00> : vector<32xf32>
    %143 = vector.multi_reduction <add>, %142, %cst_67 [1] : vector<32x32xf32> to vector<32xf32>
    %144 = vector.shape_cast %143 : vector<32xf32> to vector<32x1xf32>
    %cst_68 = arith.constant 3.200000e+01 : f32
    %145 = vector.broadcast %cst_68 : f32 to vector<32x1xf32>
    %146 = arith.divf %144, %145 : vector<32x1xf32>
    %147 = vector.broadcast %139 : vector<32x1xf32> to vector<32x32xf32>
    %148 = arith.subf %135, %147 : vector<32x32xf32>
    %cst_69 = arith.constant 9.99999974E-6 : f32
    %149 = vector.broadcast %cst_69 : f32 to vector<32x1xf32>
    %150 = arith.addf %146, %149 : vector<32x1xf32>
    %151 = math.rsqrt %150 : vector<32x1xf32>
    %152 = vector.broadcast %151 : vector<32x1xf32> to vector<32x32xf32>
    %153 = arith.mulf %148, %152 : vector<32x32xf32>
    %154 = vector.broadcast %23 : vector<1x32xf32> to vector<32x32xf32>
    %155 = arith.mulf %153, %154 : vector<32x32xf32>
    %156 = vector.broadcast %25 : vector<1x32xf32> to vector<32x32xf32>
    %157 = arith.addf %155, %156 : vector<32x32xf32>
    %cst_70 = arith.constant dense<0.000000e+00> : vector<32x128xf32>
    %158 = tpu.matmul %157, %27, %cst_70 {dimension_numbers = #tpu.dot_dimension_numbers<[1], [0], [0], [1], [0, 0, 1, 1], [], []>} : vector<32x32xf32>, vector<32x128xf32>, vector<32x128xf32> -> vector<32x128xf32>
    %159 = vector.broadcast %29 : vector<1x128xf32> to vector<32x128xf32>
    %160 = arith.addf %158, %159 : vector<32x128xf32>
    %cst_71 = arith.constant 0.000000e+00 : f32
    %161 = vector.broadcast %cst_71 : f32 to vector<32x128xf32>
    %162 = arith.maximumf %160, %161 : vector<32x128xf32>
    %cst_72 = arith.constant dense<0.000000e+00> : vector<32x32xf32>
    %163 = tpu.matmul %162, %31, %cst_72 {dimension_numbers = #tpu.dot_dimension_numbers<[1], [0], [0], [1], [0, 0, 1, 1], [], []>} : vector<32x128xf32>, vector<128x32xf32>, vector<32x32xf32> -> vector<32x32xf32>
    %164 = vector.broadcast %33 : vector<1x32xf32> to vector<32x32xf32>
    %165 = arith.addf %163, %164 : vector<32x32xf32>
    %166 = arith.addf %157, %165 : vector<32x32xf32>
    %cst_73 = arith.constant dense<0.000000e+00> : vector<32xf32>
    %167 = vector.multi_reduction <add>, %166, %cst_73 [1] : vector<32x32xf32> to vector<32xf32>
    %168 = vector.shape_cast %167 : vector<32xf32> to vector<32x1xf32>
    %cst_74 = arith.constant 3.200000e+01 : f32
    %169 = vector.broadcast %cst_74 : f32 to vector<32x1xf32>
    %170 = arith.divf %168, %169 : vector<32x1xf32>
    %171 = vector.broadcast %170 : vector<32x1xf32> to vector<32x32xf32>
    %172 = arith.subf %166, %171 : vector<32x32xf32>
    %173 = arith.mulf %172, %172 : vector<32x32xf32>
    %cst_75 = arith.constant dense<0.000000e+00> : vector<32xf32>
    %174 = vector.multi_reduction <add>, %173, %cst_75 [1] : vector<32x32xf32> to vector<32xf32>
    %175 = vector.shape_cast %174 : vector<32xf32> to vector<32x1xf32>
    %cst_76 = arith.constant 3.200000e+01 : f32
    %176 = vector.broadcast %cst_76 : f32 to vector<32x1xf32>
    %177 = arith.divf %175, %176 : vector<32x1xf32>
    %178 = vector.broadcast %170 : vector<32x1xf32> to vector<32x32xf32>
    %179 = arith.subf %166, %178 : vector<32x32xf32>
    %cst_77 = arith.constant 9.99999974E-6 : f32
    %180 = vector.broadcast %cst_77 : f32 to vector<32x1xf32>
    %181 = arith.addf %177, %180 : vector<32x1xf32>
    %182 = math.rsqrt %181 : vector<32x1xf32>
    %183 = vector.broadcast %182 : vector<32x1xf32> to vector<32x32xf32>
    %184 = arith.mulf %179, %183 : vector<32x32xf32>
    %185 = vector.broadcast %35 : vector<1x32xf32> to vector<32x32xf32>
    %186 = arith.mulf %184, %185 : vector<32x32xf32>
    %187 = vector.broadcast %37 : vector<1x32xf32> to vector<32x32xf32>
    %188 = arith.addf %186, %187 : vector<32x32xf32>
    %189 = vector.shape_cast %188 : vector<32x32xf32> to vector<2x16x32xf32>
    %c1 = arith.constant 1 : index
    %c0_78 = arith.constant 0 : index
    %c0_79 = arith.constant 0 : index
    %190 = vector.load %arg2[%c1, %c0_78, %c0_79] : memref<2x32x64xf32, #tpu.memory_space<vmem>>, vector<1x32x64xf32>
    %191 = vector.shape_cast %190 : vector<1x32x64xf32> to vector<32x64xf32>
    %c1_80 = arith.constant 1 : index
    %c0_81 = arith.constant 0 : index
    %c0_82 = arith.constant 0 : index
    %192 = vector.load %arg3[%c1_80, %c0_81, %c0_82] : memref<2x1x64xf32, #tpu.memory_space<vmem>>, vector<1x1x64xf32>
    %193 = vector.shape_cast %192 : vector<1x1x64xf32> to vector<1x64xf32>
    %c1_83 = arith.constant 1 : index
    %c0_84 = arith.constant 0 : index
    %c0_85 = arith.constant 0 : index
    %194 = vector.load %arg4[%c1_83, %c0_84, %c0_85] : memref<2x32x128xf32, #tpu.memory_space<vmem>>, vector<1x32x128xf32>
    %195 = vector.shape_cast %194 : vector<1x32x128xf32> to vector<32x128xf32>
    %c1_86 = arith.constant 1 : index
    %c0_87 = arith.constant 0 : index
    %c0_88 = arith.constant 0 : index
    %196 = vector.load %arg5[%c1_86, %c0_87, %c0_88] : memref<2x1x32xf32, #tpu.memory_space<vmem>>, vector<1x1x32xf32>
    %197 = vector.shape_cast %196 : vector<1x1x32xf32> to vector<1x32xf32>
    %c1_89 = arith.constant 1 : index
    %c0_90 = arith.constant 0 : index
    %c0_91 = arith.constant 0 : index
    %198 = vector.load %arg6[%c1_89, %c0_90, %c0_91] : memref<2x1x32xf32, #tpu.memory_space<vmem>>, vector<1x1x32xf32>
    %199 = vector.shape_cast %198 : vector<1x1x32xf32> to vector<1x32xf32>
    %c1_92 = arith.constant 1 : index
    %c0_93 = arith.constant 0 : index
    %c0_94 = arith.constant 0 : index
    %200 = vector.load %arg7[%c1_92, %c0_93, %c0_94] : memref<2x1x32xf32, #tpu.memory_space<vmem>>, vector<1x1x32xf32>
    %201 = vector.shape_cast %200 : vector<1x1x32xf32> to vector<1x32xf32>
    %c1_95 = arith.constant 1 : index
    %c0_96 = arith.constant 0 : index
    %c0_97 = arith.constant 0 : index
    %202 = vector.load %arg8[%c1_95, %c0_96, %c0_97] : memref<2x32x128xf32, #tpu.memory_space<vmem>>, vector<1x32x128xf32>
    %203 = vector.shape_cast %202 : vector<1x32x128xf32> to vector<32x128xf32>
    %c1_98 = arith.constant 1 : index
    %c0_99 = arith.constant 0 : index
    %c0_100 = arith.constant 0 : index
    %204 = vector.load %arg9[%c1_98, %c0_99, %c0_100] : memref<2x1x128xf32, #tpu.memory_space<vmem>>, vector<1x1x128xf32>
    %205 = vector.shape_cast %204 : vector<1x1x128xf32> to vector<1x128xf32>
    %c1_101 = arith.constant 1 : index
    %c0_102 = arith.constant 0 : index
    %c0_103 = arith.constant 0 : index
    %206 = vector.load %arg10[%c1_101, %c0_102, %c0_103] : memref<2x128x32xf32, #tpu.memory_space<vmem>>, vector<1x128x32xf32>
    %207 = vector.shape_cast %206 : vector<1x128x32xf32> to vector<128x32xf32>
    %c1_104 = arith.constant 1 : index
    %c0_105 = arith.constant 0 : index
    %c0_106 = arith.constant 0 : index
    %208 = vector.load %arg11[%c1_104, %c0_105, %c0_106] : memref<2x1x32xf32, #tpu.memory_space<vmem>>, vector<1x1x32xf32>
    %209 = vector.shape_cast %208 : vector<1x1x32xf32> to vector<1x32xf32>
    %c1_107 = arith.constant 1 : index
    %c0_108 = arith.constant 0 : index
    %c0_109 = arith.constant 0 : index
    %210 = vector.load %arg12[%c1_107, %c0_108, %c0_109] : memref<2x1x32xf32, #tpu.memory_space<vmem>>, vector<1x1x32xf32>
    %211 = vector.shape_cast %210 : vector<1x1x32xf32> to vector<1x32xf32>
    %c1_110 = arith.constant 1 : index
    %c0_111 = arith.constant 0 : index
    %c0_112 = arith.constant 0 : index
    %212 = vector.load %arg13[%c1_110, %c0_111, %c0_112] : memref<2x1x32xf32, #tpu.memory_space<vmem>>, vector<1x1x32xf32>
    %213 = vector.shape_cast %212 : vector<1x1x32xf32> to vector<1x32xf32>
    %214 = vector.shape_cast %189 : vector<2x16x32xf32> to vector<32x32xf32>
    %cst_113 = arith.constant dense<0.000000e+00> : vector<32x64xf32>
    %215 = tpu.matmul %214, %191, %cst_113 {dimension_numbers = #tpu.dot_dimension_numbers<[1], [0], [0], [1], [0, 0, 1, 1], [], []>} : vector<32x32xf32>, vector<32x64xf32>, vector<32x64xf32> -> vector<32x64xf32>
    %216 = vector.broadcast %193 : vector<1x64xf32> to vector<32x64xf32>
    %217 = arith.addf %215, %216 : vector<32x64xf32>
    %cst_114 = arith.constant dense<0.000000e+00> : vector<32x128xf32>
    %218 = tpu.matmul %214, %195, %cst_114 {dimension_numbers = #tpu.dot_dimension_numbers<[1], [0], [0], [1], [0, 0, 1, 1], [], []>} : vector<32x32xf32>, vector<32x128xf32>, vector<32x128xf32> -> vector<32x128xf32>
    %219 = vector.extract_strided_slice %217 {offsets = [0, 0], sizes = [32, 32], strides = [1, 1]} : vector<32x64xf32> to vector<32x32xf32>
    %220 = vector.shape_cast %219 : vector<32x32xf32> to vector<2x16x32xf32>
    %221 = vector.extract_strided_slice %217 {offsets = [0, 32], sizes = [32, 32], strides = [1, 1]} : vector<32x64xf32> to vector<32x32xf32>
    %222 = vector.shape_cast %221 : vector<32x32xf32> to vector<2x16x32xf32>
    %cst_115 = arith.constant 0.000000e+00 : f32
    %223 = vector.broadcast %cst_115 : f32 to vector<2x16x32xf32>
    %224 = vector.extract_strided_slice %220 {offsets = [0, 0, 0], sizes = [2, 16, 8], strides = [1, 1, 1]} : vector<2x16x32xf32> to vector<2x16x8xf32>
    %225 = vector.extract_strided_slice %222 {offsets = [0, 0, 0], sizes = [2, 16, 8], strides = [1, 1, 1]} : vector<2x16x32xf32> to vector<2x16x8xf32>
    "tpu.trace_start"() <{level = 10 : i32, message = "bqd,bkd->bqk"}> : () -> ()
    %cst_116 = arith.constant dense<0.000000e+00> : vector<2x16x16xf32>
    %226 = tpu.matmul %224, %225, %cst_116 {dimension_numbers = #tpu.dot_dimension_numbers<[2], [2], [1], [1], [0, 0, 0, 1, 1, 1], [0], [0]>} : vector<2x16x8xf32>, vector<2x16x8xf32>, vector<2x16x16xf32> -> vector<2x16x16xf32>
    "tpu.trace_stop"() : () -> ()
    %cst_117 = arith.constant 0.353553385 : f32
    %227 = vector.broadcast %cst_117 : f32 to vector<2x16x16xf32>
    %228 = arith.mulf %226, %227 : vector<2x16x16xf32>
    %229 = vector.broadcast %13 : vector<1x1x16xf32> to vector<2x16x16xf32>
    %230 = arith.addf %228, %229 : vector<2x16x16xf32>
    %cst_118 = arith.constant dense<0xFF800000> : vector<2x16xf32>
    %231 = vector.multi_reduction <maximumf>, %230, %cst_118 [2] : vector<2x16x16xf32> to vector<2x16xf32>
    %232 = vector.shape_cast %231 : vector<2x16xf32> to vector<2x16x1xf32>
    %233 = vector.broadcast %232 : vector<2x16x1xf32> to vector<2x16x16xf32>
    %234 = arith.subf %230, %233 : vector<2x16x16xf32>
    %235 = math.exp %234 : vector<2x16x16xf32>
    %cst_119 = arith.constant dense<0.000000e+00> : vector<2x16xf32>
    %236 = vector.multi_reduction <add>, %235, %cst_119 [2] : vector<2x16x16xf32> to vector<2x16xf32>
    %237 = vector.shape_cast %236 : vector<2x16xf32> to vector<2x16x1xf32>
    %238 = tpu.reciprocal %237 {approx = true} : vector<2x16x1xf32> -> vector<2x16x1xf32>
    %239 = vector.broadcast %238 : vector<2x16x1xf32> to vector<2x16x16xf32>
    %240 = arith.mulf %235, %239 : vector<2x16x16xf32>
    %241 = vector.extract_strided_slice %218 {offsets = [0, 0], sizes = [32, 32], strides = [1, 1]} : vector<32x128xf32> to vector<32x32xf32>
    %242 = vector.shape_cast %241 : vector<32x32xf32> to vector<2x16x32xf32>
    "tpu.trace_start"() <{level = 10 : i32, message = "bqk,bkd->bqd"}> : () -> ()
    %cst_120 = arith.constant dense<0.000000e+00> : vector<2x16x32xf32>
    %243 = tpu.matmul %240, %242, %cst_120 {dimension_numbers = #tpu.dot_dimension_numbers<[2], [1], [1], [2], [0, 0, 0, 1, 1, 2], [0], [0]>} : vector<2x16x16xf32>, vector<2x16x32xf32>, vector<2x16x32xf32> -> vector<2x16x32xf32>
    "tpu.trace_stop"() : () -> ()
    %244 = arith.addf %223, %243 : vector<2x16x32xf32>
    %245 = vector.extract_strided_slice %220 {offsets = [0, 0, 8], sizes = [2, 16, 8], strides = [1, 1, 1]} : vector<2x16x32xf32> to vector<2x16x8xf32>
    %246 = vector.extract_strided_slice %222 {offsets = [0, 0, 8], sizes = [2, 16, 8], strides = [1, 1, 1]} : vector<2x16x32xf32> to vector<2x16x8xf32>
    "tpu.trace_start"() <{level = 10 : i32, message = "bqd,bkd->bqk"}> : () -> ()
    %cst_121 = arith.constant dense<0.000000e+00> : vector<2x16x16xf32>
    %247 = tpu.matmul %245, %246, %cst_121 {dimension_numbers = #tpu.dot_dimension_numbers<[2], [2], [1], [1], [0, 0, 0, 1, 1, 1], [0], [0]>} : vector<2x16x8xf32>, vector<2x16x8xf32>, vector<2x16x16xf32> -> vector<2x16x16xf32>
    "tpu.trace_stop"() : () -> ()
    %cst_122 = arith.constant 0.353553385 : f32
    %248 = vector.broadcast %cst_122 : f32 to vector<2x16x16xf32>
    %249 = arith.mulf %247, %248 : vector<2x16x16xf32>
    %250 = vector.broadcast %13 : vector<1x1x16xf32> to vector<2x16x16xf32>
    %251 = arith.addf %249, %250 : vector<2x16x16xf32>
    %cst_123 = arith.constant dense<0xFF800000> : vector<2x16xf32>
    %252 = vector.multi_reduction <maximumf>, %251, %cst_123 [2] : vector<2x16x16xf32> to vector<2x16xf32>
    %253 = vector.shape_cast %252 : vector<2x16xf32> to vector<2x16x1xf32>
    %254 = vector.broadcast %253 : vector<2x16x1xf32> to vector<2x16x16xf32>
    %255 = arith.subf %251, %254 : vector<2x16x16xf32>
    %256 = math.exp %255 : vector<2x16x16xf32>
    %cst_124 = arith.constant dense<0.000000e+00> : vector<2x16xf32>
    %257 = vector.multi_reduction <add>, %256, %cst_124 [2] : vector<2x16x16xf32> to vector<2x16xf32>
    %258 = vector.shape_cast %257 : vector<2x16xf32> to vector<2x16x1xf32>
    %259 = tpu.reciprocal %258 {approx = true} : vector<2x16x1xf32> -> vector<2x16x1xf32>
    %260 = vector.broadcast %259 : vector<2x16x1xf32> to vector<2x16x16xf32>
    %261 = arith.mulf %256, %260 : vector<2x16x16xf32>
    %262 = vector.extract_strided_slice %218 {offsets = [0, 32], sizes = [32, 32], strides = [1, 1]} : vector<32x128xf32> to vector<32x32xf32>
    %263 = vector.shape_cast %262 : vector<32x32xf32> to vector<2x16x32xf32>
    "tpu.trace_start"() <{level = 10 : i32, message = "bqk,bkd->bqd"}> : () -> ()
    %cst_125 = arith.constant dense<0.000000e+00> : vector<2x16x32xf32>
    %264 = tpu.matmul %261, %263, %cst_125 {dimension_numbers = #tpu.dot_dimension_numbers<[2], [1], [1], [2], [0, 0, 0, 1, 1, 2], [0], [0]>} : vector<2x16x16xf32>, vector<2x16x32xf32>, vector<2x16x32xf32> -> vector<2x16x32xf32>
    "tpu.trace_stop"() : () -> ()
    %265 = arith.addf %244, %264 : vector<2x16x32xf32>
    %266 = vector.extract_strided_slice %220 {offsets = [0, 0, 16], sizes = [2, 16, 8], strides = [1, 1, 1]} : vector<2x16x32xf32> to vector<2x16x8xf32>
    %267 = vector.extract_strided_slice %222 {offsets = [0, 0, 16], sizes = [2, 16, 8], strides = [1, 1, 1]} : vector<2x16x32xf32> to vector<2x16x8xf32>
    "tpu.trace_start"() <{level = 10 : i32, message = "bqd,bkd->bqk"}> : () -> ()
    %cst_126 = arith.constant dense<0.000000e+00> : vector<2x16x16xf32>
    %268 = tpu.matmul %266, %267, %cst_126 {dimension_numbers = #tpu.dot_dimension_numbers<[2], [2], [1], [1], [0, 0, 0, 1, 1, 1], [0], [0]>} : vector<2x16x8xf32>, vector<2x16x8xf32>, vector<2x16x16xf32> -> vector<2x16x16xf32>
    "tpu.trace_stop"() : () -> ()
    %cst_127 = arith.constant 0.353553385 : f32
    %269 = vector.broadcast %cst_127 : f32 to vector<2x16x16xf32>
    %270 = arith.mulf %268, %269 : vector<2x16x16xf32>
    %271 = vector.broadcast %13 : vector<1x1x16xf32> to vector<2x16x16xf32>
    %272 = arith.addf %270, %271 : vector<2x16x16xf32>
    %cst_128 = arith.constant dense<0xFF800000> : vector<2x16xf32>
    %273 = vector.multi_reduction <maximumf>, %272, %cst_128 [2] : vector<2x16x16xf32> to vector<2x16xf32>
    %274 = vector.shape_cast %273 : vector<2x16xf32> to vector<2x16x1xf32>
    %275 = vector.broadcast %274 : vector<2x16x1xf32> to vector<2x16x16xf32>
    %276 = arith.subf %272, %275 : vector<2x16x16xf32>
    %277 = math.exp %276 : vector<2x16x16xf32>
    %cst_129 = arith.constant dense<0.000000e+00> : vector<2x16xf32>
    %278 = vector.multi_reduction <add>, %277, %cst_129 [2] : vector<2x16x16xf32> to vector<2x16xf32>
    %279 = vector.shape_cast %278 : vector<2x16xf32> to vector<2x16x1xf32>
    %280 = tpu.reciprocal %279 {approx = true} : vector<2x16x1xf32> -> vector<2x16x1xf32>
    %281 = vector.broadcast %280 : vector<2x16x1xf32> to vector<2x16x16xf32>
    %282 = arith.mulf %277, %281 : vector<2x16x16xf32>
    %283 = vector.extract_strided_slice %218 {offsets = [0, 64], sizes = [32, 32], strides = [1, 1]} : vector<32x128xf32> to vector<32x32xf32>
    %284 = vector.shape_cast %283 : vector<32x32xf32> to vector<2x16x32xf32>
    "tpu.trace_start"() <{level = 10 : i32, message = "bqk,bkd->bqd"}> : () -> ()
    %cst_130 = arith.constant dense<0.000000e+00> : vector<2x16x32xf32>
    %285 = tpu.matmul %282, %284, %cst_130 {dimension_numbers = #tpu.dot_dimension_numbers<[2], [1], [1], [2], [0, 0, 0, 1, 1, 2], [0], [0]>} : vector<2x16x16xf32>, vector<2x16x32xf32>, vector<2x16x32xf32> -> vector<2x16x32xf32>
    "tpu.trace_stop"() : () -> ()
    %286 = arith.addf %265, %285 : vector<2x16x32xf32>
    %287 = vector.extract_strided_slice %220 {offsets = [0, 0, 24], sizes = [2, 16, 8], strides = [1, 1, 1]} : vector<2x16x32xf32> to vector<2x16x8xf32>
    %288 = vector.extract_strided_slice %222 {offsets = [0, 0, 24], sizes = [2, 16, 8], strides = [1, 1, 1]} : vector<2x16x32xf32> to vector<2x16x8xf32>
    "tpu.trace_start"() <{level = 10 : i32, message = "bqd,bkd->bqk"}> : () -> ()
    %cst_131 = arith.constant dense<0.000000e+00> : vector<2x16x16xf32>
    %289 = tpu.matmul %287, %288, %cst_131 {dimension_numbers = #tpu.dot_dimension_numbers<[2], [2], [1], [1], [0, 0, 0, 1, 1, 1], [0], [0]>} : vector<2x16x8xf32>, vector<2x16x8xf32>, vector<2x16x16xf32> -> vector<2x16x16xf32>
    "tpu.trace_stop"() : () -> ()
    %cst_132 = arith.constant 0.353553385 : f32
    %290 = vector.broadcast %cst_132 : f32 to vector<2x16x16xf32>
    %291 = arith.mulf %289, %290 : vector<2x16x16xf32>
    %292 = vector.broadcast %13 : vector<1x1x16xf32> to vector<2x16x16xf32>
    %293 = arith.addf %291, %292 : vector<2x16x16xf32>
    %cst_133 = arith.constant dense<0xFF800000> : vector<2x16xf32>
    %294 = vector.multi_reduction <maximumf>, %293, %cst_133 [2] : vector<2x16x16xf32> to vector<2x16xf32>
    %295 = vector.shape_cast %294 : vector<2x16xf32> to vector<2x16x1xf32>
    %296 = vector.broadcast %295 : vector<2x16x1xf32> to vector<2x16x16xf32>
    %297 = arith.subf %293, %296 : vector<2x16x16xf32>
    %298 = math.exp %297 : vector<2x16x16xf32>
    %cst_134 = arith.constant dense<0.000000e+00> : vector<2x16xf32>
    %299 = vector.multi_reduction <add>, %298, %cst_134 [2] : vector<2x16x16xf32> to vector<2x16xf32>
    %300 = vector.shape_cast %299 : vector<2x16xf32> to vector<2x16x1xf32>
    %301 = tpu.reciprocal %300 {approx = true} : vector<2x16x1xf32> -> vector<2x16x1xf32>
    %302 = vector.broadcast %301 : vector<2x16x1xf32> to vector<2x16x16xf32>
    %303 = arith.mulf %298, %302 : vector<2x16x16xf32>
    %304 = vector.extract_strided_slice %218 {offsets = [0, 96], sizes = [32, 32], strides = [1, 1]} : vector<32x128xf32> to vector<32x32xf32>
    %305 = vector.shape_cast %304 : vector<32x32xf32> to vector<2x16x32xf32>
    "tpu.trace_start"() <{level = 10 : i32, message = "bqk,bkd->bqd"}> : () -> ()
    %cst_135 = arith.constant dense<0.000000e+00> : vector<2x16x32xf32>
    %306 = tpu.matmul %303, %305, %cst_135 {dimension_numbers = #tpu.dot_dimension_numbers<[2], [1], [1], [2], [0, 0, 0, 1, 1, 2], [0], [0]>} : vector<2x16x16xf32>, vector<2x16x32xf32>, vector<2x16x32xf32> -> vector<2x16x32xf32>
    "tpu.trace_stop"() : () -> ()
    %307 = arith.addf %286, %306 : vector<2x16x32xf32>
    %308 = vector.shape_cast %307 : vector<2x16x32xf32> to vector<32x32xf32>
    %309 = vector.broadcast %197 : vector<1x32xf32> to vector<32x32xf32>
    %310 = arith.addf %308, %309 : vector<32x32xf32>
    %311 = arith.addf %214, %310 : vector<32x32xf32>
    %cst_136 = arith.constant dense<0.000000e+00> : vector<32xf32>
    %312 = vector.multi_reduction <add>, %311, %cst_136 [1] : vector<32x32xf32> to vector<32xf32>
    %313 = vector.shape_cast %312 : vector<32xf32> to vector<32x1xf32>
    %cst_137 = arith.constant 3.200000e+01 : f32
    %314 = vector.broadcast %cst_137 : f32 to vector<32x1xf32>
    %315 = arith.divf %313, %314 : vector<32x1xf32>
    %316 = vector.broadcast %315 : vector<32x1xf32> to vector<32x32xf32>
    %317 = arith.subf %311, %316 : vector<32x32xf32>
    %318 = arith.mulf %317, %317 : vector<32x32xf32>
    %cst_138 = arith.constant dense<0.000000e+00> : vector<32xf32>
    %319 = vector.multi_reduction <add>, %318, %cst_138 [1] : vector<32x32xf32> to vector<32xf32>
    %320 = vector.shape_cast %319 : vector<32xf32> to vector<32x1xf32>
    %cst_139 = arith.constant 3.200000e+01 : f32
    %321 = vector.broadcast %cst_139 : f32 to vector<32x1xf32>
    %322 = arith.divf %320, %321 : vector<32x1xf32>
    %323 = vector.broadcast %315 : vector<32x1xf32> to vector<32x32xf32>
    %324 = arith.subf %311, %323 : vector<32x32xf32>
    %cst_140 = arith.constant 9.99999974E-6 : f32
    %325 = vector.broadcast %cst_140 : f32 to vector<32x1xf32>
    %326 = arith.addf %322, %325 : vector<32x1xf32>
    %327 = math.rsqrt %326 : vector<32x1xf32>
    %328 = vector.broadcast %327 : vector<32x1xf32> to vector<32x32xf32>
    %329 = arith.mulf %324, %328 : vector<32x32xf32>
    %330 = vector.broadcast %199 : vector<1x32xf32> to vector<32x32xf32>
    %331 = arith.mulf %329, %330 : vector<32x32xf32>
    %332 = vector.broadcast %201 : vector<1x32xf32> to vector<32x32xf32>
    %333 = arith.addf %331, %332 : vector<32x32xf32>
    %cst_141 = arith.constant dense<0.000000e+00> : vector<32x128xf32>
    %334 = tpu.matmul %333, %203, %cst_141 {dimension_numbers = #tpu.dot_dimension_numbers<[1], [0], [0], [1], [0, 0, 1, 1], [], []>} : vector<32x32xf32>, vector<32x128xf32>, vector<32x128xf32> -> vector<32x128xf32>
    %335 = vector.broadcast %205 : vector<1x128xf32> to vector<32x128xf32>
    %336 = arith.addf %334, %335 : vector<32x128xf32>
    %cst_142 = arith.constant 0.000000e+00 : f32
    %337 = vector.broadcast %cst_142 : f32 to vector<32x128xf32>
    %338 = arith.maximumf %336, %337 : vector<32x128xf32>
    %cst_143 = arith.constant dense<0.000000e+00> : vector<32x32xf32>
    %339 = tpu.matmul %338, %207, %cst_143 {dimension_numbers = #tpu.dot_dimension_numbers<[1], [0], [0], [1], [0, 0, 1, 1], [], []>} : vector<32x128xf32>, vector<128x32xf32>, vector<32x32xf32> -> vector<32x32xf32>
    %340 = vector.broadcast %209 : vector<1x32xf32> to vector<32x32xf32>
    %341 = arith.addf %339, %340 : vector<32x32xf32>
    %342 = arith.addf %333, %341 : vector<32x32xf32>
    %cst_144 = arith.constant dense<0.000000e+00> : vector<32xf32>
    %343 = vector.multi_reduction <add>, %342, %cst_144 [1] : vector<32x32xf32> to vector<32xf32>
    %344 = vector.shape_cast %343 : vector<32xf32> to vector<32x1xf32>
    %cst_145 = arith.constant 3.200000e+01 : f32
    %345 = vector.broadcast %cst_145 : f32 to vector<32x1xf32>
    %346 = arith.divf %344, %345 : vector<32x1xf32>
    %347 = vector.broadcast %346 : vector<32x1xf32> to vector<32x32xf32>
    %348 = arith.subf %342, %347 : vector<32x32xf32>
    %349 = arith.mulf %348, %348 : vector<32x32xf32>
    %cst_146 = arith.constant dense<0.000000e+00> : vector<32xf32>
    %350 = vector.multi_reduction <add>, %349, %cst_146 [1] : vector<32x32xf32> to vector<32xf32>
    %351 = vector.shape_cast %350 : vector<32xf32> to vector<32x1xf32>
    %cst_147 = arith.constant 3.200000e+01 : f32
    %352 = vector.broadcast %cst_147 : f32 to vector<32x1xf32>
    %353 = arith.divf %351, %352 : vector<32x1xf32>
    %354 = vector.broadcast %346 : vector<32x1xf32> to vector<32x32xf32>
    %355 = arith.subf %342, %354 : vector<32x32xf32>
    %cst_148 = arith.constant 9.99999974E-6 : f32
    %356 = vector.broadcast %cst_148 : f32 to vector<32x1xf32>
    %357 = arith.addf %353, %356 : vector<32x1xf32>
    %358 = math.rsqrt %357 : vector<32x1xf32>
    %359 = vector.broadcast %358 : vector<32x1xf32> to vector<32x32xf32>
    %360 = arith.mulf %355, %359 : vector<32x32xf32>
    %361 = vector.broadcast %211 : vector<1x32xf32> to vector<32x32xf32>
    %362 = arith.mulf %360, %361 : vector<32x32xf32>
    %363 = vector.broadcast %213 : vector<1x32xf32> to vector<32x32xf32>
    %364 = arith.addf %362, %363 : vector<32x32xf32>
    %365 = vector.shape_cast %364 : vector<32x32xf32> to vector<2x16x32xf32>
    %366 = vector.extract_strided_slice %365 {offsets = [0, 0, 0], sizes = [2, 1, 32], strides = [1, 1, 1]} : vector<2x16x32xf32> to vector<2x1x32xf32>
    %367 = vector.shape_cast %366 : vector<2x1x32xf32> to vector<2x32xf32>
    %c0_149 = arith.constant 0 : index
    %c0_150 = arith.constant 0 : index
    %368 = vector.load %arg14[%c0_149, %c0_150] : memref<32x16xf32, #tpu.memory_space<vmem>>, vector<32x16xf32>
    %cst_151 = arith.constant dense<0.000000e+00> : vector<2x16xf32>
    %369 = tpu.matmul %367, %368, %cst_151 {dimension_numbers = #tpu.dot_dimension_numbers<[1], [0], [0], [1], [0, 0, 1, 1], [], []>} : vector<2x32xf32>, vector<32x16xf32>, vector<2x16xf32> -> vector<2x16xf32>
    %c0_152 = arith.constant 0 : index
    %c0_153 = arith.constant 0 : index
    %370 = vector.load %arg15[%c0_152, %c0_153] : memref<1x16xf32, #tpu.memory_space<vmem>>, vector<1x16xf32>
    %371 = vector.broadcast %370 : vector<1x16xf32> to vector<2x16xf32>
    %372 = arith.addf %369, %371 : vector<2x16xf32>
    %c0_154 = arith.constant 0 : index
    %c0_155 = arith.constant 0 : index
    %373 = vector.load %arg16[%c0_154, %c0_155] : memref<2x16xf32, #tpu.memory_space<vmem>>, vector<2x16xf32>
    tpu.vector_store %arg16[%c0_154, %c0_155], %372 {strides = array<i32>} : memref<2x16xf32, #tpu.memory_space<vmem>>, vector<2x16xf32>,
    return
  }
}

</mosaic_0001>

<llo_original>
// kernel: tpu_custom_call.1
$region0: #{tpu_custom_call.1}
  #allocation0 [shape = 'u32[]', space=smem, size = 0x4, offset = 0x4, fixed_abs, tag = 'smem constant byte address 0x4 - core index']
  #allocation1 [shape = 'u32[144,128]{1,0:T(1,128)}', space=vmem, size = 0x12000, scoped, tag = 'internal scratch']
  %s0 = inlined_call_operand.vmem [shape: f32[2,8,32], index: 0, kind: input, shape index: {}]
  %s1 = inlined_call_operand.vmem [shape: f32[1,32], index: 1, kind: input, shape index: {}]
  %s2 = inlined_call_operand.vmem [shape: f32[2,32,64], index: 2, kind: input, shape index: {}]
  %s3 = inlined_call_operand.vmem [shape: f32[2,1,64], index: 3, kind: input, shape index: {}]
  %s4 = inlined_call_operand.vmem [shape: f32[2,32,128], index: 4, kind: input, shape index: {}]
  %s5 = inlined_call_operand.vmem [shape: f32[2,1,32], index: 5, kind: input, shape index: {}]
  %s6 = inlined_call_operand.vmem [shape: f32[2,1,32], index: 6, kind: input, shape index: {}]
  %s7 = inlined_call_operand.vmem [shape: f32[2,1,32], index: 7, kind: input, shape index: {}]
  %s8 = inlined_call_operand.vmem [shape: f32[2,32,128], index: 8, kind: input, shape index: {}]
  %s9 = inlined_call_operand.vmem [shape: f32[2,1,128], index: 9, kind: input, shape index: {}]
  %s10 = inlined_call_operand.vmem [shape: f32[2,128,32], index: 10, kind: input, shape index: {}]
  %s11 = inlined_call_operand.vmem [shape: f32[2,1,32], index: 11, kind: input, shape index: {}]
  %s12 = inlined_call_operand.vmem [shape: f32[2,1,32], index: 12, kind: input, shape index: {}]
  %s13 = inlined_call_operand.vmem [shape: f32[2,1,32], index: 13, kind: input, shape index: {}]
  %s14 = inlined_call_operand.vmem [shape: f32[32,16], index: 14, kind: input, shape index: {}]
  %s15 = inlined_call_operand.vmem [shape: f32[1,16], index: 15, kind: input, shape index: {}]
  %s16 = inlined_call_operand.hbm [shape: f32[2,16], index: 16, kind: output, shape index: {}]
  %s17 = sld [smem:[#allocation0]]
  $region74: #{tpu_custom_call.1} parent=0
    _
  %s19 = ssub.s32 1, %s17
  %s20 = scalar_select 0, %s19, %s17
  $region1: #{tpu_custom_call.1} parent=0
    #allocation2 [shape = 'u8[1024]{0}', space=vmem, size = 0x400, scoped, tag = 'output window, operand 0, single buffered']
    #allocation3 [shape = 's32[1]{0}', space=sflag, size = 0x4, scoped, tag = 'scoped memory for tpu_custom_call.1']
    %21 = vsyncpa [#allocation3], 0
    // Predicated region
    $region2: #{tpu_custom_call.1} parent=1 // pred_check
      _
    $region3: #{tpu_custom_call.1} parent=1 // pred_check_branch
      %23 = sbr.rel (0) target = $region5
    $region4: #{tpu_custom_call.1} parent=1 // pred_region
      _
    $region5: #{tpu_custom_call.1} parent=1 // pred_fallthru
      _
    // Predicated region
    $region6: #{tpu_custom_call.1} parent=1 // pred_check
      _
    $region7: #{tpu_custom_call.1} parent=1 // pred_check_branch
      %25 = sbr.rel (0) target = $region9
    $region8: #{tpu_custom_call.1} parent=1 // pred_region
      _
    $region9: #{tpu_custom_call.1} parent=1 // pred_fallthru
      _
    // Predicated region
    $region10: #{tpu_custom_call.1} parent=1 // pred_check
      _
    $region11: #{tpu_custom_call.1} parent=1 // pred_check_branch
      %27 = sbr.rel (0) target = $region13
    $region12: #{tpu_custom_call.1} parent=1 // pred_region
      _
    $region13: #{tpu_custom_call.1} parent=1 // pred_fallthru
      _
    // Predicated region
    $region14: #{tpu_custom_call.1} parent=1 // pred_check
      _
    $region15: #{tpu_custom_call.1} parent=1 // pred_check_branch
      %29 = sbr.rel (0) target = $region17
    $region16: #{tpu_custom_call.1} parent=1 // pred_region
      _
    $region17: #{tpu_custom_call.1} parent=1 // pred_fallthru
      _
    // Predicated region
    $region18: #{tpu_custom_call.1} parent=1 // pred_check
      _
    $region19: #{tpu_custom_call.1} parent=1 // pred_check_branch
      %31 = sbr.rel (0) target = $region21
    $region20: #{tpu_custom_call.1} parent=1 // pred_region
      _
    $region21: #{tpu_custom_call.1} parent=1 // pred_fallthru
      _
    // Predicated region
    $region22: #{tpu_custom_call.1} parent=1 // pred_check
      _
    $region23: #{tpu_custom_call.1} parent=1 // pred_check_branch
      %33 = sbr.rel (0) target = $region25
    $region24: #{tpu_custom_call.1} parent=1 // pred_region
      _
    $region25: #{tpu_custom_call.1} parent=1 // pred_fallthru
      _
    // Predicated region
    $region26: #{tpu_custom_call.1} parent=1 // pred_check
      _
    $region27: #{tpu_custom_call.1} parent=1 // pred_check_branch
      %35 = sbr.rel (0) target = $region29
    $region28: #{tpu_custom_call.1} parent=1 // pred_region
      _
    $region29: #{tpu_custom_call.1} parent=1 // pred_fallthru
      _
    // Predicated region
    $region30: #{tpu_custom_call.1} parent=1 // pred_check
      _
    $region31: #{tpu_custom_call.1} parent=1 // pred_check_branch
      %37 = sbr.rel (0) target = $region33
    $region32: #{tpu_custom_call.1} parent=1 // pred_region
      _
    $region33: #{tpu_custom_call.1} parent=1 // pred_fallthru
      _
    // Predicated region
    $region34: #{tpu_custom_call.1} parent=1 // pred_check
      _
    $region35: #{tpu_custom_call.1} parent=1 // pred_check_branch
      %39 = sbr.rel (0) target = $region37
    $region36: #{tpu_custom_call.1} parent=1 // pred_region
      _
    $region37: #{tpu_custom_call.1} parent=1 // pred_fallthru
      _
    // Predicated region
    $region38: #{tpu_custom_call.1} parent=1 // pred_check
      _
    $region39: #{tpu_custom_call.1} parent=1 // pred_check_branch
      %41 = sbr.rel (0) target = $region41
    $region40: #{tpu_custom_call.1} parent=1 // pred_region
      _
    $region41: #{tpu_custom_call.1} parent=1 // pred_fallthru
      _
    // Predicated region
    $region42: #{tpu_custom_call.1} parent=1 // pred_check
      _
    $region43: #{tpu_custom_call.1} parent=1 // pred_check_branch
      %43 = sbr.rel (0) target = $region45
    $region44: #{tpu_custom_call.1} parent=1 // pred_region
      _
    $region45: #{tpu_custom_call.1} parent=1 // pred_fallthru
      _
    // Predicated region
    $region46: #{tpu_custom_call.1} parent=1 // pred_check
      _
    $region47: #{tpu_custom_call.1} parent=1 // pred_check_branch
      %45 = sbr.rel (0) target = $region49
    $region48: #{tpu_custom_call.1} parent=1 // pred_region
      _
    $region49: #{tpu_custom_call.1} parent=1 // pred_fallthru
      _
    // Predicated region
    $region50: #{tpu_custom_call.1} parent=1 // pred_check
      _
    $region51: #{tpu_custom_call.1} parent=1 // pred_check_branch
      %47 = sbr.rel (0) target = $region53
    $region52: #{tpu_custom_call.1} parent=1 // pred_region
      _
    $region53: #{tpu_custom_call.1} parent=1 // pred_fallthru
      _
    // Predicated region
    $region54: #{tpu_custom_call.1} parent=1 // pred_check
      _
    $region55: #{tpu_custom_call.1} parent=1 // pred_check_branch
      %49 = sbr.rel (0) target = $region57
    $region56: #{tpu_custom_call.1} parent=1 // pred_region
      _
    $region57: #{tpu_custom_call.1} parent=1 // pred_fallthru
      _
    // Predicated region
    $region58: #{tpu_custom_call.1} parent=1 // pred_check
      _
    $region59: #{tpu_custom_call.1} parent=1 // pred_check_branch
      %51 = sbr.rel (0) target = $region61
    $region60: #{tpu_custom_call.1} parent=1 // pred_region
      _
    $region61: #{tpu_custom_call.1} parent=1 // pred_fallthru
      _
    // Predicated region
    $region62: #{tpu_custom_call.1} parent=1 // pred_check
      _
    $region63: #{tpu_custom_call.1} parent=1 // pred_check_branch
      %53 = sbr.rel (0) target = $region65
    $region64: #{tpu_custom_call.1} parent=1 // pred_region
      _
    $region65: #{tpu_custom_call.1} parent=1 // pred_fallthru
      _
    %v54 = vld [vmem:[%s0] sm:$0xff]
    %v55 = vld [vmem:[%s0 + $0x8] sm:$0xff]
    %v56 = vld [vmem:[%s1] sm:$0x1]
    %v59 = vrot.slane %v54, 7
    %v60 = vrot.slane %v55, 7
    %vm63 = vcmask 1040384
    %v64 = vsel %vm63, %v56, %v59
    %v65 = vsel %vm63, %v56, %v60
    %v66 = vsel %vm63, %v59, 0.0
    %v67 = vsel %vm63, %v60, 0.0
    %v68 = vlaneseq
    %v69 = vand.u32 %v68, 127
    %vm70 = vcmp.lt.s32.totalorder %v69, 9
    %v71 = vsel %vm70, 0.0, -1e+30
    %v72 = vld [vmem:[%s2] sm:$0xff]
    %v73 = vld [vmem:[%s2 + $0x8] sm:$0xff]
    %v74 = vld [vmem:[%s2 + $0x10] sm:$0xff]
    %v75 = vld [vmem:[%s2 + $0x18] sm:$0xff]
    %v76 = vld [vmem:[%s3] sm:$0x1]
    %v77 = vld [vmem:[%s4] sm:$0xff]
    %v78 = vld [vmem:[%s4 + $0x8] sm:$0xff]
    %v79 = vld [vmem:[%s4 + $0x10] sm:$0xff]
    %v80 = vld [vmem:[%s4 + $0x18] sm:$0xff]
    %v81 = vld [vmem:[%s5] sm:$0x1]
    %v82 = vld [vmem:[%s6] sm:$0x1]
    %v83 = vld [vmem:[%s7] sm:$0x1]
    %v84 = vld [vmem:[%s8] sm:$0xff]
    %v85 = vld [vmem:[%s8 + $0x8] sm:$0xff]
    %v86 = vld [vmem:[%s8 + $0x10] sm:$0xff]
    %v87 = vld [vmem:[%s8 + $0x18] sm:$0xff]
    %v88 = vld [vmem:[%s9] sm:$0x1]
    %v89 = vld [vmem:[%s10] sm:$0xff]
    %v90 = vld [vmem:[%s10 + $0x8] sm:$0xff]
    %v91 = vld [vmem:[%s10 + $0x10] sm:$0xff]
    %v92 = vld [vmem:[%s10 + $0x18] sm:$0xff]
    %v93 = vld [vmem:[%s10 + $0x20] sm:$0xff]
    %v94 = vld [vmem:[%s10 + $0x28] sm:$0xff]
    %v95 = vld [vmem:[%s10 + $0x30] sm:$0xff]
    %v96 = vld [vmem:[%s10 + $0x38] sm:$0xff]
    %v97 = vld [vmem:[%s10 + $0x40] sm:$0xff]
    %v98 = vld [vmem:[%s10 + $0x48] sm:$0xff]
    %v99 = vld [vmem:[%s10 + $0x50] sm:$0xff]
    %v100 = vld [vmem:[%s10 + $0x58] sm:$0xff]
    %v101 = vld [vmem:[%s10 + $0x60] sm:$0xff]
    %v102 = vld [vmem:[%s10 + $0x68] sm:$0xff]
    %v103 = vld [vmem:[%s10 + $0x70] sm:$0xff]
    %v104 = vld [vmem:[%s10 + $0x78] sm:$0xff]
    %v105 = vld [vmem:[%s11] sm:$0x1]
    %v106 = vld [vmem:[%s12] sm:$0x1]
    %v107 = vld [vmem:[%s13] sm:$0x1]
    %v109 = vlaneseq
    %v110 = vshrl.u32 %v109, 7
    %v111 = vsub.s32 0, %v110
    %v112 = vrot.slane %v76, %v111
    %vm114 = vcmask 261120
    %v116 = vsel %vm114, %v64, 0
    %v119 = vsel %vm114, %v66, 0
    %v122 = vsel %vm114, %v65, 0
    %v125 = vsel %vm114, %v67, 0
    %127 = vmatprep.subr.mxu0 0.0
    %128 = vmatpush1.msra.mxu0 0.0
    %129 = vmatprep.subr.mxu0 0.0
    %130 = vmatpush1.msra.mxu0 0.0
    %131 = vmatprep.subr.mxu0 0.0
    %132 = vmatpush1.msra.mxu0 0.0
    %133 = vmatprep.subr.mxu0 0.0
    %134 = vmatpush1.msra.mxu0 0.0
    %135 = vmatprep.subr.mxu0 0.0
    %136 = vmatpush1.msra.mxu0 0.0
    %137 = vmatprep.subr.mxu0 0.0
    %138 = vmatpush1.msra.mxu0 0.0
    %139 = vmatprep.subr.mxu0 0.0
    %140 = vmatpush1.msra.mxu0 0.0
    %141 = vmatprep.subr.mxu0 0.0
    %142 = vmatpush1.msra.mxu0 0.0
    %143 = vmatprep.subr.mxu0 0.0
    %144 = vmatpush1.msra.mxu0 0.0
    %145 = vmatprep.subr.mxu0 0.0
    %146 = vmatpush1.msra.mxu0 0.0
    %147 = vmatprep.subr.mxu0 0.0
    %148 = vmatpush1.msra.mxu0 0.0
    %149 = vmatprep.subr.mxu0 0.0
    %150 = vmatpush1.msra.mxu0 0.0
    %151 = vmatprep.subr.mxu0 0.0
    %152 = vmatpush1.msra.mxu0 %v75
    %153 = vmatprep.subr.mxu0 0.0
    %154 = vmatpush1.msra.mxu0 %v74
    %155 = vmatprep.subr.mxu0 0.0
    %156 = vmatpush1.msra.mxu0 %v73
    %157 = vmatprep.subr.mxu0 0.0
    %158 = vmatpush1.msra.mxu0 %v72
    %159 = vmatprep.subr.mxu0 0.0
    %160 = vmatpush2.msra.mxu0 0.0
    %161 = vmatprep.subr.mxu0 0.0
    %162 = vmatpush2.msra.mxu0 0.0
    %163 = vmatprep.subr.mxu0 0.0
    %164 = vmatpush2.msra.mxu0 0.0
    %165 = vmatprep.subr.mxu0 0.0
    %166 = vmatpush2.msra.mxu0 0.0
    %167 = vmatprep.subr.mxu0 0.0
    %168 = vmatpush2.msra.mxu0 0.0
    %169 = vmatprep.subr.mxu0 0.0
    %170 = vmatpush2.msra.mxu0 0.0
    %171 = vmatprep.subr.mxu0 0.0
    %172 = vmatpush2.msra.mxu0 0.0
    %173 = vmatprep.subr.mxu0 0.0
    %174 = vmatpush2.msra.mxu0 0.0
    %175 = vmatprep.subr.mxu0 0.0
    %176 = vmatpush2.msra.mxu0 0.0
    %177 = vmatprep.subr.mxu0 0.0
    %178 = vmatpush2.msra.mxu0 0.0
    %179 = vmatprep.subr.mxu0 0.0
    %180 = vmatpush2.msra.mxu0 0.0
    %181 = vmatprep.subr.mxu0 0.0
    %182 = vmatpush2.msra.mxu0 0.0
    %183 = vmatprep.subr.mxu0 0.0
    %184 = vmatpush2.msra.mxu0 0.0
    %185 = vmatprep.subr.mxu0 0.0
    %186 = vmatpush2.msra.mxu0 0.0
    %187 = vmatprep.subr.mxu0 0.0
    %188 = vmatpush2.msra.mxu0 0.0
    %189 = vmatprep.subr.mxu0 0.0
    %190 = vmatpush2.msra.mxu0 0.0
    %191 = vmatprep.mubr.f32.mxu0 0.0
    %192 = vmatmul.mubr.f32.gmra.mxu0 %v116
    %v193 = vpop.f32.mrf.mxu0
    %v194 = vadd.f32 %v112, %v193
    %v195 = vpop.f32.mrf.mxu0
    %196 = vmatprep.mubr.f32.mxu0 0.0
    %197 = vmatmul.mubr.f32.gmra.mxu0 %v119
    %v198 = vpop.f32.mrf.mxu0
    %v199 = vadd.f32 %v112, %v198
    %v200 = vpop.f32.mrf.mxu0
    %201 = vmatprep.mubr.f32.mxu0 0.0
    %202 = vmatmul.mubr.f32.gmra.mxu0 %v122
    %v203 = vpop.f32.mrf.mxu0
    %v204 = vadd.f32 %v112, %v203
    %v205 = vpop.f32.mrf.mxu0
    %206 = vmatprep.mubr.f32.mxu0 0.0
    %207 = vmatmul.mubr.f32.gmra.mxu0 %v125
    %v208 = vpop.f32.mrf.mxu0
    %v209 = vadd.f32 %v112, %v208
    %v210 = vpop.f32.mrf.mxu0
    %211 = vdwg.mxu0
    %212 = vmatprep.subr.mxu0 0.0
    %213 = vmatpush1.msra.mxu0 0.0
    %214 = vmatprep.subr.mxu0 0.0
    %215 = vmatpush1.msra.mxu0 0.0
    %216 = vmatprep.subr.mxu0 0.0
    %217 = vmatpush1.msra.mxu0 0.0
    %218 = vmatprep.subr.mxu0 0.0
    %219 = vmatpush1.msra.mxu0 0.0
    %220 = vmatprep.subr.mxu0 0.0
    %221 = vmatpush1.msra.mxu0 0.0
    %222 = vmatprep.subr.mxu0 0.0
    %223 = vmatpush1.msra.mxu0 0.0
    %224 = vmatprep.subr.mxu0 0.0
    %225 = vmatpush1.msra.mxu0 0.0
    %226 = vmatprep.subr.mxu0 0.0
    %227 = vmatpush1.msra.mxu0 0.0
    %228 = vmatprep.subr.mxu0 0.0
    %229 = vmatpush1.msra.mxu0 0.0
    %230 = vmatprep.subr.mxu0 0.0
    %231 = vmatpush1.msra.mxu0 0.0
    %232 = vmatprep.subr.mxu0 0.0
    %233 = vmatpush1.msra.mxu0 0.0
    %234 = vmatprep.subr.mxu0 0.0
    %235 = vmatpush1.msra.mxu0 0.0
    %236 = vmatprep.subr.mxu0 0.0
    %237 = vmatpush1.msra.mxu0 %v80
    %238 = vmatprep.subr.mxu0 0.0
    %239 = vmatpush1.msra.mxu0 %v79
    %240 = vmatprep.subr.mxu0 0.0
    %241 = vmatpush1.msra.mxu0 %v78
    %242 = vmatprep.subr.mxu0 0.0
    %243 = vmatpush1.msra.mxu0 %v77
    %244 = vmatprep.subr.mxu0 0.0
    %245 = vmatpush2.msra.mxu0 0.0
    %246 = vmatprep.subr.mxu0 0.0
    %247 = vmatpush2.msra.mxu0 0.0
    %248 = vmatprep.subr.mxu0 0.0
    %249 = vmatpush2.msra.mxu0 0.0
    %250 = vmatprep.subr.mxu0 0.0
    %251 = vmatpush2.msra.mxu0 0.0
    %252 = vmatprep.subr.mxu0 0.0
    %253 = vmatpush2.msra.mxu0 0.0
    %254 = vmatprep.subr.mxu0 0.0
    %255 = vmatpush2.msra.mxu0 0.0
    %256 = vmatprep.subr.mxu0 0.0
    %257 = vmatpush2.msra.mxu0 0.0
    %258 = vmatprep.subr.mxu0 0.0
    %259 = vmatpush2.msra.mxu0 0.0
    %260 = vmatprep.subr.mxu0 0.0
    %261 = vmatpush2.msra.mxu0 0.0
    %262 = vmatprep.subr.mxu0 0.0
    %263 = vmatpush2.msra.mxu0 0.0
    %264 = vmatprep.subr.mxu0 0.0
    %265 = vmatpush2.msra.mxu0 0.0
    %266 = vmatprep.subr.mxu0 0.0
    %267 = vmatpush2.msra.mxu0 0.0
    %268 = vmatprep.subr.mxu0 0.0
    %269 = vmatpush2.msra.mxu0 0.0
    %270 = vmatprep.subr.mxu0 0.0
    %271 = vmatpush2.msra.mxu0 0.0
    %272 = vmatprep.subr.mxu0 0.0
    %273 = vmatpush2.msra.mxu0 0.0
    %274 = vmatprep.subr.mxu0 0.0
    %275 = vmatpush2.msra.mxu0 0.0
    %276 = vmatprep.mubr.f32.mxu0 0.0
    %277 = vmatmul.mubr.f32.gmra.mxu0 %v116
    %v278 = vpop.f32.mrf.mxu0
    %v279 = vadd.f32 0.0, %v278
    %v280 = vpop.f32.mrf.mxu0
    %281 = vmatprep.mubr.f32.mxu0 0.0
    %282 = vmatmul.mubr.f32.gmra.mxu0 %v119
    %v283 = vpop.f32.mrf.mxu0
    %v284 = vadd.f32 0.0, %v283
    %v285 = vpop.f32.mrf.mxu0
    %286 = vmatprep.mubr.f32.mxu0 0.0
    %287 = vmatmul.mubr.f32.gmra.mxu0 %v122
    %v288 = vpop.f32.mrf.mxu0
    %v289 = vadd.f32 0.0, %v288
    %v290 = vpop.f32.mrf.mxu0
    %291 = vmatprep.mubr.f32.mxu0 0.0
    %292 = vmatmul.mubr.f32.gmra.mxu0 %v125
    %v293 = vpop.f32.mrf.mxu0
    %v294 = vadd.f32 0.0, %v293
    %v295 = vpop.f32.mrf.mxu0
    %296 = vdwg.mxu0
    %299 = vrot.lane.b32.xlu0 %v194, 96
    %v300 = vpop.permute.xlu0 %299
    %301 = vrot.lane.b32.xlu0 %v199, 96
    %v302 = vpop.permute.xlu0 %301
    %vm303 = vcmask 64512
    %v304 = vsel %vm303, %v194, 0
    %v306 = vsel %vm303, %v199, 0
    %v308 = vsel %vm303, %v300, 0
    %v310 = vsel %vm303, %v302, 0
    %312 = vmatprep.subr.mxu0 0.0
    %313 = vmatpush1.xpose.msra.mxu0 0.0
    %314 = vmatprep.subr.mxu0 0.0
    %315 = vmatpush1.xpose.msra.mxu0 0.0
    %316 = vmatprep.subr.mxu0 0.0
    %317 = vmatpush1.xpose.msra.mxu0 0.0
    %318 = vmatprep.subr.mxu0 0.0
    %319 = vmatpush1.xpose.msra.mxu0 0.0
    %320 = vmatprep.subr.mxu0 0.0
    %321 = vmatpush1.xpose.msra.mxu0 0.0
    %322 = vmatprep.subr.mxu0 0.0
    %323 = vmatpush1.xpose.msra.mxu0 0.0
    %324 = vmatprep.subr.mxu0 0.0
    %325 = vmatpush1.xpose.msra.mxu0 0.0
    %326 = vmatprep.subr.mxu0 0.0
    %327 = vmatpush1.xpose.msra.mxu0 0.0
    %328 = vmatprep.subr.mxu0 0.0
    %329 = vmatpush1.xpose.msra.mxu0 0.0
    %330 = vmatprep.subr.mxu0 0.0
    %331 = vmatpush1.xpose.msra.mxu0 0.0
    %332 = vmatprep.subr.mxu0 0.0
    %333 = vmatpush1.xpose.msra.mxu0 0.0
    %334 = vmatprep.subr.mxu0 0.0
    %335 = vmatpush1.xpose.msra.mxu0 0.0
    %336 = vmatprep.subr.mxu0 0.0
    %337 = vmatpush1.xpose.msra.mxu0 0.0
    %338 = vmatprep.subr.mxu0 0.0
    %339 = vmatpush1.xpose.msra.mxu0 0.0
    %340 = vmatprep.subr.mxu0 0.0
    %341 = vmatpush1.xpose.msra.mxu0 %v310
    %342 = vmatprep.subr.mxu0 0.0
    %343 = vmatpush1.xpose.msra.mxu0 %v308
    %344 = vmatprep.subr.mxu0 0.0
    %345 = vmatpush2.xpose.msra.mxu0 0.0
    %346 = vmatprep.subr.mxu0 0.0
    %347 = vmatpush2.xpose.msra.mxu0 0.0
    %348 = vmatprep.subr.mxu0 0.0
    %349 = vmatpush2.xpose.msra.mxu0 0.0
    %350 = vmatprep.subr.mxu0 0.0
    %351 = vmatpush2.xpose.msra.mxu0 0.0
    %352 = vmatprep.subr.mxu0 0.0
    %353 = vmatpush2.xpose.msra.mxu0 0.0
    %354 = vmatprep.subr.mxu0 0.0
    %355 = vmatpush2.xpose.msra.mxu0 0.0
    %356 = vmatprep.subr.mxu0 0.0
    %357 = vmatpush2.xpose.msra.mxu0 0.0
    %358 = vmatprep.subr.mxu0 0.0
    %359 = vmatpush2.xpose.msra.mxu0 0.0
    %360 = vmatprep.subr.mxu0 0.0
    %361 = vmatpush2.xpose.msra.mxu0 0.0
    %362 = vmatprep.subr.mxu0 0.0
    %363 = vmatpush2.xpose.msra.mxu0 0.0
    %364 = vmatprep.subr.mxu0 0.0
    %365 = vmatpush2.xpose.msra.mxu0 0.0
    %366 = vmatprep.subr.mxu0 0.0
    %367 = vmatpush2.xpose.msra.mxu0 0.0
    %368 = vmatprep.subr.mxu0 0.0
    %369 = vmatpush2.xpose.msra.mxu0 0.0
    %370 = vmatprep.subr.mxu0 0.0
    %371 = vmatpush2.xpose.msra.mxu0 0.0
    %372 = vmatprep.subr.mxu0 0.0
    %373 = vmatpush2.xpose.msra.mxu0 0.0
    %374 = vmatprep.subr.mxu0 0.0
    %375 = vmatpush2.xpose.msra.mxu0 0.0
    %376 = vmatprep.mubr.f32.mxu0 0.0
    %377 = vmatmul.mubr.f32.gmra.mxu0 %v304
    %v378 = vpop.f32.mrf.mxu0
    %v379 = vadd.f32 0.0, %v378
    %v380 = vpop.f32.mrf.mxu0
    %381 = vmatprep.mubr.f32.mxu0 0.0
    %382 = vmatmul.mubr.f32.gmra.mxu0 %v306
    %v383 = vpop.f32.mrf.mxu0
    %v384 = vadd.f32 0.0, %v383
    %v385 = vpop.f32.mrf.mxu0
    %386 = vdwg.mxu0
    %389 = vrot.lane.b32.xlu0 %v204, 96
    %v390 = vpop.permute.xlu0 %389
    %391 = vrot.lane.b32.xlu0 %v209, 96
    %v392 = vpop.permute.xlu0 %391
    %v393 = vsel %vm303, %v204, 0
    %v395 = vsel %vm303, %v209, 0
    %v397 = vsel %vm303, %v390, 0
    %v399 = vsel %vm303, %v392, 0
    %401 = vmatprep.subr.mxu0 0.0
    %402 = vmatpush1.xpose.msra.mxu0 0.0
    %403 = vmatprep.subr.mxu0 0.0
    %404 = vmatpush1.xpose.msra.mxu0 0.0
    %405 = vmatprep.subr.mxu0 0.0
    %406 = vmatpush1.xpose.msra.mxu0 0.0
    %407 = vmatprep.subr.mxu0 0.0
    %408 = vmatpush1.xpose.msra.mxu0 0.0
    %409 = vmatprep.subr.mxu0 0.0
    %410 = vmatpush1.xpose.msra.mxu0 0.0
    %411 = vmatprep.subr.mxu0 0.0
    %412 = vmatpush1.xpose.msra.mxu0 0.0
    %413 = vmatprep.subr.mxu0 0.0
    %414 = vmatpush1.xpose.msra.mxu0 0.0
    %415 = vmatprep.subr.mxu0 0.0
    %416 = vmatpush1.xpose.msra.mxu0 0.0
    %417 = vmatprep.subr.mxu0 0.0
    %418 = vmatpush1.xpose.msra.mxu0 0.0
    %419 = vmatprep.subr.mxu0 0.0
    %420 = vmatpush1.xpose.msra.mxu0 0.0
    %421 = vmatprep.subr.mxu0 0.0
    %422 = vmatpush1.xpose.msra.mxu0 0.0
    %423 = vmatprep.subr.mxu0 0.0
    %424 = vmatpush1.xpose.msra.mxu0 0.0
    %425 = vmatprep.subr.mxu0 0.0
    %426 = vmatpush1.xpose.msra.mxu0 0.0
    %427 = vmatprep.subr.mxu0 0.0
    %428 = vmatpush1.xpose.msra.mxu0 0.0
    %429 = vmatprep.subr.mxu0 0.0
    %430 = vmatpush1.xpose.msra.mxu0 %v399
    %431 = vmatprep.subr.mxu0 0.0
    %432 = vmatpush1.xpose.msra.mxu0 %v397
    %433 = vmatprep.subr.mxu0 0.0
    %434 = vmatpush2.xpose.msra.mxu0 0.0
    %435 = vmatprep.subr.mxu0 0.0
    %436 = vmatpush2.xpose.msra.mxu0 0.0
    %437 = vmatprep.subr.mxu0 0.0
    %438 = vmatpush2.xpose.msra.mxu0 0.0
    %439 = vmatprep.subr.mxu0 0.0
    %440 = vmatpush2.xpose.msra.mxu0 0.0
    %441 = vmatprep.subr.mxu0 0.0
    %442 = vmatpush2.xpose.msra.mxu0 0.0
    %443 = vmatprep.subr.mxu0 0.0
    %444 = vmatpush2.xpose.msra.mxu0 0.0
    %445 = vmatprep.subr.mxu0 0.0
    %446 = vmatpush2.xpose.msra.mxu0 0.0
    %447 = vmatprep.subr.mxu0 0.0
    %448 = vmatpush2.xpose.msra.mxu0 0.0
    %449 = vmatprep.subr.mxu0 0.0
    %450 = vmatpush2.xpose.msra.mxu0 0.0
    %451 = vmatprep.subr.mxu0 0.0
    %452 = vmatpush2.xpose.msra.mxu0 0.0
    %453 = vmatprep.subr.mxu0 0.0
    %454 = vmatpush2.xpose.msra.mxu0 0.0
    %455 = vmatprep.subr.mxu0 0.0
    %456 = vmatpush2.xpose.msra.mxu0 0.0
    %457 = vmatprep.subr.mxu0 0.0
    %458 = vmatpush2.xpose.msra.mxu0 0.0
    %459 = vmatprep.subr.mxu0 0.0
    %460 = vmatpush2.xpose.msra.mxu0 0.0
    %461 = vmatprep.subr.mxu0 0.0
    %462 = vmatpush2.xpose.msra.mxu0 0.0
    %463 = vmatprep.subr.mxu0 0.0
    %464 = vmatpush2.xpose.msra.mxu0 0.0
    %465 = vmatprep.mubr.f32.mxu0 0.0
    %466 = vmatmul.mubr.f32.gmra.mxu0 %v393
    %v467 = vpop.f32.mrf.mxu0
    %v468 = vadd.f32 0.0, %v467
    %v469 = vpop.f32.mrf.mxu0
    %470 = vmatprep.mubr.f32.mxu0 0.0
    %471 = vmatmul.mubr.f32.gmra.mxu0 %v395
    %v472 = vpop.f32.mrf.mxu0
    %v473 = vadd.f32 0.0, %v472
    %v474 = vpop.f32.mrf.mxu0
    %475 = vdwg.mxu0
    %v476 = vmul.f32 %v379, 0.35355338
    %v477 = vmul.f32 %v384, 0.35355338
    %v478 = vmul.f32 %v468, 0.35355338
    %v479 = vmul.f32 %v473, 0.35355338
    %v480 = vadd.f32 %v476, %v71
    %v481 = vadd.f32 %v477, %v71
    %v482 = vadd.f32 %v478, %v71
    %v483 = vadd.f32 %v479, %v71
    %vm484 = vcmask 130048
    %v485 = vsel %vm484, %v480, -inf
    %486 = vmax.xlane.f32.xlu0 %v485
    %v487 = vpop.xlane.xlu0 %486
    %v488 = vsel %vm484, %v481, -inf
    %489 = vmax.xlane.f32.xlu0 %v488
    %v490 = vpop.xlane.xlu0 %489
    %v491 = vsel %vm484, %v482, -inf
    %492 = vmax.xlane.f32.xlu0 %v491
    %v493 = vpop.xlane.xlu0 %492
    %v494 = vsel %vm484, %v483, -inf
    %495 = vmax.xlane.f32.xlu0 %v494
    %v496 = vpop.xlane.xlu0 %495
    %v497 = vsub.f32 %v480, %v487
    %v498 = vsub.f32 %v481, %v490
    %v499 = vsub.f32 %v482, %v493
    %v500 = vsub.f32 %v483, %v496
    %v501 = vmul.f32 %v497, 1.442695
    %v502 = vpow.pop %v501
    %v503 = vmul.f32 %v498, 1.442695
    %v504 = vpow.pop %v503
    %v505 = vmul.f32 %v499, 1.442695
    %v506 = vpow.pop %v505
    %v507 = vmul.f32 %v500, 1.442695
    %v508 = vpow.pop %v507
    %v509 = vsel %vm484, %v502, 0.0
    %510 = vadd.xlane.f32.xlu0 %v509
    %v511 = vpop.xlane.xlu0 %510
    %v512 = vsel %vm484, %v504, 0.0
    %513 = vadd.xlane.f32.xlu0 %v512
    %v514 = vpop.xlane.xlu0 %513
    %v515 = vsel %vm484, %v506, 0.0
    %516 = vadd.xlane.f32.xlu0 %v515
    %v517 = vpop.xlane.xlu0 %516
    %v518 = vsel %vm484, %v508, 0.0
    %519 = vadd.xlane.f32.xlu0 %v518
    %v520 = vpop.xlane.xlu0 %519
    %v521 = vrcp.pop %v511
    %v522 = vrcp.pop %v514
    %v523 = vrcp.pop %v517
    %v524 = vrcp.pop %v520
    %v525 = vmul.f32 %v502, %v521
    %v526 = vmul.f32 %v504, %v522
    %v527 = vmul.f32 %v506, %v523
    %v528 = vmul.f32 %v508, %v524
    %529 = vrot.lane.b32.xlu0 %v194, 120
    %v530 = vpop.permute.xlu0 %529
    %531 = vrot.lane.b32.xlu0 %v199, 120
    %v532 = vpop.permute.xlu0 %531
    %533 = vrot.lane.b32.xlu0 %v194, 88
    %v534 = vpop.permute.xlu0 %533
    %535 = vrot.lane.b32.xlu0 %v199, 88
    %v536 = vpop.permute.xlu0 %535
    %v537 = vsel %vm303, %v530, 0
    %v539 = vsel %vm303, %v532, 0
    %v541 = vsel %vm303, %v534, 0
    %v543 = vsel %vm303, %v536, 0
    %545 = vmatprep.subr.mxu0 0.0
    %546 = vmatpush1.xpose.msra.mxu0 0.0
    %547 = vmatprep.subr.mxu0 0.0
    %548 = vmatpush1.xpose.msra.mxu0 0.0
    %549 = vmatprep.subr.mxu0 0.0
    %550 = vmatpush1.xpose.msra.mxu0 0.0
    %551 = vmatprep.subr.mxu0 0.0
    %552 = vmatpush1.xpose.msra.mxu0 0.0
    %553 = vmatprep.subr.mxu0 0.0
    %554 = vmatpush1.xpose.msra.mxu0 0.0
    %555 = vmatprep.subr.mxu0 0.0
    %556 = vmatpush1.xpose.msra.mxu0 0.0
    %557 = vmatprep.subr.mxu0 0.0
    %558 = vmatpush1.xpose.msra.mxu0 0.0
    %559 = vmatprep.subr.mxu0 0.0
    %560 = vmatpush1.xpose.msra.mxu0 0.0
    %561 = vmatprep.subr.mxu0 0.0
    %562 = vmatpush1.xpose.msra.mxu0 0.0
    %563 = vmatprep.subr.mxu0 0.0
    %564 = vmatpush1.xpose.msra.mxu0 0.0
    %565 = vmatprep.subr.mxu0 0.0
    %566 = vmatpush1.xpose.msra.mxu0 0.0
    %567 = vmatprep.subr.mxu0 0.0
    %568 = vmatpush1.xpose.msra.mxu0 0.0
    %569 = vmatprep.subr.mxu0 0.0
    %570 = vmatpush1.xpose.msra.mxu0 0.0
    %571 = vmatprep.subr.mxu0 0.0
    %572 = vmatpush1.xpose.msra.mxu0 0.0
    %573 = vmatprep.subr.mxu0 0.0
    %574 = vmatpush1.xpose.msra.mxu0 %v543
    %575 = vmatprep.subr.mxu0 0.0
    %576 = vmatpush1.xpose.msra.mxu0 %v541
    %577 = vmatprep.subr.mxu0 0.0
    %578 = vmatpush2.xpose.msra.mxu0 0.0
    %579 = vmatprep.subr.mxu0 0.0
    %580 = vmatpush2.xpose.msra.mxu0 0.0
    %581 = vmatprep.subr.mxu0 0.0
    %582 = vmatpush2.xpose.msra.mxu0 0.0
    %583 = vmatprep.subr.mxu0 0.0
    %584 = vmatpush2.xpose.msra.mxu0 0.0
    %585 = vmatprep.subr.mxu0 0.0
    %586 = vmatpush2.xpose.msra.mxu0 0.0
    %587 = vmatprep.subr.mxu0 0.0
    %588 = vmatpush2.xpose.msra.mxu0 0.0
    %589 = vmatprep.subr.mxu0 0.0
    %590 = vmatpush2.xpose.msra.mxu0 0.0
    %591 = vmatprep.subr.mxu0 0.0
    %592 = vmatpush2.xpose.msra.mxu0 0.0
    %593 = vmatprep.subr.mxu0 0.0
    %594 = vmatpush2.xpose.msra.mxu0 0.0
    %595 = vmatprep.subr.mxu0 0.0
    %596 = vmatpush2.xpose.msra.mxu0 0.0
    %597 = vmatprep.subr.mxu0 0.0
    %598 = vmatpush2.xpose.msra.mxu0 0.0
    %599 = vmatprep.subr.mxu0 0.0
    %600 = vmatpush2.xpose.msra.mxu0 0.0
    %601 = vmatprep.subr.mxu0 0.0
    %602 = vmatpush2.xpose.msra.mxu0 0.0
    %603 = vmatprep.subr.mxu0 0.0
    %604 = vmatpush2.xpose.msra.mxu0 0.0
    %605 = vmatprep.subr.mxu0 0.0
    %606 = vmatpush2.xpose.msra.mxu0 0.0
    %607 = vmatprep.subr.mxu0 0.0
    %608 = vmatpush2.xpose.msra.mxu0 0.0
    %609 = vmatprep.mubr.f32.mxu0 0.0
    %610 = vmatmul.mubr.f32.gmra.mxu0 %v537
    %v611 = vpop.f32.mrf.mxu0
    %v612 = vadd.f32 0.0, %v611
    %v613 = vpop.f32.mrf.mxu0
    %614 = vmatprep.mubr.f32.mxu0 0.0
    %615 = vmatmul.mubr.f32.gmra.mxu0 %v539
    %v616 = vpop.f32.mrf.mxu0
    %v617 = vadd.f32 0.0, %v616
    %v618 = vpop.f32.mrf.mxu0
    %619 = vdwg.mxu0
    %620 = vrot.lane.b32.xlu0 %v204, 120
    %v621 = vpop.permute.xlu0 %620
    %622 = vrot.lane.b32.xlu0 %v209, 120
    %v623 = vpop.permute.xlu0 %622
    %624 = vrot.lane.b32.xlu0 %v204, 88
    %v625 = vpop.permute.xlu0 %624
    %626 = vrot.lane.b32.xlu0 %v209, 88
    %v627 = vpop.permute.xlu0 %626
    %v628 = vsel %vm303, %v621, 0
    %v630 = vsel %vm303, %v623, 0
    %v632 = vsel %vm303, %v625, 0
    %v634 = vsel %vm303, %v627, 0
    %636 = vmatprep.subr.mxu0 0.0
    %637 = vmatpush1.xpose.msra.mxu0 0.0
    %638 = vmatprep.subr.mxu0 0.0
    %639 = vmatpush1.xpose.msra.mxu0 0.0
    %640 = vmatprep.subr.mxu0 0.0
    %641 = vmatpush1.xpose.msra.mxu0 0.0
    %642 = vmatprep.subr.mxu0 0.0
    %643 = vmatpush1.xpose.msra.mxu0 0.0
    %644 = vmatprep.subr.mxu0 0.0
    %645 = vmatpush1.xpose.msra.mxu0 0.0
    %646 = vmatprep.subr.mxu0 0.0
    %647 = vmatpush1.xpose.msra.mxu0 0.0
    %648 = vmatprep.subr.mxu0 0.0
    %649 = vmatpush1.xpose.msra.mxu0 0.0
    %650 = vmatprep.subr.mxu0 0.0
    %651 = vmatpush1.xpose.msra.mxu0 0.0
    %652 = vmatprep.subr.mxu0 0.0
    %653 = vmatpush1.xpose.msra.mxu0 0.0
    %654 = vmatprep.subr.mxu0 0.0
    %655 = vmatpush1.xpose.msra.mxu0 0.0
    %656 = vmatprep.subr.mxu0 0.0
    %657 = vmatpush1.xpose.msra.mxu0 0.0
    %658 = vmatprep.subr.mxu0 0.0
    %659 = vmatpush1.xpose.msra.mxu0 0.0
    %660 = vmatprep.subr.mxu0 0.0
    %661 = vmatpush1.xpose.msra.mxu0 0.0
    %662 = vmatprep.subr.mxu0 0.0
    %663 = vmatpush1.xpose.msra.mxu0 0.0
    %664 = vmatprep.subr.mxu0 0.0
    %665 = vmatpush1.xpose.msra.mxu0 %v634
    %666 = vmatprep.subr.mxu0 0.0
    %667 = vmatpush1.xpose.msra.mxu0 %v632
    %668 = vmatprep.subr.mxu0 0.0
    %669 = vmatpush2.xpose.msra.mxu0 0.0
    %670 = vmatprep.subr.mxu0 0.0
    %671 = vmatpush2.xpose.msra.mxu0 0.0
    %672 = vmatprep.subr.mxu0 0.0
    %673 = vmatpush2.xpose.msra.mxu0 0.0
    %674 = vmatprep.subr.mxu0 0.0
    %675 = vmatpush2.xpose.msra.mxu0 0.0
    %676 = vmatprep.subr.mxu0 0.0
    %677 = vmatpush2.xpose.msra.mxu0 0.0
    %678 = vmatprep.subr.mxu0 0.0
    %679 = vmatpush2.xpose.msra.mxu0 0.0
    %680 = vmatprep.subr.mxu0 0.0
    %681 = vmatpush2.xpose.msra.mxu0 0.0
    %682 = vmatprep.subr.mxu0 0.0
    %683 = vmatpush2.xpose.msra.mxu0 0.0
    %684 = vmatprep.subr.mxu0 0.0
    %685 = vmatpush2.xpose.msra.mxu0 0.0
    %686 = vmatprep.subr.mxu0 0.0
    %687 = vmatpush2.xpose.msra.mxu0 0.0
    %688 = vmatprep.subr.mxu0 0.0
    %689 = vmatpush2.xpose.msra.mxu0 0.0
    %690 = vmatprep.subr.mxu0 0.0
    %691 = vmatpush2.xpose.msra.mxu0 0.0
    %692 = vmatprep.subr.mxu0 0.0
    %693 = vmatpush2.xpose.msra.mxu0 0.0
    %694 = vmatprep.subr.mxu0 0.0
    %695 = vmatpush2.xpose.msra.mxu0 0.0
    %696 = vmatprep.subr.mxu0 0.0
    %697 = vmatpush2.xpose.msra.mxu0 0.0
    %698 = vmatprep.subr.mxu0 0.0
    %699 = vmatpush2.xpose.msra.mxu0 0.0
    %700 = vmatprep.mubr.f32.mxu0 0.0
    %701 = vmatmul.mubr.f32.gmra.mxu0 %v628
    %v702 = vpop.f32.mrf.mxu0
    %v703 = vadd.f32 0.0, %v702
    %v704 = vpop.f32.mrf.mxu0
    %705 = vmatprep.mubr.f32.mxu0 0.0
    %706 = vmatmul.mubr.f32.gmra.mxu0 %v630
    %v707 = vpop.f32.mrf.mxu0
    %v708 = vadd.f32 0.0, %v707
    %v709 = vpop.f32.mrf.mxu0
    %710 = vdwg.mxu0
    %v711 = vmul.f32 %v612, 0.35355338
    %v712 = vmul.f32 %v617, 0.35355338
    %v713 = vmul.f32 %v703, 0.35355338
    %v714 = vmul.f32 %v708, 0.35355338
    %v715 = vadd.f32 %v711, %v71
    %v716 = vadd.f32 %v712, %v71
    %v717 = vadd.f32 %v713, %v71
    %v718 = vadd.f32 %v714, %v71
    %v719 = vsel %vm484, %v715, -inf
    %720 = vmax.xlane.f32.xlu0 %v719
    %v721 = vpop.xlane.xlu0 %720
    %v722 = vsel %vm484, %v716, -inf
    %723 = vmax.xlane.f32.xlu0 %v722
    %v724 = vpop.xlane.xlu0 %723
    %v725 = vsel %vm484, %v717, -inf
    %726 = vmax.xlane.f32.xlu0 %v725
    %v727 = vpop.xlane.xlu0 %726
    %v728 = vsel %vm484, %v718, -inf
    %729 = vmax.xlane.f32.xlu0 %v728
    %v730 = vpop.xlane.xlu0 %729
    %v731 = vsub.f32 %v715, %v721
    %v732 = vsub.f32 %v716, %v724
    %v733 = vsub.f32 %v717, %v727
    %v734 = vsub.f32 %v718, %v730
    %v735 = vmul.f32 %v731, 1.442695
    %v736 = vpow.pop %v735
    %v737 = vmul.f32 %v732, 1.442695
    %v738 = vpow.pop %v737
    %v739 = vmul.f32 %v733, 1.442695
    %v740 = vpow.pop %v739
    %v741 = vmul.f32 %v734, 1.442695
    %v742 = vpow.pop %v741
    %v743 = vsel %vm484, %v736, 0.0
    %744 = vadd.xlane.f32.xlu0 %v743
    %v745 = vpop.xlane.xlu0 %744
    %v746 = vsel %vm484, %v738, 0.0
    %747 = vadd.xlane.f32.xlu0 %v746
    %v748 = vpop.xlane.xlu0 %747
    %v749 = vsel %vm484, %v740, 0.0
    %750 = vadd.xlane.f32.xlu0 %v749
    %v751 = vpop.xlane.xlu0 %750
    %v752 = vsel %vm484, %v742, 0.0
    %753 = vadd.xlane.f32.xlu0 %v752
    %v754 = vpop.xlane.xlu0 %753
    %v755 = vrcp.pop %v745
    %v756 = vrcp.pop %v748
    %v757 = vrcp.pop %v751
    %v758 = vrcp.pop %v754
    %v759 = vmul.f32 %v736, %v755
    %v760 = vmul.f32 %v738, %v756
    %v761 = vmul.f32 %v740, %v757
    %v762 = vmul.f32 %v742, %v758
    %765 = vrot.lane.b32.xlu0 %v279, 96
    %v766 = vpop.permute.xlu0 %765
    %767 = vrot.lane.b32.xlu0 %v284, 96
    %v768 = vpop.permute.xlu0 %767
    %v772 = vsel %vm484, %v759, 0
    %v775 = vsel %vm484, %v760, 0
    %777 = vmatprep.subr.mxu0 0.0
    %778 = vmatpush1.msra.mxu0 0.0
    %779 = vmatprep.subr.mxu0 0.0
    %780 = vmatpush1.msra.mxu0 0.0
    %781 = vmatprep.subr.mxu0 0.0
    %782 = vmatpush1.msra.mxu0 0.0
    %783 = vmatprep.subr.mxu0 0.0
    %784 = vmatpush1.msra.mxu0 0.0
    %785 = vmatprep.subr.mxu0 0.0
    %786 = vmatpush1.msra.mxu0 0.0
    %787 = vmatprep.subr.mxu0 0.0
    %788 = vmatpush1.msra.mxu0 0.0
    %789 = vmatprep.subr.mxu0 0.0
    %790 = vmatpush1.msra.mxu0 0.0
    %791 = vmatprep.subr.mxu0 0.0
    %792 = vmatpush1.msra.mxu0 0.0
    %793 = vmatprep.subr.mxu0 0.0
    %794 = vmatpush1.msra.mxu0 0.0
    %795 = vmatprep.subr.mxu0 0.0
    %796 = vmatpush1.msra.mxu0 0.0
    %797 = vmatprep.subr.mxu0 0.0
    %798 = vmatpush1.msra.mxu0 0.0
    %799 = vmatprep.subr.mxu0 0.0
    %800 = vmatpush1.msra.mxu0 0.0
    %801 = vmatprep.subr.mxu0 0.0
    %802 = vmatpush1.msra.mxu0 0.0
    %803 = vmatprep.subr.mxu0 0.0
    %804 = vmatpush1.msra.mxu0 0.0
    %805 = vmatprep.subr.mxu0 0.0
    %806 = vmatpush1.msra.mxu0 %v768
    %807 = vmatprep.subr.mxu0 0.0
    %808 = vmatpush1.msra.mxu0 %v766
    %809 = vmatprep.subr.mxu0 0.0
    %810 = vmatpush2.msra.mxu0 0.0
    %811 = vmatprep.subr.mxu0 0.0
    %812 = vmatpush2.msra.mxu0 0.0
    %813 = vmatprep.subr.mxu0 0.0
    %814 = vmatpush2.msra.mxu0 0.0
    %815 = vmatprep.subr.mxu0 0.0
    %816 = vmatpush2.msra.mxu0 0.0
    %817 = vmatprep.subr.mxu0 0.0
    %818 = vmatpush2.msra.mxu0 0.0
    %819 = vmatprep.subr.mxu0 0.0
    %820 = vmatpush2.msra.mxu0 0.0
    %821 = vmatprep.subr.mxu0 0.0
    %822 = vmatpush2.msra.mxu0 0.0
    %823 = vmatprep.subr.mxu0 0.0
    %824 = vmatpush2.msra.mxu0 0.0
    %825 = vmatprep.subr.mxu0 0.0
    %826 = vmatpush2.msra.mxu0 0.0
    %827 = vmatprep.subr.mxu0 0.0
    %828 = vmatpush2.msra.mxu0 0.0
    %829 = vmatprep.subr.mxu0 0.0
    %830 = vmatpush2.msra.mxu0 0.0
    %831 = vmatprep.subr.mxu0 0.0
    %832 = vmatpush2.msra.mxu0 0.0
    %833 = vmatprep.subr.mxu0 0.0
    %834 = vmatpush2.msra.mxu0 0.0
    %835 = vmatprep.subr.mxu0 0.0
    %836 = vmatpush2.msra.mxu0 0.0
    %837 = vmatprep.subr.mxu0 0.0
    %838 = vmatpush2.msra.mxu0 0.0
    %839 = vmatprep.subr.mxu0 0.0
    %840 = vmatpush2.msra.mxu0 0.0
    %841 = vmatprep.mubr.f32.mxu0 0.0
    %842 = vmatmul.mubr.f32.gmra.mxu0 %v772
    %v843 = vpop.f32.mrf.mxu0
    %v844 = vadd.f32 0.0, %v843
    %v845 = vpop.f32.mrf.mxu0
    %846 = vmatprep.mubr.f32.mxu0 0.0
    %847 = vmatmul.mubr.f32.gmra.mxu0 %v775
    %v848 = vpop.f32.mrf.mxu0
    %v849 = vadd.f32 0.0, %v848
    %v850 = vpop.f32.mrf.mxu0
    %851 = vdwg.mxu0
    %854 = vrot.lane.b32.xlu0 %v289, 96
    %v855 = vpop.permute.xlu0 %854
    %856 = vrot.lane.b32.xlu0 %v294, 96
    %v857 = vpop.permute.xlu0 %856
    %v861 = vsel %vm484, %v761, 0
    %v864 = vsel %vm484, %v762, 0
    %866 = vmatprep.subr.mxu0 0.0
    %867 = vmatpush1.msra.mxu0 0.0
    %868 = vmatprep.subr.mxu0 0.0
    %869 = vmatpush1.msra.mxu0 0.0
    %870 = vmatprep.subr.mxu0 0.0
    %871 = vmatpush1.msra.mxu0 0.0
    %872 = vmatprep.subr.mxu0 0.0
    %873 = vmatpush1.msra.mxu0 0.0
    %874 = vmatprep.subr.mxu0 0.0
    %875 = vmatpush1.msra.mxu0 0.0
    %876 = vmatprep.subr.mxu0 0.0
    %877 = vmatpush1.msra.mxu0 0.0
    %878 = vmatprep.subr.mxu0 0.0
    %879 = vmatpush1.msra.mxu0 0.0
    %880 = vmatprep.subr.mxu0 0.0
    %881 = vmatpush1.msra.mxu0 0.0
    %882 = vmatprep.subr.mxu0 0.0
    %883 = vmatpush1.msra.mxu0 0.0
    %884 = vmatprep.subr.mxu0 0.0
    %885 = vmatpush1.msra.mxu0 0.0
    %886 = vmatprep.subr.mxu0 0.0
    %887 = vmatpush1.msra.mxu0 0.0
    %888 = vmatprep.subr.mxu0 0.0
    %889 = vmatpush1.msra.mxu0 0.0
    %890 = vmatprep.subr.mxu0 0.0
    %891 = vmatpush1.msra.mxu0 0.0
    %892 = vmatprep.subr.mxu0 0.0
    %893 = vmatpush1.msra.mxu0 0.0
    %894 = vmatprep.subr.mxu0 0.0
    %895 = vmatpush1.msra.mxu0 %v857
    %896 = vmatprep.subr.mxu0 0.0
    %897 = vmatpush1.msra.mxu0 %v855
    %898 = vmatprep.subr.mxu0 0.0
    %899 = vmatpush2.msra.mxu0 0.0
    %900 = vmatprep.subr.mxu0 0.0
    %901 = vmatpush2.msra.mxu0 0.0
    %902 = vmatprep.subr.mxu0 0.0
    %903 = vmatpush2.msra.mxu0 0.0
    %904 = vmatprep.subr.mxu0 0.0
    %905 = vmatpush2.msra.mxu0 0.0
    %906 = vmatprep.subr.mxu0 0.0
    %907 = vmatpush2.msra.mxu0 0.0
    %908 = vmatprep.subr.mxu0 0.0
    %909 = vmatpush2.msra.mxu0 0.0
    %910 = vmatprep.subr.mxu0 0.0
    %911 = vmatpush2.msra.mxu0 0.0
    %912 = vmatprep.subr.mxu0 0.0
    %913 = vmatpush2.msra.mxu0 0.0
    %914 = vmatprep.subr.mxu0 0.0
    %915 = vmatpush2.msra.mxu0 0.0
    %916 = vmatprep.subr.mxu0 0.0
    %917 = vmatpush2.msra.mxu0 0.0
    %918 = vmatprep.subr.mxu0 0.0
    %919 = vmatpush2.msra.mxu0 0.0
    %920 = vmatprep.subr.mxu0 0.0
    %921 = vmatpush2.msra.mxu0 0.0
    %922 = vmatprep.subr.mxu0 0.0
    %923 = vmatpush2.msra.mxu0 0.0
    %924 = vmatprep.subr.mxu0 0.0
    %925 = vmatpush2.msra.mxu0 0.0
    %926 = vmatprep.subr.mxu0 0.0
    %927 = vmatpush2.msra.mxu0 0.0
    %928 = vmatprep.subr.mxu0 0.0
    %929 = vmatpush2.msra.mxu0 0.0
    %930 = vmatprep.mubr.f32.mxu0 0.0
    %931 = vmatmul.mubr.f32.gmra.mxu0 %v861
    %v932 = vpop.f32.mrf.mxu0
    %v933 = vadd.f32 0.0, %v932
    %v934 = vpop.f32.mrf.mxu0
    %935 = vmatprep.mubr.f32.mxu0 0.0
    %936 = vmatmul.mubr.f32.gmra.mxu0 %v864
    %v937 = vpop.f32.mrf.mxu0
    %v938 = vadd.f32 0.0, %v937
    %v939 = vpop.f32.mrf.mxu0
    %940 = vdwg.mxu0
    %v942 = vsel %vm484, %v525, 0
    %v945 = vsel %vm484, %v526, 0
    %947 = vmatprep.subr.mxu0 0.0
    %948 = vmatpush1.msra.mxu0 0.0
    %949 = vmatprep.subr.mxu0 0.0
    %950 = vmatpush1.msra.mxu0 0.0
    %951 = vmatprep.subr.mxu0 0.0
    %952 = vmatpush1.msra.mxu0 0.0
    %953 = vmatprep.subr.mxu0 0.0
    %954 = vmatpush1.msra.mxu0 0.0
    %955 = vmatprep.subr.mxu0 0.0
    %956 = vmatpush1.msra.mxu0 0.0
    %957 = vmatprep.subr.mxu0 0.0
    %958 = vmatpush1.msra.mxu0 0.0
    %959 = vmatprep.subr.mxu0 0.0
    %960 = vmatpush1.msra.mxu0 0.0
    %961 = vmatprep.subr.mxu0 0.0
    %962 = vmatpush1.msra.mxu0 0.0
    %963 = vmatprep.subr.mxu0 0.0
    %964 = vmatpush1.msra.mxu0 0.0
    %965 = vmatprep.subr.mxu0 0.0
    %966 = vmatpush1.msra.mxu0 0.0
    %967 = vmatprep.subr.mxu0 0.0
    %968 = vmatpush1.msra.mxu0 0.0
    %969 = vmatprep.subr.mxu0 0.0
    %970 = vmatpush1.msra.mxu0 0.0
    %971 = vmatprep.subr.mxu0 0.0
    %972 = vmatpush1.msra.mxu0 0.0
    %973 = vmatprep.subr.mxu0 0.0
    %974 = vmatpush1.msra.mxu0 0.0
    %975 = vmatprep.subr.mxu0 0.0
    %976 = vmatpush1.msra.mxu0 %v284
    %977 = vmatprep.subr.mxu0 0.0
    %978 = vmatpush1.msra.mxu0 %v279
    %979 = vmatprep.subr.mxu0 0.0
    %980 = vmatpush2.msra.mxu0 0.0
    %981 = vmatprep.subr.mxu0 0.0
    %982 = vmatpush2.msra.mxu0 0.0
    %983 = vmatprep.subr.mxu0 0.0
    %984 = vmatpush2.msra.mxu0 0.0
    %985 = vmatprep.subr.mxu0 0.0
    %986 = vmatpush2.msra.mxu0 0.0
    %987 = vmatprep.subr.mxu0 0.0
    %988 = vmatpush2.msra.mxu0 0.0
    %989 = vmatprep.subr.mxu0 0.0
    %990 = vmatpush2.msra.mxu0 0.0
    %991 = vmatprep.subr.mxu0 0.0
    %992 = vmatpush2.msra.mxu0 0.0
    %993 = vmatprep.subr.mxu0 0.0
    %994 = vmatpush2.msra.mxu0 0.0
    %995 = vmatprep.subr.mxu0 0.0
    %996 = vmatpush2.msra.mxu0 0.0
    %997 = vmatprep.subr.mxu0 0.0
    %998 = vmatpush2.msra.mxu0 0.0
    %999 = vmatprep.subr.mxu0 0.0
    %1000 = vmatpush2.msra.mxu0 0.0
    %1001 = vmatprep.subr.mxu0 0.0
    %1002 = vmatpush2.msra.mxu0 0.0
    %1003 = vmatprep.subr.mxu0 0.0
    %1004 = vmatpush2.msra.mxu0 0.0
    %1005 = vmatprep.subr.mxu0 0.0
    %1006 = vmatpush2.msra.mxu0 0.0
    %1007 = vmatprep.subr.mxu0 0.0
    %1008 = vmatpush2.msra.mxu0 0.0
    %1009 = vmatprep.subr.mxu0 0.0
    %1010 = vmatpush2.msra.mxu0 0.0
    %1011 = vmatprep.mubr.f32.mxu0 0.0
    %1012 = vmatmul.mubr.f32.gmra.mxu0 %v942
    %v1013 = vpop.f32.mrf.mxu0
    %v1014 = vadd.f32 %v844, %v1013
    %v1015 = vpop.f32.mrf.mxu0
    %1016 = vmatprep.mubr.f32.mxu0 0.0
    %1017 = vmatmul.mubr.f32.gmra.mxu0 %v945
    %v1018 = vpop.f32.mrf.mxu0
    %v1019 = vadd.f32 %v849, %v1018
    %v1020 = vpop.f32.mrf.mxu0
    %1021 = vdwg.mxu0
    %v1023 = vsel %vm484, %v527, 0
    %v1026 = vsel %vm484, %v528, 0
    %1028 = vmatprep.subr.mxu0 0.0
    %1029 = vmatpush1.msra.mxu0 0.0
    %1030 = vmatprep.subr.mxu0 0.0
    %1031 = vmatpush1.msra.mxu0 0.0
    %1032 = vmatprep.subr.mxu0 0.0
    %1033 = vmatpush1.msra.mxu0 0.0
    %1034 = vmatprep.subr.mxu0 0.0
    %1035 = vmatpush1.msra.mxu0 0.0
    %1036 = vmatprep.subr.mxu0 0.0
    %1037 = vmatpush1.msra.mxu0 0.0
    %1038 = vmatprep.subr.mxu0 0.0
    %1039 = vmatpush1.msra.mxu0 0.0
    %1040 = vmatprep.subr.mxu0 0.0
    %1041 = vmatpush1.msra.mxu0 0.0
    %1042 = vmatprep.subr.mxu0 0.0
    %1043 = vmatpush1.msra.mxu0 0.0
    %1044 = vmatprep.subr.mxu0 0.0
    %1045 = vmatpush1.msra.mxu0 0.0
    %1046 = vmatprep.subr.mxu0 0.0
    %1047 = vmatpush1.msra.mxu0 0.0
    %1048 = vmatprep.subr.mxu0 0.0
    %1049 = vmatpush1.msra.mxu0 0.0
    %1050 = vmatprep.subr.mxu0 0.0
    %1051 = vmatpush1.msra.mxu0 0.0
    %1052 = vmatprep.subr.mxu0 0.0
    %1053 = vmatpush1.msra.mxu0 0.0
    %1054 = vmatprep.subr.mxu0 0.0
    %1055 = vmatpush1.msra.mxu0 0.0
    %1056 = vmatprep.subr.mxu0 0.0
    %1057 = vmatpush1.msra.mxu0 %v294
    %1058 = vmatprep.subr.mxu0 0.0
    %1059 = vmatpush1.msra.mxu0 %v289
    %1060 = vmatprep.subr.mxu0 0.0
    %1061 = vmatpush2.msra.mxu0 0.0
    %1062 = vmatprep.subr.mxu0 0.0
    %1063 = vmatpush2.msra.mxu0 0.0
    %1064 = vmatprep.subr.mxu0 0.0
    %1065 = vmatpush2.msra.mxu0 0.0
    %1066 = vmatprep.subr.mxu0 0.0
    %1067 = vmatpush2.msra.mxu0 0.0
    %1068 = vmatprep.subr.mxu0 0.0
    %1069 = vmatpush2.msra.mxu0 0.0
    %1070 = vmatprep.subr.mxu0 0.0
    %1071 = vmatpush2.msra.mxu0 0.0
    %1072 = vmatprep.subr.mxu0 0.0
    %1073 = vmatpush2.msra.mxu0 0.0
    %1074 = vmatprep.subr.mxu0 0.0
    %1075 = vmatpush2.msra.mxu0 0.0
    %1076 = vmatprep.subr.mxu0 0.0
    %1077 = vmatpush2.msra.mxu0 0.0
    %1078 = vmatprep.subr.mxu0 0.0
    %1079 = vmatpush2.msra.mxu0 0.0
    %1080 = vmatprep.subr.mxu0 0.0
    %1081 = vmatpush2.msra.mxu0 0.0
    %1082 = vmatprep.subr.mxu0 0.0
    %1083 = vmatpush2.msra.mxu0 0.0
    %1084 = vmatprep.subr.mxu0 0.0
    %1085 = vmatpush2.msra.mxu0 0.0
    %1086 = vmatprep.subr.mxu0 0.0
    %1087 = vmatpush2.msra.mxu0 0.0
    %1088 = vmatprep.subr.mxu0 0.0
    %1089 = vmatpush2.msra.mxu0 0.0
    %1090 = vmatprep.subr.mxu0 0.0
    %1091 = vmatpush2.msra.mxu0 0.0
    %1092 = vmatprep.mubr.f32.mxu0 0.0
    %1093 = vmatmul.mubr.f32.gmra.mxu0 %v1023
    %v1094 = vpop.f32.mrf.mxu0
    %v1095 = vadd.f32 %v933, %v1094
    %v1096 = vpop.f32.mrf.mxu0
    %1097 = vmatprep.mubr.f32.mxu0 0.0
    %1098 = vmatmul.mubr.f32.gmra.mxu0 %v1026
    %v1099 = vpop.f32.mrf.mxu0
    %v1100 = vadd.f32 %v938, %v1099
    %v1101 = vpop.f32.mrf.mxu0
    %1102 = vdwg.mxu0
    %1103 = vrot.lane.b32.xlu0 %v194, 112
    %v1104 = vpop.permute.xlu0 %1103
    %1105 = vrot.lane.b32.xlu0 %v199, 112
    %v1106 = vpop.permute.xlu0 %1105
    %1107 = vrot.lane.b32.xlu0 %v194, 80
    %v1108 = vpop.permute.xlu0 %1107
    %1109 = vrot.lane.b32.xlu0 %v199, 80
    %v1110 = vpop.permute.xlu0 %1109
    %v1111 = vsel %vm303, %v1104, 0
    %v1113 = vsel %vm303, %v1106, 0
    %v1115 = vsel %vm303, %v1108, 0
    %v1117 = vsel %vm303, %v1110, 0
    %1119 = vmatprep.subr.mxu0 0.0
    %1120 = vmatpush1.xpose.msra.mxu0 0.0
    %1121 = vmatprep.subr.mxu0 0.0
    %1122 = vmatpush1.xpose.msra.mxu0 0.0
    %1123 = vmatprep.subr.mxu0 0.0
    %1124 = vmatpush1.xpose.msra.mxu0 0.0
    %1125 = vmatprep.subr.mxu0 0.0
    %1126 = vmatpush1.xpose.msra.mxu0 0.0
    %1127 = vmatprep.subr.mxu0 0.0
    %1128 = vmatpush1.xpose.msra.mxu0 0.0
    %1129 = vmatprep.subr.mxu0 0.0
    %1130 = vmatpush1.xpose.msra.mxu0 0.0
    %1131 = vmatprep.subr.mxu0 0.0
    %1132 = vmatpush1.xpose.msra.mxu0 0.0
    %1133 = vmatprep.subr.mxu0 0.0
    %1134 = vmatpush1.xpose.msra.mxu0 0.0
    %1135 = vmatprep.subr.mxu0 0.0
    %1136 = vmatpush1.xpose.msra.mxu0 0.0
    %1137 = vmatprep.subr.mxu0 0.0
    %1138 = vmatpush1.xpose.msra.mxu0 0.0
    %1139 = vmatprep.subr.mxu0 0.0
    %1140 = vmatpush1.xpose.msra.mxu0 0.0
    %1141 = vmatprep.subr.mxu0 0.0
    %1142 = vmatpush1.xpose.msra.mxu0 0.0
    %1143 = vmatprep.subr.mxu0 0.0
    %1144 = vmatpush1.xpose.msra.mxu0 0.0
    %1145 = vmatprep.subr.mxu0 0.0
    %1146 = vmatpush1.xpose.msra.mxu0 0.0
    %1147 = vmatprep.subr.mxu0 0.0
    %1148 = vmatpush1.xpose.msra.mxu0 %v1117
    %1149 = vmatprep.subr.mxu0 0.0
    %1150 = vmatpush1.xpose.msra.mxu0 %v1115
    %1151 = vmatprep.subr.mxu0 0.0
    %1152 = vmatpush2.xpose.msra.mxu0 0.0
    %1153 = vmatprep.subr.mxu0 0.0
    %1154 = vmatpush2.xpose.msra.mxu0 0.0
    %1155 = vmatprep.subr.mxu0 0.0
    %1156 = vmatpush2.xpose.msra.mxu0 0.0
    %1157 = vmatprep.subr.mxu0 0.0
    %1158 = vmatpush2.xpose.msra.mxu0 0.0
    %1159 = vmatprep.subr.mxu0 0.0
    %1160 = vmatpush2.xpose.msra.mxu0 0.0
    %1161 = vmatprep.subr.mxu0 0.0
    %1162 = vmatpush2.xpose.msra.mxu0 0.0
    %1163 = vmatprep.subr.mxu0 0.0
    %1164 = vmatpush2.xpose.msra.mxu0 0.0
    %1165 = vmatprep.subr.mxu0 0.0
    %1166 = vmatpush2.xpose.msra.mxu0 0.0
    %1167 = vmatprep.subr.mxu0 0.0
    %1168 = vmatpush2.xpose.msra.mxu0 0.0
    %1169 = vmatprep.subr.mxu0 0.0
    %1170 = vmatpush2.xpose.msra.mxu0 0.0
    %1171 = vmatprep.subr.mxu0 0.0
    %1172 = vmatpush2.xpose.msra.mxu0 0.0
    %1173 = vmatprep.subr.mxu0 0.0
    %1174 = vmatpush2.xpose.msra.mxu0 0.0
    %1175 = vmatprep.subr.mxu0 0.0
    %1176 = vmatpush2.xpose.msra.mxu0 0.0
    %1177 = vmatprep.subr.mxu0 0.0
    %1178 = vmatpush2.xpose.msra.mxu0 0.0
    %1179 = vmatprep.subr.mxu0 0.0
    %1180 = vmatpush2.xpose.msra.mxu0 0.0
    %1181 = vmatprep.subr.mxu0 0.0
    %1182 = vmatpush2.xpose.msra.mxu0 0.0
    %1183 = vmatprep.mubr.f32.mxu0 0.0
    %1184 = vmatmul.mubr.f32.gmra.mxu0 %v1111
    %v1185 = vpop.f32.mrf.mxu0
    %v1186 = vadd.f32 0.0, %v1185
    %v1187 = vpop.f32.mrf.mxu0
    %1188 = vmatprep.mubr.f32.mxu0 0.0
    %1189 = vmatmul.mubr.f32.gmra.mxu0 %v1113
    %v1190 = vpop.f32.mrf.mxu0
    %v1191 = vadd.f32 0.0, %v1190
    %v1192 = vpop.f32.mrf.mxu0
    %1193 = vdwg.mxu0
    %1194 = vrot.lane.b32.xlu0 %v204, 112
    %v1195 = vpop.permute.xlu0 %1194
    %1196 = vrot.lane.b32.xlu0 %v209, 112
    %v1197 = vpop.permute.xlu0 %1196
    %1198 = vrot.lane.b32.xlu0 %v204, 80
    %v1199 = vpop.permute.xlu0 %1198
    %1200 = vrot.lane.b32.xlu0 %v209, 80
    %v1201 = vpop.permute.xlu0 %1200
    %v1202 = vsel %vm303, %v1195, 0
    %v1204 = vsel %vm303, %v1197, 0
    %v1206 = vsel %vm303, %v1199, 0
    %v1208 = vsel %vm303, %v1201, 0
    %1210 = vmatprep.subr.mxu0 0.0
    %1211 = vmatpush1.xpose.msra.mxu0 0.0
    %1212 = vmatprep.subr.mxu0 0.0
    %1213 = vmatpush1.xpose.msra.mxu0 0.0
    %1214 = vmatprep.subr.mxu0 0.0
    %1215 = vmatpush1.xpose.msra.mxu0 0.0
    %1216 = vmatprep.subr.mxu0 0.0
    %1217 = vmatpush1.xpose.msra.mxu0 0.0
    %1218 = vmatprep.subr.mxu0 0.0
    %1219 = vmatpush1.xpose.msra.mxu0 0.0
    %1220 = vmatprep.subr.mxu0 0.0
    %1221 = vmatpush1.xpose.msra.mxu0 0.0
    %1222 = vmatprep.subr.mxu0 0.0
    %1223 = vmatpush1.xpose.msra.mxu0 0.0
    %1224 = vmatprep.subr.mxu0 0.0
    %1225 = vmatpush1.xpose.msra.mxu0 0.0
    %1226 = vmatprep.subr.mxu0 0.0
    %1227 = vmatpush1.xpose.msra.mxu0 0.0
    %1228 = vmatprep.subr.mxu0 0.0
    %1229 = vmatpush1.xpose.msra.mxu0 0.0
    %1230 = vmatprep.subr.mxu0 0.0
    %1231 = vmatpush1.xpose.msra.mxu0 0.0
    %1232 = vmatprep.subr.mxu0 0.0
    %1233 = vmatpush1.xpose.msra.mxu0 0.0
    %1234 = vmatprep.subr.mxu0 0.0
    %1235 = vmatpush1.xpose.msra.mxu0 0.0
    %1236 = vmatprep.subr.mxu0 0.0
    %1237 = vmatpush1.xpose.msra.mxu0 0.0
    %1238 = vmatprep.subr.mxu0 0.0
    %1239 = vmatpush1.xpose.msra.mxu0 %v1208
    %1240 = vmatprep.subr.mxu0 0.0
    %1241 = vmatpush1.xpose.msra.mxu0 %v1206
    %1242 = vmatprep.subr.mxu0 0.0
    %1243 = vmatpush2.xpose.msra.mxu0 0.0
    %1244 = vmatprep.subr.mxu0 0.0
    %1245 = vmatpush2.xpose.msra.mxu0 0.0
    %1246 = vmatprep.subr.mxu0 0.0
    %1247 = vmatpush2.xpose.msra.mxu0 0.0
    %1248 = vmatprep.subr.mxu0 0.0
    %1249 = vmatpush2.xpose.msra.mxu0 0.0
    %1250 = vmatprep.subr.mxu0 0.0
    %1251 = vmatpush2.xpose.msra.mxu0 0.0
    %1252 = vmatprep.subr.mxu0 0.0
    %1253 = vmatpush2.xpose.msra.mxu0 0.0
    %1254 = vmatprep.subr.mxu0 0.0
    %1255 = vmatpush2.xpose.msra.mxu0 0.0
    %1256 = vmatprep.subr.mxu0 0.0
    %1257 = vmatpush2.xpose.msra.mxu0 0.0
    %1258 = vmatprep.subr.mxu0 0.0
    %1259 = vmatpush2.xpose.msra.mxu0 0.0
    %1260 = vmatprep.subr.mxu0 0.0
    %1261 = vmatpush2.xpose.msra.mxu0 0.0
    %1262 = vmatprep.subr.mxu0 0.0
    %1263 = vmatpush2.xpose.msra.mxu0 0.0
    %1264 = vmatprep.subr.mxu0 0.0
    %1265 = vmatpush2.xpose.msra.mxu0 0.0
    %1266 = vmatprep.subr.mxu0 0.0
    %1267 = vmatpush2.xpose.msra.mxu0 0.0
    %1268 = vmatprep.subr.mxu0 0.0
    %1269 = vmatpush2.xpose.msra.mxu0 0.0
    %1270 = vmatprep.subr.mxu0 0.0
    %1271 = vmatpush2.xpose.msra.mxu0 0.0
    %1272 = vmatprep.subr.mxu0 0.0
    %1273 = vmatpush2.xpose.msra.mxu0 0.0
    %1274 = vmatprep.mubr.f32.mxu0 0.0
    %1275 = vmatmul.mubr.f32.gmra.mxu0 %v1202
    %v1276 = vpop.f32.mrf.mxu0
    %v1277 = vadd.f32 0.0, %v1276
    %v1278 = vpop.f32.mrf.mxu0
    %1279 = vmatprep.mubr.f32.mxu0 0.0
    %1280 = vmatmul.mubr.f32.gmra.mxu0 %v1204
    %v1281 = vpop.f32.mrf.mxu0
    %v1282 = vadd.f32 0.0, %v1281
    %v1283 = vpop.f32.mrf.mxu0
    %1284 = vdwg.mxu0
    %v1285 = vmul.f32 %v1186, 0.35355338
    %v1286 = vmul.f32 %v1191, 0.35355338
    %v1287 = vmul.f32 %v1277, 0.35355338
    %v1288 = vmul.f32 %v1282, 0.35355338
    %v1289 = vadd.f32 %v1285, %v71
    %v1290 = vadd.f32 %v1286, %v71
    %v1291 = vadd.f32 %v1287, %v71
    %v1292 = vadd.f32 %v1288, %v71
    %v1293 = vsel %vm484, %v1289, -inf
    %1294 = vmax.xlane.f32.xlu0 %v1293
    %v1295 = vpop.xlane.xlu0 %1294
    %v1296 = vsel %vm484, %v1290, -inf
    %1297 = vmax.xlane.f32.xlu0 %v1296
    %v1298 = vpop.xlane.xlu0 %1297
    %v1299 = vsel %vm484, %v1291, -inf
    %1300 = vmax.xlane.f32.xlu0 %v1299
    %v1301 = vpop.xlane.xlu0 %1300
    %v1302 = vsel %vm484, %v1292, -inf
    %1303 = vmax.xlane.f32.xlu0 %v1302
    %v1304 = vpop.xlane.xlu0 %1303
    %v1305 = vsub.f32 %v1289, %v1295
    %v1306 = vsub.f32 %v1290, %v1298
    %v1307 = vsub.f32 %v1291, %v1301
    %v1308 = vsub.f32 %v1292, %v1304
    %v1309 = vmul.f32 %v1305, 1.442695
    %v1310 = vpow.pop %v1309
    %v1311 = vmul.f32 %v1306, 1.442695
    %v1312 = vpow.pop %v1311
    %v1313 = vmul.f32 %v1307, 1.442695
    %v1314 = vpow.pop %v1313
    %v1315 = vmul.f32 %v1308, 1.442695
    %v1316 = vpow.pop %v1315
    %v1317 = vsel %vm484, %v1310, 0.0
    %1318 = vadd.xlane.f32.xlu0 %v1317
    %v1319 = vpop.xlane.xlu0 %1318
    %v1320 = vsel %vm484, %v1312, 0.0
    %1321 = vadd.xlane.f32.xlu0 %v1320
    %v1322 = vpop.xlane.xlu0 %1321
    %v1323 = vsel %vm484, %v1314, 0.0
    %1324 = vadd.xlane.f32.xlu0 %v1323
    %v1325 = vpop.xlane.xlu0 %1324
    %v1326 = vsel %vm484, %v1316, 0.0
    %1327 = vadd.xlane.f32.xlu0 %v1326
    %v1328 = vpop.xlane.xlu0 %1327
    %v1329 = vrcp.pop %v1319
    %v1330 = vrcp.pop %v1322
    %v1331 = vrcp.pop %v1325
    %v1332 = vrcp.pop %v1328
    %v1333 = vmul.f32 %v1310, %v1329
    %v1334 = vmul.f32 %v1312, %v1330
    %v1335 = vmul.f32 %v1314, %v1331
    %v1336 = vmul.f32 %v1316, %v1332
    %1337 = vrot.lane.b32.xlu0 %v279, 64
    %v1338 = vpop.permute.xlu0 %1337
    %1339 = vrot.lane.b32.xlu0 %v284, 64
    %v1340 = vpop.permute.xlu0 %1339
    %v1344 = vsel %vm484, %v1333, 0
    %v1347 = vsel %vm484, %v1334, 0
    %1349 = vmatprep.subr.mxu0 0.0
    %1350 = vmatpush1.msra.mxu0 0.0
    %1351 = vmatprep.subr.mxu0 0.0
    %1352 = vmatpush1.msra.mxu0 0.0
    %1353 = vmatprep.subr.mxu0 0.0
    %1354 = vmatpush1.msra.mxu0 0.0
    %1355 = vmatprep.subr.mxu0 0.0
    %1356 = vmatpush1.msra.mxu0 0.0
    %1357 = vmatprep.subr.mxu0 0.0
    %1358 = vmatpush1.msra.mxu0 0.0
    %1359 = vmatprep.subr.mxu0 0.0
    %1360 = vmatpush1.msra.mxu0 0.0
    %1361 = vmatprep.subr.mxu0 0.0
    %1362 = vmatpush1.msra.mxu0 0.0
    %1363 = vmatprep.subr.mxu0 0.0
    %1364 = vmatpush1.msra.mxu0 0.0
    %1365 = vmatprep.subr.mxu0 0.0
    %1366 = vmatpush1.msra.mxu0 0.0
    %1367 = vmatprep.subr.mxu0 0.0
    %1368 = vmatpush1.msra.mxu0 0.0
    %1369 = vmatprep.subr.mxu0 0.0
    %1370 = vmatpush1.msra.mxu0 0.0
    %1371 = vmatprep.subr.mxu0 0.0
    %1372 = vmatpush1.msra.mxu0 0.0
    %1373 = vmatprep.subr.mxu0 0.0
    %1374 = vmatpush1.msra.mxu0 0.0
    %1375 = vmatprep.subr.mxu0 0.0
    %1376 = vmatpush1.msra.mxu0 0.0
    %1377 = vmatprep.subr.mxu0 0.0
    %1378 = vmatpush1.msra.mxu0 %v1340
    %1379 = vmatprep.subr.mxu0 0.0
    %1380 = vmatpush1.msra.mxu0 %v1338
    %1381 = vmatprep.subr.mxu0 0.0
    %1382 = vmatpush2.msra.mxu0 0.0
    %1383 = vmatprep.subr.mxu0 0.0
    %1384 = vmatpush2.msra.mxu0 0.0
    %1385 = vmatprep.subr.mxu0 0.0
    %1386 = vmatpush2.msra.mxu0 0.0
    %1387 = vmatprep.subr.mxu0 0.0
    %1388 = vmatpush2.msra.mxu0 0.0
    %1389 = vmatprep.subr.mxu0 0.0
    %1390 = vmatpush2.msra.mxu0 0.0
    %1391 = vmatprep.subr.mxu0 0.0
    %1392 = vmatpush2.msra.mxu0 0.0
    %1393 = vmatprep.subr.mxu0 0.0
    %1394 = vmatpush2.msra.mxu0 0.0
    %1395 = vmatprep.subr.mxu0 0.0
    %1396 = vmatpush2.msra.mxu0 0.0
    %1397 = vmatprep.subr.mxu0 0.0
    %1398 = vmatpush2.msra.mxu0 0.0
    %1399 = vmatprep.subr.mxu0 0.0
    %1400 = vmatpush2.msra.mxu0 0.0
    %1401 = vmatprep.subr.mxu0 0.0
    %1402 = vmatpush2.msra.mxu0 0.0
    %1403 = vmatprep.subr.mxu0 0.0
    %1404 = vmatpush2.msra.mxu0 0.0
    %1405 = vmatprep.subr.mxu0 0.0
    %1406 = vmatpush2.msra.mxu0 0.0
    %1407 = vmatprep.subr.mxu0 0.0
    %1408 = vmatpush2.msra.mxu0 0.0
    %1409 = vmatprep.subr.mxu0 0.0
    %1410 = vmatpush2.msra.mxu0 0.0
    %1411 = vmatprep.subr.mxu0 0.0
    %1412 = vmatpush2.msra.mxu0 0.0
    %1413 = vmatprep.mubr.f32.mxu0 0.0
    %1414 = vmatmul.mubr.f32.gmra.mxu0 %v1344
    %v1415 = vpop.f32.mrf.mxu0
    %v1416 = vadd.f32 0.0, %v1415
    %v1417 = vpop.f32.mrf.mxu0
    %1418 = vmatprep.mubr.f32.mxu0 0.0
    %1419 = vmatmul.mubr.f32.gmra.mxu0 %v1347
    %v1420 = vpop.f32.mrf.mxu0
    %v1421 = vadd.f32 0.0, %v1420
    %v1422 = vpop.f32.mrf.mxu0
    %1423 = vdwg.mxu0
    %1424 = vrot.lane.b32.xlu0 %v289, 64
    %v1425 = vpop.permute.xlu0 %1424
    %1426 = vrot.lane.b32.xlu0 %v294, 64
    %v1427 = vpop.permute.xlu0 %1426
    %v1431 = vsel %vm484, %v1335, 0
    %v1434 = vsel %vm484, %v1336, 0
    %1436 = vmatprep.subr.mxu0 0.0
    %1437 = vmatpush1.msra.mxu0 0.0
    %1438 = vmatprep.subr.mxu0 0.0
    %1439 = vmatpush1.msra.mxu0 0.0
    %1440 = vmatprep.subr.mxu0 0.0
    %1441 = vmatpush1.msra.mxu0 0.0
    %1442 = vmatprep.subr.mxu0 0.0
    %1443 = vmatpush1.msra.mxu0 0.0
    %1444 = vmatprep.subr.mxu0 0.0
    %1445 = vmatpush1.msra.mxu0 0.0
    %1446 = vmatprep.subr.mxu0 0.0
    %1447 = vmatpush1.msra.mxu0 0.0
    %1448 = vmatprep.subr.mxu0 0.0
    %1449 = vmatpush1.msra.mxu0 0.0
    %1450 = vmatprep.subr.mxu0 0.0
    %1451 = vmatpush1.msra.mxu0 0.0
    %1452 = vmatprep.subr.mxu0 0.0
    %1453 = vmatpush1.msra.mxu0 0.0
    %1454 = vmatprep.subr.mxu0 0.0
    %1455 = vmatpush1.msra.mxu0 0.0
    %1456 = vmatprep.subr.mxu0 0.0
    %1457 = vmatpush1.msra.mxu0 0.0
    %1458 = vmatprep.subr.mxu0 0.0
    %1459 = vmatpush1.msra.mxu0 0.0
    %1460 = vmatprep.subr.mxu0 0.0
    %1461 = vmatpush1.msra.mxu0 0.0
    %1462 = vmatprep.subr.mxu0 0.0
    %1463 = vmatpush1.msra.mxu0 0.0
    %1464 = vmatprep.subr.mxu0 0.0
    %1465 = vmatpush1.msra.mxu0 %v1427
    %1466 = vmatprep.subr.mxu0 0.0
    %1467 = vmatpush1.msra.mxu0 %v1425
    %1468 = vmatprep.subr.mxu0 0.0
    %1469 = vmatpush2.msra.mxu0 0.0
    %1470 = vmatprep.subr.mxu0 0.0
    %1471 = vmatpush2.msra.mxu0 0.0
    %1472 = vmatprep.subr.mxu0 0.0
    %1473 = vmatpush2.msra.mxu0 0.0
    %1474 = vmatprep.subr.mxu0 0.0
    %1475 = vmatpush2.msra.mxu0 0.0
    %1476 = vmatprep.subr.mxu0 0.0
    %1477 = vmatpush2.msra.mxu0 0.0
    %1478 = vmatprep.subr.mxu0 0.0
    %1479 = vmatpush2.msra.mxu0 0.0
    %1480 = vmatprep.subr.mxu0 0.0
    %1481 = vmatpush2.msra.mxu0 0.0
    %1482 = vmatprep.subr.mxu0 0.0
    %1483 = vmatpush2.msra.mxu0 0.0
    %1484 = vmatprep.subr.mxu0 0.0
    %1485 = vmatpush2.msra.mxu0 0.0
    %1486 = vmatprep.subr.mxu0 0.0
    %1487 = vmatpush2.msra.mxu0 0.0
    %1488 = vmatprep.subr.mxu0 0.0
    %1489 = vmatpush2.msra.mxu0 0.0
    %1490 = vmatprep.subr.mxu0 0.0
    %1491 = vmatpush2.msra.mxu0 0.0
    %1492 = vmatprep.subr.mxu0 0.0
    %1493 = vmatpush2.msra.mxu0 0.0
    %1494 = vmatprep.subr.mxu0 0.0
    %1495 = vmatpush2.msra.mxu0 0.0
    %1496 = vmatprep.subr.mxu0 0.0
    %1497 = vmatpush2.msra.mxu0 0.0
    %1498 = vmatprep.subr.mxu0 0.0
    %1499 = vmatpush2.msra.mxu0 0.0
    %1500 = vmatprep.mubr.f32.mxu0 0.0
    %1501 = vmatmul.mubr.f32.gmra.mxu0 %v1431
    %v1502 = vpop.f32.mrf.mxu0
    %v1503 = vadd.f32 0.0, %v1502
    %v1504 = vpop.f32.mrf.mxu0
    %1505 = vmatprep.mubr.f32.mxu0 0.0
    %1506 = vmatmul.mubr.f32.gmra.mxu0 %v1434
    %v1507 = vpop.f32.mrf.mxu0
    %v1508 = vadd.f32 0.0, %v1507
    %v1509 = vpop.f32.mrf.mxu0
    %1510 = vdwg.mxu0
    %v1511 = vadd.f32 %v1014, %v1416
    %v1512 = vadd.f32 %v1019, %v1421
    %v1513 = vadd.f32 %v1095, %v1503
    %v1514 = vadd.f32 %v1100, %v1508
    %1515 = vrot.lane.b32.xlu0 %v194, 104
    %v1516 = vpop.permute.xlu0 %1515
    %1517 = vrot.lane.b32.xlu0 %v199, 104
    %v1518 = vpop.permute.xlu0 %1517
    %1519 = vrot.lane.b32.xlu0 %v194, 72
    %v1520 = vpop.permute.xlu0 %1519
    %1521 = vrot.lane.b32.xlu0 %v199, 72
    %v1522 = vpop.permute.xlu0 %1521
    %v1523 = vsel %vm303, %v1516, 0
    %v1525 = vsel %vm303, %v1518, 0
    %v1527 = vsel %vm303, %v1520, 0
    %v1529 = vsel %vm303, %v1522, 0
    %1531 = vmatprep.subr.mxu0 0.0
    %1532 = vmatpush1.xpose.msra.mxu0 0.0
    %1533 = vmatprep.subr.mxu0 0.0
    %1534 = vmatpush1.xpose.msra.mxu0 0.0
    %1535 = vmatprep.subr.mxu0 0.0
    %1536 = vmatpush1.xpose.msra.mxu0 0.0
    %1537 = vmatprep.subr.mxu0 0.0
    %1538 = vmatpush1.xpose.msra.mxu0 0.0
    %1539 = vmatprep.subr.mxu0 0.0
    %1540 = vmatpush1.xpose.msra.mxu0 0.0
    %1541 = vmatprep.subr.mxu0 0.0
    %1542 = vmatpush1.xpose.msra.mxu0 0.0
    %1543 = vmatprep.subr.mxu0 0.0
    %1544 = vmatpush1.xpose.msra.mxu0 0.0
    %1545 = vmatprep.subr.mxu0 0.0
    %1546 = vmatpush1.xpose.msra.mxu0 0.0
    %1547 = vmatprep.subr.mxu0 0.0
    %1548 = vmatpush1.xpose.msra.mxu0 0.0
    %1549 = vmatprep.subr.mxu0 0.0
    %1550 = vmatpush1.xpose.msra.mxu0 0.0
    %1551 = vmatprep.subr.mxu0 0.0
    %1552 = vmatpush1.xpose.msra.mxu0 0.0
    %1553 = vmatprep.subr.mxu0 0.0
    %1554 = vmatpush1.xpose.msra.mxu0 0.0
    %1555 = vmatprep.subr.mxu0 0.0
    %1556 = vmatpush1.xpose.msra.mxu0 0.0
    %1557 = vmatprep.subr.mxu0 0.0
    %1558 = vmatpush1.xpose.msra.mxu0 0.0
    %1559 = vmatprep.subr.mxu0 0.0
    %1560 = vmatpush1.xpose.msra.mxu0 %v1529
    %1561 = vmatprep.subr.mxu0 0.0
    %1562 = vmatpush1.xpose.msra.mxu0 %v1527
    %1563 = vmatprep.subr.mxu0 0.0
    %1564 = vmatpush2.xpose.msra.mxu0 0.0
    %1565 = vmatprep.subr.mxu0 0.0
    %1566 = vmatpush2.xpose.msra.mxu0 0.0
    %1567 = vmatprep.subr.mxu0 0.0
    %1568 = vmatpush2.xpose.msra.mxu0 0.0
    %1569 = vmatprep.subr.mxu0 0.0
    %1570 = vmatpush2.xpose.msra.mxu0 0.0
    %1571 = vmatprep.subr.mxu0 0.0
    %1572 = vmatpush2.xpose.msra.mxu0 0.0
    %1573 = vmatprep.subr.mxu0 0.0
    %1574 = vmatpush2.xpose.msra.mxu0 0.0
    %1575 = vmatprep.subr.mxu0 0.0
    %1576 = vmatpush2.xpose.msra.mxu0 0.0
    %1577 = vmatprep.subr.mxu0 0.0
    %1578 = vmatpush2.xpose.msra.mxu0 0.0
    %1579 = vmatprep.subr.mxu0 0.0
    %1580 = vmatpush2.xpose.msra.mxu0 0.0
    %1581 = vmatprep.subr.mxu0 0.0
    %1582 = vmatpush2.xpose.msra.mxu0 0.0
    %1583 = vmatprep.subr.mxu0 0.0
    %1584 = vmatpush2.xpose.msra.mxu0 0.0
    %1585 = vmatprep.subr.mxu0 0.0
    %1586 = vmatpush2.xpose.msra.mxu0 0.0
    %1587 = vmatprep.subr.mxu0 0.0
    %1588 = vmatpush2.xpose.msra.mxu0 0.0
    %1589 = vmatprep.subr.mxu0 0.0
    %1590 = vmatpush2.xpose.msra.mxu0 0.0
    %1591 = vmatprep.subr.mxu0 0.0
    %1592 = vmatpush2.xpose.msra.mxu0 0.0
    %1593 = vmatprep.subr.mxu0 0.0
    %1594 = vmatpush2.xpose.msra.mxu0 0.0
    %1595 = vmatprep.mubr.f32.mxu0 0.0
    %1596 = vmatmul.mubr.f32.gmra.mxu0 %v1523
    %v1597 = vpop.f32.mrf.mxu0
    %v1598 = vadd.f32 0.0, %v1597
    %v1599 = vpop.f32.mrf.mxu0
    %1600 = vmatprep.mubr.f32.mxu0 0.0
    %1601 = vmatmul.mubr.f32.gmra.mxu0 %v1525
    %v1602 = vpop.f32.mrf.mxu0
    %v1603 = vadd.f32 0.0, %v1602
    %v1604 = vpop.f32.mrf.mxu0
    %1605 = vdwg.mxu0
    %1606 = vrot.lane.b32.xlu0 %v204, 104
    %v1607 = vpop.permute.xlu0 %1606
    %1608 = vrot.lane.b32.xlu0 %v209, 104
    %v1609 = vpop.permute.xlu0 %1608
    %1610 = vrot.lane.b32.xlu0 %v204, 72
    %v1611 = vpop.permute.xlu0 %1610
    %1612 = vrot.lane.b32.xlu0 %v209, 72
    %v1613 = vpop.permute.xlu0 %1612
    %v1614 = vsel %vm303, %v1607, 0
    %v1616 = vsel %vm303, %v1609, 0
    %v1618 = vsel %vm303, %v1611, 0
    %v1620 = vsel %vm303, %v1613, 0
    %1622 = vmatprep.subr.mxu0 0.0
    %1623 = vmatpush1.xpose.msra.mxu0 0.0
    %1624 = vmatprep.subr.mxu0 0.0
    %1625 = vmatpush1.xpose.msra.mxu0 0.0
    %1626 = vmatprep.subr.mxu0 0.0
    %1627 = vmatpush1.xpose.msra.mxu0 0.0
    %1628 = vmatprep.subr.mxu0 0.0
    %1629 = vmatpush1.xpose.msra.mxu0 0.0
    %1630 = vmatprep.subr.mxu0 0.0
    %1631 = vmatpush1.xpose.msra.mxu0 0.0
    %1632 = vmatprep.subr.mxu0 0.0
    %1633 = vmatpush1.xpose.msra.mxu0 0.0
    %1634 = vmatprep.subr.mxu0 0.0
    %1635 = vmatpush1.xpose.msra.mxu0 0.0
    %1636 = vmatprep.subr.mxu0 0.0
    %1637 = vmatpush1.xpose.msra.mxu0 0.0
    %1638 = vmatprep.subr.mxu0 0.0
    %1639 = vmatpush1.xpose.msra.mxu0 0.0
    %1640 = vmatprep.subr.mxu0 0.0
    %1641 = vmatpush1.xpose.msra.mxu0 0.0
    %1642 = vmatprep.subr.mxu0 0.0
    %1643 = vmatpush1.xpose.msra.mxu0 0.0
    %1644 = vmatprep.subr.mxu0 0.0
    %1645 = vmatpush1.xpose.msra.mxu0 0.0
    %1646 = vmatprep.subr.mxu0 0.0
    %1647 = vmatpush1.xpose.msra.mxu0 0.0
    %1648 = vmatprep.subr.mxu0 0.0
    %1649 = vmatpush1.xpose.msra.mxu0 0.0
    %1650 = vmatprep.subr.mxu0 0.0
    %1651 = vmatpush1.xpose.msra.mxu0 %v1620
    %1652 = vmatprep.subr.mxu0 0.0
    %1653 = vmatpush1.xpose.msra.mxu0 %v1618
    %1654 = vmatprep.subr.mxu0 0.0
    %1655 = vmatpush2.xpose.msra.mxu0 0.0
    %1656 = vmatprep.subr.mxu0 0.0
    %1657 = vmatpush2.xpose.msra.mxu0 0.0
    %1658 = vmatprep.subr.mxu0 0.0
    %1659 = vmatpush2.xpose.msra.mxu0 0.0
    %1660 = vmatprep.subr.mxu0 0.0
    %1661 = vmatpush2.xpose.msra.mxu0 0.0
    %1662 = vmatprep.subr.mxu0 0.0
    %1663 = vmatpush2.xpose.msra.mxu0 0.0
    %1664 = vmatprep.subr.mxu0 0.0
    %1665 = vmatpush2.xpose.msra.mxu0 0.0
    %1666 = vmatprep.subr.mxu0 0.0
    %1667 = vmatpush2.xpose.msra.mxu0 0.0
    %1668 = vmatprep.subr.mxu0 0.0
    %1669 = vmatpush2.xpose.msra.mxu0 0.0
    %1670 = vmatprep.subr.mxu0 0.0
    %1671 = vmatpush2.xpose.msra.mxu0 0.0
    %1672 = vmatprep.subr.mxu0 0.0
    %1673 = vmatpush2.xpose.msra.mxu0 0.0
    %1674 = vmatprep.subr.mxu0 0.0
    %1675 = vmatpush2.xpose.msra.mxu0 0.0
    %1676 = vmatprep.subr.mxu0 0.0
    %1677 = vmatpush2.xpose.msra.mxu0 0.0
    %1678 = vmatprep.subr.mxu0 0.0
    %1679 = vmatpush2.xpose.msra.mxu0 0.0
    %1680 = vmatprep.subr.mxu0 0.0
    %1681 = vmatpush2.xpose.msra.mxu0 0.0
    %1682 = vmatprep.subr.mxu0 0.0
    %1683 = vmatpush2.xpose.msra.mxu0 0.0
    %1684 = vmatprep.subr.mxu0 0.0
    %1685 = vmatpush2.xpose.msra.mxu0 0.0
    %1686 = vmatprep.mubr.f32.mxu0 0.0
    %1687 = vmatmul.mubr.f32.gmra.mxu0 %v1614
    %v1688 = vpop.f32.mrf.mxu0
    %v1689 = vadd.f32 0.0, %v1688
    %v1690 = vpop.f32.mrf.mxu0
    %1691 = vmatprep.mubr.f32.mxu0 0.0
    %1692 = vmatmul.mubr.f32.gmra.mxu0 %v1616
    %v1693 = vpop.f32.mrf.mxu0
    %v1694 = vadd.f32 0.0, %v1693
    %v1695 = vpop.f32.mrf.mxu0
    %1696 = vdwg.mxu0
    %v1697 = vmul.f32 %v1598, 0.35355338
    %v1698 = vmul.f32 %v1603, 0.35355338
    %v1699 = vmul.f32 %v1689, 0.35355338
    %v1700 = vmul.f32 %v1694, 0.35355338
    %v1701 = vadd.f32 %v1697, %v71
    %v1702 = vadd.f32 %v1698, %v71
    %v1703 = vadd.f32 %v1699, %v71
    %v1704 = vadd.f32 %v1700, %v71
    %v1705 = vsel %vm484, %v1701, -inf
    %1706 = vmax.xlane.f32.xlu0 %v1705
    %v1707 = vpop.xlane.xlu0 %1706
    %v1708 = vsel %vm484, %v1702, -inf
    %1709 = vmax.xlane.f32.xlu0 %v1708
    %v1710 = vpop.xlane.xlu0 %1709
    %v1711 = vsel %vm484, %v1703, -inf
    %1712 = vmax.xlane.f32.xlu0 %v1711
    %v1713 = vpop.xlane.xlu0 %1712
    %v1714 = vsel %vm484, %v1704, -inf
    %1715 = vmax.xlane.f32.xlu0 %v1714
    %v1716 = vpop.xlane.xlu0 %1715
    %v1717 = vsub.f32 %v1701, %v1707
    %v1718 = vsub.f32 %v1702, %v1710
    %v1719 = vsub.f32 %v1703, %v1713
    %v1720 = vsub.f32 %v1704, %v1716
    %v1721 = vmul.f32 %v1717, 1.442695
    %v1722 = vpow.pop %v1721
    %v1723 = vmul.f32 %v1718, 1.442695
    %v1724 = vpow.pop %v1723
    %v1725 = vmul.f32 %v1719, 1.442695
    %v1726 = vpow.pop %v1725
    %v1727 = vmul.f32 %v1720, 1.442695
    %v1728 = vpow.pop %v1727
    %v1729 = vsel %vm484, %v1722, 0.0
    %1730 = vadd.xlane.f32.xlu0 %v1729
    %v1731 = vpop.xlane.xlu0 %1730
    %v1732 = vsel %vm484, %v1724, 0.0
    %1733 = vadd.xlane.f32.xlu0 %v1732
    %v1734 = vpop.xlane.xlu0 %1733
    %v1735 = vsel %vm484, %v1726, 0.0
    %1736 = vadd.xlane.f32.xlu0 %v1735
    %v1737 = vpop.xlane.xlu0 %1736
    %v1738 = vsel %vm484, %v1728, 0.0
    %1739 = vadd.xlane.f32.xlu0 %v1738
    %v1740 = vpop.xlane.xlu0 %1739
    %v1741 = vrcp.pop %v1731
    %v1742 = vrcp.pop %v1734
    %v1743 = vrcp.pop %v1737
    %v1744 = vrcp.pop %v1740
    %v1745 = vmul.f32 %v1722, %v1741
    %v1746 = vmul.f32 %v1724, %v1742
    %v1747 = vmul.f32 %v1726, %v1743
    %v1748 = vmul.f32 %v1728, %v1744
    %1749 = vrot.lane.b32.xlu0 %v279, 32
    %v1750 = vpop.permute.xlu0 %1749
    %1751 = vrot.lane.b32.xlu0 %v284, 32
    %v1752 = vpop.permute.xlu0 %1751
    %v1756 = vsel %vm484, %v1745, 0
    %v1759 = vsel %vm484, %v1746, 0
    %1761 = vmatprep.subr.mxu0 0.0
    %1762 = vmatpush1.msra.mxu0 0.0
    %1763 = vmatprep.subr.mxu0 0.0
    %1764 = vmatpush1.msra.mxu0 0.0
    %1765 = vmatprep.subr.mxu0 0.0
    %1766 = vmatpush1.msra.mxu0 0.0
    %1767 = vmatprep.subr.mxu0 0.0
    %1768 = vmatpush1.msra.mxu0 0.0
    %1769 = vmatprep.subr.mxu0 0.0
    %1770 = vmatpush1.msra.mxu0 0.0
    %1771 = vmatprep.subr.mxu0 0.0
    %1772 = vmatpush1.msra.mxu0 0.0
    %1773 = vmatprep.subr.mxu0 0.0
    %1774 = vmatpush1.msra.mxu0 0.0
    %1775 = vmatprep.subr.mxu0 0.0
    %1776 = vmatpush1.msra.mxu0 0.0
    %1777 = vmatprep.subr.mxu0 0.0
    %1778 = vmatpush1.msra.mxu0 0.0
    %1779 = vmatprep.subr.mxu0 0.0
    %1780 = vmatpush1.msra.mxu0 0.0
    %1781 = vmatprep.subr.mxu0 0.0
    %1782 = vmatpush1.msra.mxu0 0.0
    %1783 = vmatprep.subr.mxu0 0.0
    %1784 = vmatpush1.msra.mxu0 0.0
    %1785 = vmatprep.subr.mxu0 0.0
    %1786 = vmatpush1.msra.mxu0 0.0
    %1787 = vmatprep.subr.mxu0 0.0
    %1788 = vmatpush1.msra.mxu0 0.0
    %1789 = vmatprep.subr.mxu0 0.0
    %1790 = vmatpush1.msra.mxu0 %v1752
    %1791 = vmatprep.subr.mxu0 0.0
    %1792 = vmatpush1.msra.mxu0 %v1750
    %1793 = vmatprep.subr.mxu0 0.0
    %1794 = vmatpush2.msra.mxu0 0.0
    %1795 = vmatprep.subr.mxu0 0.0
    %1796 = vmatpush2.msra.mxu0 0.0
    %1797 = vmatprep.subr.mxu0 0.0
    %1798 = vmatpush2.msra.mxu0 0.0
    %1799 = vmatprep.subr.mxu0 0.0
    %1800 = vmatpush2.msra.mxu0 0.0
    %1801 = vmatprep.subr.mxu0 0.0
    %1802 = vmatpush2.msra.mxu0 0.0
    %1803 = vmatprep.subr.mxu0 0.0
    %1804 = vmatpush2.msra.mxu0 0.0
    %1805 = vmatprep.subr.mxu0 0.0
    %1806 = vmatpush2.msra.mxu0 0.0
    %1807 = vmatprep.subr.mxu0 0.0
    %1808 = vmatpush2.msra.mxu0 0.0
    %1809 = vmatprep.subr.mxu0 0.0
    %1810 = vmatpush2.msra.mxu0 0.0
    %1811 = vmatprep.subr.mxu0 0.0
    %1812 = vmatpush2.msra.mxu0 0.0
    %1813 = vmatprep.subr.mxu0 0.0
    %1814 = vmatpush2.msra.mxu0 0.0
    %1815 = vmatprep.subr.mxu0 0.0
    %1816 = vmatpush2.msra.mxu0 0.0
    %1817 = vmatprep.subr.mxu0 0.0
    %1818 = vmatpush2.msra.mxu0 0.0
    %1819 = vmatprep.subr.mxu0 0.0
    %1820 = vmatpush2.msra.mxu0 0.0
    %1821 = vmatprep.subr.mxu0 0.0
    %1822 = vmatpush2.msra.mxu0 0.0
    %1823 = vmatprep.subr.mxu0 0.0
    %1824 = vmatpush2.msra.mxu0 0.0
    %1825 = vmatprep.mubr.f32.mxu0 0.0
    %1826 = vmatmul.mubr.f32.gmra.mxu0 %v1756
    %v1827 = vpop.f32.mrf.mxu0
    %v1828 = vadd.f32 0.0, %v1827
    %v1829 = vpop.f32.mrf.mxu0
    %1830 = vmatprep.mubr.f32.mxu0 0.0
    %1831 = vmatmul.mubr.f32.gmra.mxu0 %v1759
    %v1832 = vpop.f32.mrf.mxu0
    %v1833 = vadd.f32 0.0, %v1832
    %v1834 = vpop.f32.mrf.mxu0
    %1835 = vdwg.mxu0
    %1836 = vrot.lane.b32.xlu0 %v289, 32
    %v1837 = vpop.permute.xlu0 %1836
    %1838 = vrot.lane.b32.xlu0 %v294, 32
    %v1839 = vpop.permute.xlu0 %1838
    %v1843 = vsel %vm484, %v1747, 0
    %v1846 = vsel %vm484, %v1748, 0
    %1848 = vmatprep.subr.mxu0 0.0
    %1849 = vmatpush1.msra.mxu0 0.0
    %1850 = vmatprep.subr.mxu0 0.0
    %1851 = vmatpush1.msra.mxu0 0.0
    %1852 = vmatprep.subr.mxu0 0.0
    %1853 = vmatpush1.msra.mxu0 0.0
    %1854 = vmatprep.subr.mxu0 0.0
    %1855 = vmatpush1.msra.mxu0 0.0
    %1856 = vmatprep.subr.mxu0 0.0
    %1857 = vmatpush1.msra.mxu0 0.0
    %1858 = vmatprep.subr.mxu0 0.0
    %1859 = vmatpush1.msra.mxu0 0.0
    %1860 = vmatprep.subr.mxu0 0.0
    %1861 = vmatpush1.msra.mxu0 0.0
    %1862 = vmatprep.subr.mxu0 0.0
    %1863 = vmatpush1.msra.mxu0 0.0
    %1864 = vmatprep.subr.mxu0 0.0
    %1865 = vmatpush1.msra.mxu0 0.0
    %1866 = vmatprep.subr.mxu0 0.0
    %1867 = vmatpush1.msra.mxu0 0.0
    %1868 = vmatprep.subr.mxu0 0.0
    %1869 = vmatpush1.msra.mxu0 0.0
    %1870 = vmatprep.subr.mxu0 0.0
    %1871 = vmatpush1.msra.mxu0 0.0
    %1872 = vmatprep.subr.mxu0 0.0
    %1873 = vmatpush1.msra.mxu0 0.0
    %1874 = vmatprep.subr.mxu0 0.0
    %1875 = vmatpush1.msra.mxu0 0.0
    %1876 = vmatprep.subr.mxu0 0.0
    %1877 = vmatpush1.msra.mxu0 %v1839
    %1878 = vmatprep.subr.mxu0 0.0
    %1879 = vmatpush1.msra.mxu0 %v1837
    %1880 = vmatprep.subr.mxu0 0.0
    %1881 = vmatpush2.msra.mxu0 0.0
    %1882 = vmatprep.subr.mxu0 0.0
    %1883 = vmatpush2.msra.mxu0 0.0
    %1884 = vmatprep.subr.mxu0 0.0
    %1885 = vmatpush2.msra.mxu0 0.0
    %1886 = vmatprep.subr.mxu0 0.0
    %1887 = vmatpush2.msra.mxu0 0.0
    %1888 = vmatprep.subr.mxu0 0.0
    %1889 = vmatpush2.msra.mxu0 0.0
    %1890 = vmatprep.subr.mxu0 0.0
    %1891 = vmatpush2.msra.mxu0 0.0
    %1892 = vmatprep.subr.mxu0 0.0
    %1893 = vmatpush2.msra.mxu0 0.0
    %1894 = vmatprep.subr.mxu0 0.0
    %1895 = vmatpush2.msra.mxu0 0.0
    %1896 = vmatprep.subr.mxu0 0.0
    %1897 = vmatpush2.msra.mxu0 0.0
    %1898 = vmatprep.subr.mxu0 0.0
    %1899 = vmatpush2.msra.mxu0 0.0
    %1900 = vmatprep.subr.mxu0 0.0
    %1901 = vmatpush2.msra.mxu0 0.0
    %1902 = vmatprep.subr.mxu0 0.0
    %1903 = vmatpush2.msra.mxu0 0.0
    %1904 = vmatprep.subr.mxu0 0.0
    %1905 = vmatpush2.msra.mxu0 0.0
    %1906 = vmatprep.subr.mxu0 0.0
    %1907 = vmatpush2.msra.mxu0 0.0
    %1908 = vmatprep.subr.mxu0 0.0
    %1909 = vmatpush2.msra.mxu0 0.0
    %1910 = vmatprep.subr.mxu0 0.0
    %1911 = vmatpush2.msra.mxu0 0.0
    %1912 = vmatprep.mubr.f32.mxu0 0.0
    %1913 = vmatmul.mubr.f32.gmra.mxu0 %v1843
    %v1914 = vpop.f32.mrf.mxu0
    %v1915 = vadd.f32 0.0, %v1914
    %v1916 = vpop.f32.mrf.mxu0
    %1917 = vmatprep.mubr.f32.mxu0 0.0
    %1918 = vmatmul.mubr.f32.gmra.mxu0 %v1846
    %v1919 = vpop.f32.mrf.mxu0
    %v1920 = vadd.f32 0.0, %v1919
    %v1921 = vpop.f32.mrf.mxu0
    %1922 = vdwg.mxu0
    %v1923 = vadd.f32 %v1511, %v1828
    %v1924 = vadd.f32 %v1512, %v1833
    %v1925 = vadd.f32 %v1513, %v1915
    %v1926 = vadd.f32 %v1514, %v1920
    %v1928 = vlaneseq
    %v1929 = vshrl.u32 %v1928, 7
    %v1930 = vsub.s32 0, %v1929
    %v1931 = vrot.slane %v81, %v1930
    %v1933 = vadd.f32 %v1923, %v1931
    %v1934 = vadd.f32 %v1924, %v1931
    %v1935 = vadd.f32 %v1925, %v1931
    %v1936 = vadd.f32 %v1926, %v1931
    %v1937 = vadd.f32 %v64, %v1933
    %v1938 = vadd.f32 %v66, %v1934
    %v1939 = vadd.f32 %v65, %v1935
    %v1940 = vadd.f32 %v67, %v1936
    %v1941 = vsel %vm114, %v1937, 0.0
    %1942 = vadd.xlane.f32.xlu0 %v1941
    %v1943 = vpop.xlane.xlu0 %1942
    %v1944 = vsel %vm114, %v1938, 0.0
    %1945 = vadd.xlane.f32.xlu0 %v1944
    %v1946 = vpop.xlane.xlu0 %1945
    %v1947 = vsel %vm114, %v1939, 0.0
    %1948 = vadd.xlane.f32.xlu0 %v1947
    %v1949 = vpop.xlane.xlu0 %1948
    %v1950 = vsel %vm114, %v1940, 0.0
    %1951 = vadd.xlane.f32.xlu0 %v1950
    %v1952 = vpop.xlane.xlu0 %1951
    %v1953 = vrcp.pop 32.0
    %v1954 = vmul.f32 %v1943, %v1953
    %v1955 = vmul.f32 %v1946, %v1953
    %v1956 = vmul.f32 %v1949, %v1953
    %v1957 = vmul.f32 %v1952, %v1953
    %v1958 = vsub.f32 %v1937, %v1954
    %v1959 = vsub.f32 %v1938, %v1955
    %v1960 = vsub.f32 %v1939, %v1956
    %v1961 = vsub.f32 %v1940, %v1957
    %v1962 = vmul.f32 %v1958, %v1958
    %v1963 = vmul.f32 %v1959, %v1959
    %v1964 = vmul.f32 %v1960, %v1960
    %v1965 = vmul.f32 %v1961, %v1961
    %v1966 = vsel %vm114, %v1962, 0.0
    %1967 = vadd.xlane.f32.xlu0 %v1966
    %v1968 = vpop.xlane.xlu0 %1967
    %v1969 = vsel %vm114, %v1963, 0.0
    %1970 = vadd.xlane.f32.xlu0 %v1969
    %v1971 = vpop.xlane.xlu0 %1970
    %v1972 = vsel %vm114, %v1964, 0.0
    %1973 = vadd.xlane.f32.xlu0 %v1972
    %v1974 = vpop.xlane.xlu0 %1973
    %v1975 = vsel %vm114, %v1965, 0.0
    %1976 = vadd.xlane.f32.xlu0 %v1975
    %v1977 = vpop.xlane.xlu0 %1976
    %v1978 = vmul.f32 %v1968, %v1953
    %v1979 = vmul.f32 %v1971, %v1953
    %v1980 = vmul.f32 %v1974, %v1953
    %v1981 = vmul.f32 %v1977, %v1953
    %v1982 = vadd.f32 %v1978, 1e-05
    %v1983 = vadd.f32 %v1979, 1e-05
    %v1984 = vadd.f32 %v1980, 1e-05
    %v1985 = vadd.f32 %v1981, 1e-05
    %v1986 = vrsqrt.pop %v1982
    %v1987 = vrsqrt.pop %v1983
    %v1988 = vrsqrt.pop %v1984
    %v1989 = vrsqrt.pop %v1985
    %v1990 = vmul.f32 %v1958, %v1986
    %v1991 = vmul.f32 %v1959, %v1987
    %v1992 = vmul.f32 %v1960, %v1988
    %v1993 = vmul.f32 %v1961, %v1989
    %v1995 = vlaneseq
    %v1996 = vshrl.u32 %v1995, 7
    %v1997 = vsub.s32 0, %v1996
    %v1998 = vrot.slane %v82, %v1997
    %v2000 = vmul.f32 %v1990, %v1998
    %v2001 = vmul.f32 %v1991, %v1998
    %v2002 = vmul.f32 %v1992, %v1998
    %v2003 = vmul.f32 %v1993, %v1998
    %v2005 = vlaneseq
    %v2006 = vshrl.u32 %v2005, 7
    %v2007 = vsub.s32 0, %v2006
    %v2008 = vrot.slane %v83, %v2007
    %v2010 = vadd.f32 %v2000, %v2008
    %v2011 = vadd.f32 %v2001, %v2008
    %v2012 = vadd.f32 %v2002, %v2008
    %v2013 = vadd.f32 %v2003, %v2008
    %v2015 = vlaneseq
    %v2016 = vshrl.u32 %v2015, 7
    %v2017 = vsub.s32 0, %v2016
    %v2018 = vrot.slane %v88, %v2017
    %v2021 = vsel %vm114, %v2010, 0
    %v2024 = vsel %vm114, %v2011, 0
    %v2027 = vsel %vm114, %v2012, 0
    %v2030 = vsel %vm114, %v2013, 0
    %2032 = vmatprep.subr.mxu0 0.0
    %2033 = vmatpush1.msra.mxu0 0.0
    %2034 = vmatprep.subr.mxu0 0.0
    %2035 = vmatpush1.msra.mxu0 0.0
    %2036 = vmatprep.subr.mxu0 0.0
    %2037 = vmatpush1.msra.mxu0 0.0
    %2038 = vmatprep.subr.mxu0 0.0
    %2039 = vmatpush1.msra.mxu0 0.0
    %2040 = vmatprep.subr.mxu0 0.0
    %2041 = vmatpush1.msra.mxu0 0.0
    %2042 = vmatprep.subr.mxu0 0.0
    %2043 = vmatpush1.msra.mxu0 0.0
    %2044 = vmatprep.subr.mxu0 0.0
    %2045 = vmatpush1.msra.mxu0 0.0
    %2046 = vmatprep.subr.mxu0 0.0
    %2047 = vmatpush1.msra.mxu0 0.0
    %2048 = vmatprep.subr.mxu0 0.0
    %2049 = vmatpush1.msra.mxu0 0.0
    %2050 = vmatprep.subr.mxu0 0.0
    %2051 = vmatpush1.msra.mxu0 0.0
    %2052 = vmatprep.subr.mxu0 0.0
    %2053 = vmatpush1.msra.mxu0 0.0
    %2054 = vmatprep.subr.mxu0 0.0
    %2055 = vmatpush1.msra.mxu0 0.0
    %2056 = vmatprep.subr.mxu0 0.0
    %2057 = vmatpush1.msra.mxu0 %v87
    %2058 = vmatprep.subr.mxu0 0.0
    %2059 = vmatpush1.msra.mxu0 %v86
    %2060 = vmatprep.subr.mxu0 0.0
    %2061 = vmatpush1.msra.mxu0 %v85
    %2062 = vmatprep.subr.mxu0 0.0
    %2063 = vmatpush1.msra.mxu0 %v84
    %2064 = vmatprep.subr.mxu0 0.0
    %2065 = vmatpush2.msra.mxu0 0.0
    %2066 = vmatprep.subr.mxu0 0.0
    %2067 = vmatpush2.msra.mxu0 0.0
    %2068 = vmatprep.subr.mxu0 0.0
    %2069 = vmatpush2.msra.mxu0 0.0
    %2070 = vmatprep.subr.mxu0 0.0
    %2071 = vmatpush2.msra.mxu0 0.0
    %2072 = vmatprep.subr.mxu0 0.0
    %2073 = vmatpush2.msra.mxu0 0.0
    %2074 = vmatprep.subr.mxu0 0.0
    %2075 = vmatpush2.msra.mxu0 0.0
    %2076 = vmatprep.subr.mxu0 0.0
    %2077 = vmatpush2.msra.mxu0 0.0
    %2078 = vmatprep.subr.mxu0 0.0
    %2079 = vmatpush2.msra.mxu0 0.0
    %2080 = vmatprep.subr.mxu0 0.0
    %2081 = vmatpush2.msra.mxu0 0.0
    %2082 = vmatprep.subr.mxu0 0.0
    %2083 = vmatpush2.msra.mxu0 0.0
    %2084 = vmatprep.subr.mxu0 0.0
    %2085 = vmatpush2.msra.mxu0 0.0
    %2086 = vmatprep.subr.mxu0 0.0
    %2087 = vmatpush2.msra.mxu0 0.0
    %2088 = vmatprep.subr.mxu0 0.0
    %2089 = vmatpush2.msra.mxu0 0.0
    %2090 = vmatprep.subr.mxu0 0.0
    %2091 = vmatpush2.msra.mxu0 0.0
    %2092 = vmatprep.subr.mxu0 0.0
    %2093 = vmatpush2.msra.mxu0 0.0
    %2094 = vmatprep.subr.mxu0 0.0
    %2095 = vmatpush2.msra.mxu0 0.0
    %2096 = vmatprep.mubr.f32.mxu0 0.0
    %2097 = vmatmul.mubr.f32.gmra.mxu0 %v2021
    %v2098 = vpop.f32.mrf.mxu0
    %v2099 = vadd.f32 %v2018, %v2098
    %v2100 = vpop.f32.mrf.mxu0
    %2101 = vmatprep.mubr.f32.mxu0 0.0
    %2102 = vmatmul.mubr.f32.gmra.mxu0 %v2024
    %v2103 = vpop.f32.mrf.mxu0
    %v2104 = vadd.f32 %v2018, %v2103
    %v2105 = vpop.f32.mrf.mxu0
    %2106 = vmatprep.mubr.f32.mxu0 0.0
    %2107 = vmatmul.mubr.f32.gmra.mxu0 %v2027
    %v2108 = vpop.f32.mrf.mxu0
    %v2109 = vadd.f32 %v2018, %v2108
    %v2110 = vpop.f32.mrf.mxu0
    %2111 = vmatprep.mubr.f32.mxu0 0.0
    %2112 = vmatmul.mubr.f32.gmra.mxu0 %v2030
    %v2113 = vpop.f32.mrf.mxu0
    %v2114 = vadd.f32 %v2018, %v2113
    %v2115 = vpop.f32.mrf.mxu0
    %2116 = vdwg.mxu0
    %v2117 = vmax.f32 %v2099, 0.0
    %v2118 = vmax.f32 %v2104, 0.0
    %v2119 = vmax.f32 %v2109, 0.0
    %v2120 = vmax.f32 %v2114, 0.0
    %v2122 = vlaneseq
    %v2123 = vshrl.u32 %v2122, 7
    %v2124 = vsub.s32 0, %v2123
    %v2125 = vrot.slane %v105, %v2124
    %2127 = vmatprep.subr.mxu0 0.0
    %2128 = vmatpush1.msra.mxu0 %v104
    %2129 = vmatprep.subr.mxu0 0.0
    %2130 = vmatpush1.msra.mxu0 %v103
    %2131 = vmatprep.subr.mxu0 0.0
    %2132 = vmatpush1.msra.mxu0 %v102
    %2133 = vmatprep.subr.mxu0 0.0
    %2134 = vmatpush1.msra.mxu0 %v101
    %2135 = vmatprep.subr.mxu0 0.0
    %2136 = vmatpush1.msra.mxu0 %v100
    %2137 = vmatprep.subr.mxu0 0.0
    %2138 = vmatpush1.msra.mxu0 %v99
    %2139 = vmatprep.subr.mxu0 0.0
    %2140 = vmatpush1.msra.mxu0 %v98
    %2141 = vmatprep.subr.mxu0 0.0
    %2142 = vmatpush1.msra.mxu0 %v97
    %2143 = vmatprep.subr.mxu0 0.0
    %2144 = vmatpush1.msra.mxu0 %v96
    %2145 = vmatprep.subr.mxu0 0.0
    %2146 = vmatpush1.msra.mxu0 %v95
    %2147 = vmatprep.subr.mxu0 0.0
    %2148 = vmatpush1.msra.mxu0 %v94
    %2149 = vmatprep.subr.mxu0 0.0
    %2150 = vmatpush1.msra.mxu0 %v93
    %2151 = vmatprep.subr.mxu0 0.0
    %2152 = vmatpush1.msra.mxu0 %v92
    %2153 = vmatprep.subr.mxu0 0.0
    %2154 = vmatpush1.msra.mxu0 %v91
    %2155 = vmatprep.subr.mxu0 0.0
    %2156 = vmatpush1.msra.mxu0 %v90
    %2157 = vmatprep.subr.mxu0 0.0
    %2158 = vmatpush1.msra.mxu0 %v89
    %2159 = vmatprep.subr.mxu0 0.0
    %2160 = vmatpush2.msra.mxu0 0.0
    %2161 = vmatprep.subr.mxu0 0.0
    %2162 = vmatpush2.msra.mxu0 0.0
    %2163 = vmatprep.subr.mxu0 0.0
    %2164 = vmatpush2.msra.mxu0 0.0
    %2165 = vmatprep.subr.mxu0 0.0
    %2166 = vmatpush2.msra.mxu0 0.0
    %2167 = vmatprep.subr.mxu0 0.0
    %2168 = vmatpush2.msra.mxu0 0.0
    %2169 = vmatprep.subr.mxu0 0.0
    %2170 = vmatpush2.msra.mxu0 0.0
    %2171 = vmatprep.subr.mxu0 0.0
    %2172 = vmatpush2.msra.mxu0 0.0
    %2173 = vmatprep.subr.mxu0 0.0
    %2174 = vmatpush2.msra.mxu0 0.0
    %2175 = vmatprep.subr.mxu0 0.0
    %2176 = vmatpush2.msra.mxu0 0.0
    %2177 = vmatprep.subr.mxu0 0.0
    %2178 = vmatpush2.msra.mxu0 0.0
    %2179 = vmatprep.subr.mxu0 0.0
    %2180 = vmatpush2.msra.mxu0 0.0
    %2181 = vmatprep.subr.mxu0 0.0
    %2182 = vmatpush2.msra.mxu0 0.0
    %2183 = vmatprep.subr.mxu0 0.0
    %2184 = vmatpush2.msra.mxu0 0.0
    %2185 = vmatprep.subr.mxu0 0.0
    %2186 = vmatpush2.msra.mxu0 0.0
    %2187 = vmatprep.subr.mxu0 0.0
    %2188 = vmatpush2.msra.mxu0 0.0
    %2189 = vmatprep.subr.mxu0 0.0
    %2190 = vmatpush2.msra.mxu0 0.0
    %2191 = vmatprep.mubr.f32.mxu0 0.0
    %2192 = vmatmul.mubr.f32.gmra.mxu0 %v2117
    %v2193 = vpop.f32.mrf.mxu0
    %v2194 = vadd.f32 %v2125, %v2193
    %v2195 = vpop.f32.mrf.mxu0
    %2196 = vmatprep.mubr.f32.mxu0 0.0
    %2197 = vmatmul.mubr.f32.gmra.mxu0 %v2118
    %v2198 = vpop.f32.mrf.mxu0
    %v2199 = vadd.f32 %v2125, %v2198
    %v2200 = vpop.f32.mrf.mxu0
    %2201 = vmatprep.mubr.f32.mxu0 0.0
    %2202 = vmatmul.mubr.f32.gmra.mxu0 %v2119
    %v2203 = vpop.f32.mrf.mxu0
    %v2204 = vadd.f32 %v2125, %v2203
    %v2205 = vpop.f32.mrf.mxu0
    %2206 = vmatprep.mubr.f32.mxu0 0.0
    %2207 = vmatmul.mubr.f32.gmra.mxu0 %v2120
    %v2208 = vpop.f32.mrf.mxu0
    %v2209 = vadd.f32 %v2125, %v2208
    %v2210 = vpop.f32.mrf.mxu0
    %2211 = vdwg.mxu0
    %v2212 = vadd.f32 %v2010, %v2194
    %v2213 = vadd.f32 %v2011, %v2199
    %v2214 = vadd.f32 %v2012, %v2204
    %v2215 = vadd.f32 %v2013, %v2209
    %v2216 = vsel %vm114, %v2212, 0.0
    %2217 = vadd.xlane.f32.xlu0 %v2216
    %v2218 = vpop.xlane.xlu0 %2217
    %v2219 = vsel %vm114, %v2213, 0.0
    %2220 = vadd.xlane.f32.xlu0 %v2219
    %v2221 = vpop.xlane.xlu0 %2220
    %v2222 = vsel %vm114, %v2214, 0.0
    %2223 = vadd.xlane.f32.xlu0 %v2222
    %v2224 = vpop.xlane.xlu0 %2223
    %v2225 = vsel %vm114, %v2215, 0.0
    %2226 = vadd.xlane.f32.xlu0 %v2225
    %v2227 = vpop.xlane.xlu0 %2226
    %v2228 = vmul.f32 %v2218, %v1953
    %v2229 = vmul.f32 %v2221, %v1953
    %v2230 = vmul.f32 %v2224, %v1953
    %v2231 = vmul.f32 %v2227, %v1953
    %v2232 = vsub.f32 %v2212, %v2228
    %v2233 = vsub.f32 %v2213, %v2229
    %v2234 = vsub.f32 %v2214, %v2230
    %v2235 = vsub.f32 %v2215, %v2231
    %v2236 = vmul.f32 %v2232, %v2232
    %v2237 = vmul.f32 %v2233, %v2233
    %v2238 = vmul.f32 %v2234, %v2234
    %v2239 = vmul.f32 %v2235, %v2235
    %v2240 = vsel %vm114, %v2236, 0.0
    %2241 = vadd.xlane.f32.xlu0 %v2240
    %v2242 = vpop.xlane.xlu0 %2241
    %v2243 = vsel %vm114, %v2237, 0.0
    %2244 = vadd.xlane.f32.xlu0 %v2243
    %v2245 = vpop.xlane.xlu0 %2244
    %v2246 = vsel %vm114, %v2238, 0.0
    %2247 = vadd.xlane.f32.xlu0 %v2246
    %v2248 = vpop.xlane.xlu0 %2247
    %v2249 = vsel %vm114, %v2239, 0.0
    %2250 = vadd.xlane.f32.xlu0 %v2249
    %v2251 = vpop.xlane.xlu0 %2250
    %v2252 = vmul.f32 %v2242, %v1953
    %v2253 = vmul.f32 %v2245, %v1953
    %v2254 = vmul.f32 %v2248, %v1953
    %v2255 = vmul.f32 %v2251, %v1953
    %v2256 = vadd.f32 %v2252, 1e-05
    %v2257 = vadd.f32 %v2253, 1e-05
    %v2258 = vadd.f32 %v2254, 1e-05
    %v2259 = vadd.f32 %v2255, 1e-05
    %v2260 = vrsqrt.pop %v2256
    %v2261 = vrsqrt.pop %v2257
    %v2262 = vrsqrt.pop %v2258
    %v2263 = vrsqrt.pop %v2259
    %v2264 = vmul.f32 %v2232, %v2260
    %v2265 = vmul.f32 %v2233, %v2261
    %v2266 = vmul.f32 %v2234, %v2262
    %v2267 = vmul.f32 %v2235, %v2263
    %v2269 = vlaneseq
    %v2270 = vshrl.u32 %v2269, 7
    %v2271 = vsub.s32 0, %v2270
    %v2272 = vrot.slane %v106, %v2271
    %v2274 = vmul.f32 %v2264, %v2272
    %v2275 = vmul.f32 %v2265, %v2272
    %v2276 = vmul.f32 %v2266, %v2272
    %v2277 = vmul.f32 %v2267, %v2272
    %v2279 = vlaneseq
    %v2280 = vshrl.u32 %v2279, 7
    %v2281 = vsub.s32 0, %v2280
    %v2282 = vrot.slane %v107, %v2281
    %v2284 = vadd.f32 %v2274, %v2282
    %v2285 = vadd.f32 %v2275, %v2282
    %v2286 = vadd.f32 %v2276, %v2282
    %v2287 = vadd.f32 %v2277, %v2282
    %s2288 = scalar_lea.vmem %s2, 32
    %v2289 = vld [vmem:[%s2288] sm:$0xff]
    %v2290 = vld [vmem:[%s2288 + $0x8] sm:$0xff]
    %v2291 = vld [vmem:[%s2288 + $0x10] sm:$0xff]
    %v2292 = vld [vmem:[%s2288 + $0x18] sm:$0xff]
    %s2293 = scalar_lea.vmem %s3, 1
    %v2294 = vld [vmem:[%s2293] sm:$0x1]
    %s2295 = scalar_lea.vmem %s4, 32
    %v2296 = vld [vmem:[%s2295] sm:$0xff]
    %v2297 = vld [vmem:[%s2295 + $0x8] sm:$0xff]
    %v2298 = vld [vmem:[%s2295 + $0x10] sm:$0xff]
    %v2299 = vld [vmem:[%s2295 + $0x18] sm:$0xff]
    %s2300 = scalar_lea.vmem %s5, 1
    %v2301 = vld [vmem:[%s2300] sm:$0x1]
    %s2302 = scalar_lea.vmem %s6, 1
    %v2303 = vld [vmem:[%s2302] sm:$0x1]
    %s2304 = scalar_lea.vmem %s7, 1
    %v2305 = vld [vmem:[%s2304] sm:$0x1]
    %s2306 = scalar_lea.vmem %s8, 32
    %v2307 = vld [vmem:[%s2306] sm:$0xff]
    %v2308 = vld [vmem:[%s2306 + $0x8] sm:$0xff]
    %v2309 = vld [vmem:[%s2306 + $0x10] sm:$0xff]
    %v2310 = vld [vmem:[%s2306 + $0x18] sm:$0xff]
    %s2311 = scalar_lea.vmem %s9, 1
    %v2312 = vld [vmem:[%s2311] sm:$0x1]
    %s2313 = scalar_lea.vmem %s10, 128
    %v2314 = vld [vmem:[%s2313] sm:$0xff]
    %v2315 = vld [vmem:[%s2313 + $0x8] sm:$0xff]
    %v2316 = vld [vmem:[%s2313 + $0x10] sm:$0xff]
    %v2317 = vld [vmem:[%s2313 + $0x18] sm:$0xff]
    %v2318 = vld [vmem:[%s2313 + $0x20] sm:$0xff]
    %v2319 = vld [vmem:[%s2313 + $0x28] sm:$0xff]
    %v2320 = vld [vmem:[%s2313 + $0x30] sm:$0xff]
    %v2321 = vld [vmem:[%s2313 + $0x38] sm:$0xff]
    %v2322 = vld [vmem:[%s2313 + $0x40] sm:$0xff]
    %v2323 = vld [vmem:[%s2313 + $0x48] sm:$0xff]
    %v2324 = vld [vmem:[%s2313 + $0x50] sm:$0xff]
    %v2325 = vld [vmem:[%s2313 + $0x58] sm:$0xff]
    %v2326 = vld [vmem:[%s2313 + $0x60] sm:$0xff]
    %v2327 = vld [vmem:[%s2313 + $0x68] sm:$0xff]
    %v2328 = vld [vmem:[%s2313 + $0x70] sm:$0xff]
    %v2329 = vld [vmem:[%s2313 + $0x78] sm:$0xff]
    %s2330 = scalar_lea.vmem %s11, 1
    %v2331 = vld [vmem:[%s2330] sm:$0x1]
    %s2332 = scalar_lea.vmem %s12, 1
    %v2333 = vld [vmem:[%s2332] sm:$0x1]
    %s2334 = scalar_lea.vmem %s13, 1
    %v2335 = vld [vmem:[%s2334] sm:$0x1]
    %v2337 = vlaneseq
    %v2338 = vshrl.u32 %v2337, 7
    %v2339 = vsub.s32 0, %v2338
    %v2340 = vrot.slane %v2294, %v2339
    %v2343 = vsel %vm114, %v2284, 0
    %v2346 = vsel %vm114, %v2285, 0
    %v2349 = vsel %vm114, %v2286, 0
    %v2352 = vsel %vm114, %v2287, 0
    %2354 = vmatprep.subr.mxu0 0.0
    %2355 = vmatpush1.msra.mxu0 0.0
    %2356 = vmatprep.subr.mxu0 0.0
    %2357 = vmatpush1.msra.mxu0 0.0
    %2358 = vmatprep.subr.mxu0 0.0
    %2359 = vmatpush1.msra.mxu0 0.0
    %2360 = vmatprep.subr.mxu0 0.0
    %2361 = vmatpush1.msra.mxu0 0.0
    %2362 = vmatprep.subr.mxu0 0.0
    %2363 = vmatpush1.msra.mxu0 0.0
    %2364 = vmatprep.subr.mxu0 0.0
    %2365 = vmatpush1.msra.mxu0 0.0
    %2366 = vmatprep.subr.mxu0 0.0
    %2367 = vmatpush1.msra.mxu0 0.0
    %2368 = vmatprep.subr.mxu0 0.0
    %2369 = vmatpush1.msra.mxu0 0.0
    %2370 = vmatprep.subr.mxu0 0.0
    %2371 = vmatpush1.msra.mxu0 0.0
    %2372 = vmatprep.subr.mxu0 0.0
    %2373 = vmatpush1.msra.mxu0 0.0
    %2374 = vmatprep.subr.mxu0 0.0
    %2375 = vmatpush1.msra.mxu0 0.0
    %2376 = vmatprep.subr.mxu0 0.0
    %2377 = vmatpush1.msra.mxu0 0.0
    %2378 = vmatprep.subr.mxu0 0.0
    %2379 = vmatpush1.msra.mxu0 %v2292
    %2380 = vmatprep.subr.mxu0 0.0
    %2381 = vmatpush1.msra.mxu0 %v2291
    %2382 = vmatprep.subr.mxu0 0.0
    %2383 = vmatpush1.msra.mxu0 %v2290
    %2384 = vmatprep.subr.mxu0 0.0
    %2385 = vmatpush1.msra.mxu0 %v2289
    %2386 = vmatprep.subr.mxu0 0.0
    %2387 = vmatpush2.msra.mxu0 0.0
    %2388 = vmatprep.subr.mxu0 0.0
    %2389 = vmatpush2.msra.mxu0 0.0
    %2390 = vmatprep.subr.mxu0 0.0
    %2391 = vmatpush2.msra.mxu0 0.0
    %2392 = vmatprep.subr.mxu0 0.0
    %2393 = vmatpush2.msra.mxu0 0.0
    %2394 = vmatprep.subr.mxu0 0.0
    %2395 = vmatpush2.msra.mxu0 0.0
    %2396 = vmatprep.subr.mxu0 0.0
    %2397 = vmatpush2.msra.mxu0 0.0
    %2398 = vmatprep.subr.mxu0 0.0
    %2399 = vmatpush2.msra.mxu0 0.0
    %2400 = vmatprep.subr.mxu0 0.0
    %2401 = vmatpush2.msra.mxu0 0.0
    %2402 = vmatprep.subr.mxu0 0.0
    %2403 = vmatpush2.msra.mxu0 0.0
    %2404 = vmatprep.subr.mxu0 0.0
    %2405 = vmatpush2.msra.mxu0 0.0
    %2406 = vmatprep.subr.mxu0 0.0
    %2407 = vmatpush2.msra.mxu0 0.0
    %2408 = vmatprep.subr.mxu0 0.0
    %2409 = vmatpush2.msra.mxu0 0.0
    %2410 = vmatprep.subr.mxu0 0.0
    %2411 = vmatpush2.msra.mxu0 0.0
    %2412 = vmatprep.subr.mxu0 0.0
    %2413 = vmatpush2.msra.mxu0 0.0
    %2414 = vmatprep.subr.mxu0 0.0
    %2415 = vmatpush2.msra.mxu0 0.0
    %2416 = vmatprep.subr.mxu0 0.0
    %2417 = vmatpush2.msra.mxu0 0.0
    %2418 = vmatprep.mubr.f32.mxu0 0.0
    %2419 = vmatmul.mubr.f32.gmra.mxu0 %v2343
    %v2420 = vpop.f32.mrf.mxu0
    %v2421 = vadd.f32 %v2340, %v2420
    %v2422 = vpop.f32.mrf.mxu0
    %2423 = vmatprep.mubr.f32.mxu0 0.0
    %2424 = vmatmul.mubr.f32.gmra.mxu0 %v2346
    %v2425 = vpop.f32.mrf.mxu0
    %v2426 = vadd.f32 %v2340, %v2425
    %v2427 = vpop.f32.mrf.mxu0
    %2428 = vmatprep.mubr.f32.mxu0 0.0
    %2429 = vmatmul.mubr.f32.gmra.mxu0 %v2349
    %v2430 = vpop.f32.mrf.mxu0
    %v2431 = vadd.f32 %v2340, %v2430
    %v2432 = vpop.f32.mrf.mxu0
    %2433 = vmatprep.mubr.f32.mxu0 0.0
    %2434 = vmatmul.mubr.f32.gmra.mxu0 %v2352
    %v2435 = vpop.f32.mrf.mxu0
    %v2436 = vadd.f32 %v2340, %v2435
    %v2437 = vpop.f32.mrf.mxu0
    %2438 = vdwg.mxu0
    %2439 = vmatprep.subr.mxu0 0.0
    %2440 = vmatpush1.msra.mxu0 0.0
    %2441 = vmatprep.subr.mxu0 0.0
    %2442 = vmatpush1.msra.mxu0 0.0
    %2443 = vmatprep.subr.mxu0 0.0
    %2444 = vmatpush1.msra.mxu0 0.0
    %2445 = vmatprep.subr.mxu0 0.0
    %2446 = vmatpush1.msra.mxu0 0.0
    %2447 = vmatprep.subr.mxu0 0.0
    %2448 = vmatpush1.msra.mxu0 0.0
    %2449 = vmatprep.subr.mxu0 0.0
    %2450 = vmatpush1.msra.mxu0 0.0
    %2451 = vmatprep.subr.mxu0 0.0
    %2452 = vmatpush1.msra.mxu0 0.0
    %2453 = vmatprep.subr.mxu0 0.0
    %2454 = vmatpush1.msra.mxu0 0.0
    %2455 = vmatprep.subr.mxu0 0.0
    %2456 = vmatpush1.msra.mxu0 0.0
    %2457 = vmatprep.subr.mxu0 0.0
    %2458 = vmatpush1.msra.mxu0 0.0
    %2459 = vmatprep.subr.mxu0 0.0
    %2460 = vmatpush1.msra.mxu0 0.0
    %2461 = vmatprep.subr.mxu0 0.0
    %2462 = vmatpush1.msra.mxu0 0.0
    %2463 = vmatprep.subr.mxu0 0.0
    %2464 = vmatpush1.msra.mxu0 %v2299
    %2465 = vmatprep.subr.mxu0 0.0
    %2466 = vmatpush1.msra.mxu0 %v2298
    %2467 = vmatprep.subr.mxu0 0.0
    %2468 = vmatpush1.msra.mxu0 %v2297
    %2469 = vmatprep.subr.mxu0 0.0
    %2470 = vmatpush1.msra.mxu0 %v2296
    %2471 = vmatprep.subr.mxu0 0.0
    %2472 = vmatpush2.msra.mxu0 0.0
    %2473 = vmatprep.subr.mxu0 0.0
    %2474 = vmatpush2.msra.mxu0 0.0
    %2475 = vmatprep.subr.mxu0 0.0
    %2476 = vmatpush2.msra.mxu0 0.0
    %2477 = vmatprep.subr.mxu0 0.0
    %2478 = vmatpush2.msra.mxu0 0.0
    %2479 = vmatprep.subr.mxu0 0.0
    %2480 = vmatpush2.msra.mxu0 0.0
    %2481 = vmatprep.subr.mxu0 0.0
    %2482 = vmatpush2.msra.mxu0 0.0
    %2483 = vmatprep.subr.mxu0 0.0
    %2484 = vmatpush2.msra.mxu0 0.0
    %2485 = vmatprep.subr.mxu0 0.0
    %2486 = vmatpush2.msra.mxu0 0.0
    %2487 = vmatprep.subr.mxu0 0.0
    %2488 = vmatpush2.msra.mxu0 0.0
    %2489 = vmatprep.subr.mxu0 0.0
    %2490 = vmatpush2.msra.mxu0 0.0
    %2491 = vmatprep.subr.mxu0 0.0
    %2492 = vmatpush2.msra.mxu0 0.0
    %2493 = vmatprep.subr.mxu0 0.0
    %2494 = vmatpush2.msra.mxu0 0.0
    %2495 = vmatprep.subr.mxu0 0.0
    %2496 = vmatpush2.msra.mxu0 0.0
    %2497 = vmatprep.subr.mxu0 0.0
    %2498 = vmatpush2.msra.mxu0 0.0
    %2499 = vmatprep.subr.mxu0 0.0
    %2500 = vmatpush2.msra.mxu0 0.0
    %2501 = vmatprep.subr.mxu0 0.0
    %2502 = vmatpush2.msra.mxu0 0.0
    %2503 = vmatprep.mubr.f32.mxu0 0.0
    %2504 = vmatmul.mubr.f32.gmra.mxu0 %v2343
    %v2505 = vpop.f32.mrf.mxu0
    %v2506 = vadd.f32 0.0, %v2505
    %v2507 = vpop.f32.mrf.mxu0
    %2508 = vmatprep.mubr.f32.mxu0 0.0
    %2509 = vmatmul.mubr.f32.gmra.mxu0 %v2346
    %v2510 = vpop.f32.mrf.mxu0
    %v2511 = vadd.f32 0.0, %v2510
    %v2512 = vpop.f32.mrf.mxu0
    %2513 = vmatprep.mubr.f32.mxu0 0.0
    %2514 = vmatmul.mubr.f32.gmra.mxu0 %v2349
    %v2515 = vpop.f32.mrf.mxu0
    %v2516 = vadd.f32 0.0, %v2515
    %v2517 = vpop.f32.mrf.mxu0
    %2518 = vmatprep.mubr.f32.mxu0 0.0
    %2519 = vmatmul.mubr.f32.gmra.mxu0 %v2352
    %v2520 = vpop.f32.mrf.mxu0
    %v2521 = vadd.f32 0.0, %v2520
    %v2522 = vpop.f32.mrf.mxu0
    %2523 = vdwg.mxu0
    %2526 = vrot.lane.b32.xlu0 %v2421, 96
    %v2527 = vpop.permute.xlu0 %2526
    %2528 = vrot.lane.b32.xlu0 %v2426, 96
    %v2529 = vpop.permute.xlu0 %2528
    %v2530 = vsel %vm303, %v2421, 0
    %v2532 = vsel %vm303, %v2426, 0
    %v2534 = vsel %vm303, %v2527, 0
    %v2536 = vsel %vm303, %v2529, 0
    %2538 = vmatprep.subr.mxu0 0.0
    %2539 = vmatpush1.xpose.msra.mxu0 0.0
    %2540 = vmatprep.subr.mxu0 0.0
    %2541 = vmatpush1.xpose.msra.mxu0 0.0
    %2542 = vmatprep.subr.mxu0 0.0
    %2543 = vmatpush1.xpose.msra.mxu0 0.0
    %2544 = vmatprep.subr.mxu0 0.0
    %2545 = vmatpush1.xpose.msra.mxu0 0.0
    %2546 = vmatprep.subr.mxu0 0.0
    %2547 = vmatpush1.xpose.msra.mxu0 0.0
    %2548 = vmatprep.subr.mxu0 0.0
    %2549 = vmatpush1.xpose.msra.mxu0 0.0
    %2550 = vmatprep.subr.mxu0 0.0
    %2551 = vmatpush1.xpose.msra.mxu0 0.0
    %2552 = vmatprep.subr.mxu0 0.0
    %2553 = vmatpush1.xpose.msra.mxu0 0.0
    %2554 = vmatprep.subr.mxu0 0.0
    %2555 = vmatpush1.xpose.msra.mxu0 0.0
    %2556 = vmatprep.subr.mxu0 0.0
    %2557 = vmatpush1.xpose.msra.mxu0 0.0
    %2558 = vmatprep.subr.mxu0 0.0
    %2559 = vmatpush1.xpose.msra.mxu0 0.0
    %2560 = vmatprep.subr.mxu0 0.0
    %2561 = vmatpush1.xpose.msra.mxu0 0.0
    %2562 = vmatprep.subr.mxu0 0.0
    %2563 = vmatpush1.xpose.msra.mxu0 0.0
    %2564 = vmatprep.subr.mxu0 0.0
    %2565 = vmatpush1.xpose.msra.mxu0 0.0
    %2566 = vmatprep.subr.mxu0 0.0
    %2567 = vmatpush1.xpose.msra.mxu0 %v2536
    %2568 = vmatprep.subr.mxu0 0.0
    %2569 = vmatpush1.xpose.msra.mxu0 %v2534
    %2570 = vmatprep.subr.mxu0 0.0
    %2571 = vmatpush2.xpose.msra.mxu0 0.0
    %2572 = vmatprep.subr.mxu0 0.0
    %2573 = vmatpush2.xpose.msra.mxu0 0.0
    %2574 = vmatprep.subr.mxu0 0.0
    %2575 = vmatpush2.xpose.msra.mxu0 0.0
    %2576 = vmatprep.subr.mxu0 0.0
    %2577 = vmatpush2.xpose.msra.mxu0 0.0
    %2578 = vmatprep.subr.mxu0 0.0
    %2579 = vmatpush2.xpose.msra.mxu0 0.0
    %2580 = vmatprep.subr.mxu0 0.0
    %2581 = vmatpush2.xpose.msra.mxu0 0.0
    %2582 = vmatprep.subr.mxu0 0.0
    %2583 = vmatpush2.xpose.msra.mxu0 0.0
    %2584 = vmatprep.subr.mxu0 0.0
    %2585 = vmatpush2.xpose.msra.mxu0 0.0
    %2586 = vmatprep.subr.mxu0 0.0
    %2587 = vmatpush2.xpose.msra.mxu0 0.0
    %2588 = vmatprep.subr.mxu0 0.0
    %2589 = vmatpush2.xpose.msra.mxu0 0.0
    %2590 = vmatprep.subr.mxu0 0.0
    %2591 = vmatpush2.xpose.msra.mxu0 0.0
    %2592 = vmatprep.subr.mxu0 0.0
    %2593 = vmatpush2.xpose.msra.mxu0 0.0
    %2594 = vmatprep.subr.mxu0 0.0
    %2595 = vmatpush2.xpose.msra.mxu0 0.0
    %2596 = vmatprep.subr.mxu0 0.0
    %2597 = vmatpush2.xpose.msra.mxu0 0.0
    %2598 = vmatprep.subr.mxu0 0.0
    %2599 = vmatpush2.xpose.msra.mxu0 0.0
    %2600 = vmatprep.subr.mxu0 0.0
    %2601 = vmatpush2.xpose.msra.mxu0 0.0
    %2602 = vmatprep.mubr.f32.mxu0 0.0
    %2603 = vmatmul.mubr.f32.gmra.mxu0 %v2530
    %v2604 = vpop.f32.mrf.mxu0
    %v2605 = vadd.f32 0.0, %v2604
    %v2606 = vpop.f32.mrf.mxu0
    %2607 = vmatprep.mubr.f32.mxu0 0.0
    %2608 = vmatmul.mubr.f32.gmra.mxu0 %v2532
    %v2609 = vpop.f32.mrf.mxu0
    %v2610 = vadd.f32 0.0, %v2609
    %v2611 = vpop.f32.mrf.mxu0
    %2612 = vdwg.mxu0
    %2615 = vrot.lane.b32.xlu0 %v2431, 96
    %v2616 = vpop.permute.xlu0 %2615
    %2617 = vrot.lane.b32.xlu0 %v2436, 96
    %v2618 = vpop.permute.xlu0 %2617
    %v2619 = vsel %vm303, %v2431, 0
    %v2621 = vsel %vm303, %v2436, 0
    %v2623 = vsel %vm303, %v2616, 0
    %v2625 = vsel %vm303, %v2618, 0
    %2627 = vmatprep.subr.mxu0 0.0
    %2628 = vmatpush1.xpose.msra.mxu0 0.0
    %2629 = vmatprep.subr.mxu0 0.0
    %2630 = vmatpush1.xpose.msra.mxu0 0.0
    %2631 = vmatprep.subr.mxu0 0.0
    %2632 = vmatpush1.xpose.msra.mxu0 0.0
    %2633 = vmatprep.subr.mxu0 0.0
    %2634 = vmatpush1.xpose.msra.mxu0 0.0
    %2635 = vmatprep.subr.mxu0 0.0
    %2636 = vmatpush1.xpose.msra.mxu0 0.0
    %2637 = vmatprep.subr.mxu0 0.0
    %2638 = vmatpush1.xpose.msra.mxu0 0.0
    %2639 = vmatprep.subr.mxu0 0.0
    %2640 = vmatpush1.xpose.msra.mxu0 0.0
    %2641 = vmatprep.subr.mxu0 0.0
    %2642 = vmatpush1.xpose.msra.mxu0 0.0
    %2643 = vmatprep.subr.mxu0 0.0
    %2644 = vmatpush1.xpose.msra.mxu0 0.0
    %2645 = vmatprep.subr.mxu0 0.0
    %2646 = vmatpush1.xpose.msra.mxu0 0.0
    %2647 = vmatprep.subr.mxu0 0.0
    %2648 = vmatpush1.xpose.msra.mxu0 0.0
    %2649 = vmatprep.subr.mxu0 0.0
    %2650 = vmatpush1.xpose.msra.mxu0 0.0
    %2651 = vmatprep.subr.mxu0 0.0
    %2652 = vmatpush1.xpose.msra.mxu0 0.0
    %2653 = vmatprep.subr.mxu0 0.0
    %2654 = vmatpush1.xpose.msra.mxu0 0.0
    %2655 = vmatprep.subr.mxu0 0.0
    %2656 = vmatpush1.xpose.msra.mxu0 %v2625
    %2657 = vmatprep.subr.mxu0 0.0
    %2658 = vmatpush1.xpose.msra.mxu0 %v2623
    %2659 = vmatprep.subr.mxu0 0.0
    %2660 = vmatpush2.xpose.msra.mxu0 0.0
    %2661 = vmatprep.subr.mxu0 0.0
    %2662 = vmatpush2.xpose.msra.mxu0 0.0
    %2663 = vmatprep.subr.mxu0 0.0
    %2664 = vmatpush2.xpose.msra.mxu0 0.0
    %2665 = vmatprep.subr.mxu0 0.0
    %2666 = vmatpush2.xpose.msra.mxu0 0.0
    %2667 = vmatprep.subr.mxu0 0.0
    %2668 = vmatpush2.xpose.msra.mxu0 0.0
    %2669 = vmatprep.subr.mxu0 0.0
    %2670 = vmatpush2.xpose.msra.mxu0 0.0
    %2671 = vmatprep.subr.mxu0 0.0
    %2672 = vmatpush2.xpose.msra.mxu0 0.0
    %2673 = vmatprep.subr.mxu0 0.0
    %2674 = vmatpush2.xpose.msra.mxu0 0.0
    %2675 = vmatprep.subr.mxu0 0.0
    %2676 = vmatpush2.xpose.msra.mxu0 0.0
    %2677 = vmatprep.subr.mxu0 0.0
    %2678 = vmatpush2.xpose.msra.mxu0 0.0
    %2679 = vmatprep.subr.mxu0 0.0
    %2680 = vmatpush2.xpose.msra.mxu0 0.0
    %2681 = vmatprep.subr.mxu0 0.0
    %2682 = vmatpush2.xpose.msra.mxu0 0.0
    %2683 = vmatprep.subr.mxu0 0.0
    %2684 = vmatpush2.xpose.msra.mxu0 0.0
    %2685 = vmatprep.subr.mxu0 0.0
    %2686 = vmatpush2.xpose.msra.mxu0 0.0
    %2687 = vmatprep.subr.mxu0 0.0
    %2688 = vmatpush2.xpose.msra.mxu0 0.0
    %2689 = vmatprep.subr.mxu0 0.0
    %2690 = vmatpush2.xpose.msra.mxu0 0.0
    %2691 = vmatprep.mubr.f32.mxu0 0.0
    %2692 = vmatmul.mubr.f32.gmra.mxu0 %v2619
    %v2693 = vpop.f32.mrf.mxu0
    %v2694 = vadd.f32 0.0, %v2693
    %v2695 = vpop.f32.mrf.mxu0
    %2696 = vmatprep.mubr.f32.mxu0 0.0
    %2697 = vmatmul.mubr.f32.gmra.mxu0 %v2621
    %v2698 = vpop.f32.mrf.mxu0
    %v2699 = vadd.f32 0.0, %v2698
    %v2700 = vpop.f32.mrf.mxu0
    %2701 = vdwg.mxu0
    %v2702 = vmul.f32 %v2605, 0.35355338
    %v2703 = vmul.f32 %v2610, 0.35355338
    %v2704 = vmul.f32 %v2694, 0.35355338
    %v2705 = vmul.f32 %v2699, 0.35355338
    %v2706 = vadd.f32 %v2702, %v71
    %v2707 = vadd.f32 %v2703, %v71
    %v2708 = vadd.f32 %v2704, %v71
    %v2709 = vadd.f32 %v2705, %v71
    %v2710 = vsel %vm484, %v2706, -inf
    %2711 = vmax.xlane.f32.xlu0 %v2710
    %v2712 = vpop.xlane.xlu0 %2711
    %v2713 = vsel %vm484, %v2707, -inf
    %2714 = vmax.xlane.f32.xlu0 %v2713
    %v2715 = vpop.xlane.xlu0 %2714
    %v2716 = vsel %vm484, %v2708, -inf
    %2717 = vmax.xlane.f32.xlu0 %v2716
    %v2718 = vpop.xlane.xlu0 %2717
    %v2719 = vsel %vm484, %v2709, -inf
    %2720 = vmax.xlane.f32.xlu0 %v2719
    %v2721 = vpop.xlane.xlu0 %2720
    %v2722 = vsub.f32 %v2706, %v2712
    %v2723 = vsub.f32 %v2707, %v2715
    %v2724 = vsub.f32 %v2708, %v2718
    %v2725 = vsub.f32 %v2709, %v2721
    %v2726 = vmul.f32 %v2722, 1.442695
    %v2727 = vpow.pop %v2726
    %v2728 = vmul.f32 %v2723, 1.442695
    %v2729 = vpow.pop %v2728
    %v2730 = vmul.f32 %v2724, 1.442695
    %v2731 = vpow.pop %v2730
    %v2732 = vmul.f32 %v2725, 1.442695
    %v2733 = vpow.pop %v2732
    %v2734 = vsel %vm484, %v2727, 0.0
    %2735 = vadd.xlane.f32.xlu0 %v2734
    %v2736 = vpop.xlane.xlu0 %2735
    %v2737 = vsel %vm484, %v2729, 0.0
    %2738 = vadd.xlane.f32.xlu0 %v2737
    %v2739 = vpop.xlane.xlu0 %2738
    %v2740 = vsel %vm484, %v2731, 0.0
    %2741 = vadd.xlane.f32.xlu0 %v2740
    %v2742 = vpop.xlane.xlu0 %2741
    %v2743 = vsel %vm484, %v2733, 0.0
    %2744 = vadd.xlane.f32.xlu0 %v2743
    %v2745 = vpop.xlane.xlu0 %2744
    %v2746 = vrcp.pop %v2736
    %v2747 = vrcp.pop %v2739
    %v2748 = vrcp.pop %v2742
    %v2749 = vrcp.pop %v2745
    %v2750 = vmul.f32 %v2727, %v2746
    %v2751 = vmul.f32 %v2729, %v2747
    %v2752 = vmul.f32 %v2731, %v2748
    %v2753 = vmul.f32 %v2733, %v2749
    %2754 = vrot.lane.b32.xlu0 %v2421, 120
    %v2755 = vpop.permute.xlu0 %2754
    %2756 = vrot.lane.b32.xlu0 %v2426, 120
    %v2757 = vpop.permute.xlu0 %2756
    %2758 = vrot.lane.b32.xlu0 %v2421, 88
    %v2759 = vpop.permute.xlu0 %2758
    %2760 = vrot.lane.b32.xlu0 %v2426, 88
    %v2761 = vpop.permute.xlu0 %2760
    %v2762 = vsel %vm303, %v2755, 0
    %v2764 = vsel %vm303, %v2757, 0
    %v2766 = vsel %vm303, %v2759, 0
    %v2768 = vsel %vm303, %v2761, 0
    %2770 = vmatprep.subr.mxu0 0.0
    %2771 = vmatpush1.xpose.msra.mxu0 0.0
    %2772 = vmatprep.subr.mxu0 0.0
    %2773 = vmatpush1.xpose.msra.mxu0 0.0
    %2774 = vmatprep.subr.mxu0 0.0
    %2775 = vmatpush1.xpose.msra.mxu0 0.0
    %2776 = vmatprep.subr.mxu0 0.0
    %2777 = vmatpush1.xpose.msra.mxu0 0.0
    %2778 = vmatprep.subr.mxu0 0.0
    %2779 = vmatpush1.xpose.msra.mxu0 0.0
    %2780 = vmatprep.subr.mxu0 0.0
    %2781 = vmatpush1.xpose.msra.mxu0 0.0
    %2782 = vmatprep.subr.mxu0 0.0
    %2783 = vmatpush1.xpose.msra.mxu0 0.0
    %2784 = vmatprep.subr.mxu0 0.0
    %2785 = vmatpush1.xpose.msra.mxu0 0.0
    %2786 = vmatprep.subr.mxu0 0.0
    %2787 = vmatpush1.xpose.msra.mxu0 0.0
    %2788 = vmatprep.subr.mxu0 0.0
    %2789 = vmatpush1.xpose.msra.mxu0 0.0
    %2790 = vmatprep.subr.mxu0 0.0
    %2791 = vmatpush1.xpose.msra.mxu0 0.0
    %2792 = vmatprep.subr.mxu0 0.0
    %2793 = vmatpush1.xpose.msra.mxu0 0.0
    %2794 = vmatprep.subr.mxu0 0.0
    %2795 = vmatpush1.xpose.msra.mxu0 0.0
    %2796 = vmatprep.subr.mxu0 0.0
    %2797 = vmatpush1.xpose.msra.mxu0 0.0
    %2798 = vmatprep.subr.mxu0 0.0
    %2799 = vmatpush1.xpose.msra.mxu0 %v2768
    %2800 = vmatprep.subr.mxu0 0.0
    %2801 = vmatpush1.xpose.msra.mxu0 %v2766
    %2802 = vmatprep.subr.mxu0 0.0
    %2803 = vmatpush2.xpose.msra.mxu0 0.0
    %2804 = vmatprep.subr.mxu0 0.0
    %2805 = vmatpush2.xpose.msra.mxu0 0.0
    %2806 = vmatprep.subr.mxu0 0.0
    %2807 = vmatpush2.xpose.msra.mxu0 0.0
    %2808 = vmatprep.subr.mxu0 0.0
    %2809 = vmatpush2.xpose.msra.mxu0 0.0
    %2810 = vmatprep.subr.mxu0 0.0
    %2811 = vmatpush2.xpose.msra.mxu0 0.0
    %2812 = vmatprep.subr.mxu0 0.0
    %2813 = vmatpush2.xpose.msra.mxu0 0.0
    %2814 = vmatprep.subr.mxu0 0.0
    %2815 = vmatpush2.xpose.msra.mxu0 0.0
    %2816 = vmatprep.subr.mxu0 0.0
    %2817 = vmatpush2.xpose.msra.mxu0 0.0
    %2818 = vmatprep.subr.mxu0 0.0
    %2819 = vmatpush2.xpose.msra.mxu0 0.0
    %2820 = vmatprep.subr.mxu0 0.0
    %2821 = vmatpush2.xpose.msra.mxu0 0.0
    %2822 = vmatprep.subr.mxu0 0.0
    %2823 = vmatpush2.xpose.msra.mxu0 0.0
    %2824 = vmatprep.subr.mxu0 0.0
    %2825 = vmatpush2.xpose.msra.mxu0 0.0
    %2826 = vmatprep.subr.mxu0 0.0
    %2827 = vmatpush2.xpose.msra.mxu0 0.0
    %2828 = vmatprep.subr.mxu0 0.0
    %2829 = vmatpush2.xpose.msra.mxu0 0.0
    %2830 = vmatprep.subr.mxu0 0.0
    %2831 = vmatpush2.xpose.msra.mxu0 0.0
    %2832 = vmatprep.subr.mxu0 0.0
    %2833 = vmatpush2.xpose.msra.mxu0 0.0
    %2834 = vmatprep.mubr.f32.mxu0 0.0
    %2835 = vmatmul.mubr.f32.gmra.mxu0 %v2762
    %v2836 = vpop.f32.mrf.mxu0
    %v2837 = vadd.f32 0.0, %v2836
    %v2838 = vpop.f32.mrf.mxu0
    %2839 = vmatprep.mubr.f32.mxu0 0.0
    %2840 = vmatmul.mubr.f32.gmra.mxu0 %v2764
    %v2841 = vpop.f32.mrf.mxu0
    %v2842 = vadd.f32 0.0, %v2841
    %v2843 = vpop.f32.mrf.mxu0
    %2844 = vdwg.mxu0
    %2845 = vrot.lane.b32.xlu0 %v2431, 120
    %v2846 = vpop.permute.xlu0 %2845
    %2847 = vrot.lane.b32.xlu0 %v2436, 120
    %v2848 = vpop.permute.xlu0 %2847
    %2849 = vrot.lane.b32.xlu0 %v2431, 88
    %v2850 = vpop.permute.xlu0 %2849
    %2851 = vrot.lane.b32.xlu0 %v2436, 88
    %v2852 = vpop.permute.xlu0 %2851
    %v2853 = vsel %vm303, %v2846, 0
    %v2855 = vsel %vm303, %v2848, 0
    %v2857 = vsel %vm303, %v2850, 0
    %v2859 = vsel %vm303, %v2852, 0
    %2861 = vmatprep.subr.mxu0 0.0
    %2862 = vmatpush1.xpose.msra.mxu0 0.0
    %2863 = vmatprep.subr.mxu0 0.0
    %2864 = vmatpush1.xpose.msra.mxu0 0.0
    %2865 = vmatprep.subr.mxu0 0.0
    %2866 = vmatpush1.xpose.msra.mxu0 0.0
    %2867 = vmatprep.subr.mxu0 0.0
    %2868 = vmatpush1.xpose.msra.mxu0 0.0
    %2869 = vmatprep.subr.mxu0 0.0
    %2870 = vmatpush1.xpose.msra.mxu0 0.0
    %2871 = vmatprep.subr.mxu0 0.0
    %2872 = vmatpush1.xpose.msra.mxu0 0.0
    %2873 = vmatprep.subr.mxu0 0.0
    %2874 = vmatpush1.xpose.msra.mxu0 0.0
    %2875 = vmatprep.subr.mxu0 0.0
    %2876 = vmatpush1.xpose.msra.mxu0 0.0
    %2877 = vmatprep.subr.mxu0 0.0
    %2878 = vmatpush1.xpose.msra.mxu0 0.0
    %2879 = vmatprep.subr.mxu0 0.0
    %2880 = vmatpush1.xpose.msra.mxu0 0.0
    %2881 = vmatprep.subr.mxu0 0.0
    %2882 = vmatpush1.xpose.msra.mxu0 0.0
    %2883 = vmatprep.subr.mxu0 0.0
    %2884 = vmatpush1.xpose.msra.mxu0 0.0
    %2885 = vmatprep.subr.mxu0 0.0
    %2886 = vmatpush1.xpose.msra.mxu0 0.0
    %2887 = vmatprep.subr.mxu0 0.0
    %2888 = vmatpush1.xpose.msra.mxu0 0.0
    %2889 = vmatprep.subr.mxu0 0.0
    %2890 = vmatpush1.xpose.msra.mxu0 %v2859
    %2891 = vmatprep.subr.mxu0 0.0
    %2892 = vmatpush1.xpose.msra.mxu0 %v2857
    %2893 = vmatprep.subr.mxu0 0.0
    %2894 = vmatpush2.xpose.msra.mxu0 0.0
    %2895 = vmatprep.subr.mxu0 0.0
    %2896 = vmatpush2.xpose.msra.mxu0 0.0
    %2897 = vmatprep.subr.mxu0 0.0
    %2898 = vmatpush2.xpose.msra.mxu0 0.0
    %2899 = vmatprep.subr.mxu0 0.0
    %2900 = vmatpush2.xpose.msra.mxu0 0.0
    %2901 = vmatprep.subr.mxu0 0.0
    %2902 = vmatpush2.xpose.msra.mxu0 0.0
    %2903 = vmatprep.subr.mxu0 0.0
    %2904 = vmatpush2.xpose.msra.mxu0 0.0
    %2905 = vmatprep.subr.mxu0 0.0
    %2906 = vmatpush2.xpose.msra.mxu0 0.0
    %2907 = vmatprep.subr.mxu0 0.0
    %2908 = vmatpush2.xpose.msra.mxu0 0.0
    %2909 = vmatprep.subr.mxu0 0.0
    %2910 = vmatpush2.xpose.msra.mxu0 0.0
    %2911 = vmatprep.subr.mxu0 0.0
    %2912 = vmatpush2.xpose.msra.mxu0 0.0
    %2913 = vmatprep.subr.mxu0 0.0
    %2914 = vmatpush2.xpose.msra.mxu0 0.0
    %2915 = vmatprep.subr.mxu0 0.0
    %2916 = vmatpush2.xpose.msra.mxu0 0.0
    %2917 = vmatprep.subr.mxu0 0.0
    %2918 = vmatpush2.xpose.msra.mxu0 0.0
    %2919 = vmatprep.subr.mxu0 0.0
    %2920 = vmatpush2.xpose.msra.mxu0 0.0
    %2921 = vmatprep.subr.mxu0 0.0
    %2922 = vmatpush2.xpose.msra.mxu0 0.0
    %2923 = vmatprep.subr.mxu0 0.0
    %2924 = vmatpush2.xpose.msra.mxu0 0.0
    %2925 = vmatprep.mubr.f32.mxu0 0.0
    %2926 = vmatmul.mubr.f32.gmra.mxu0 %v2853
    %v2927 = vpop.f32.mrf.mxu0
    %v2928 = vadd.f32 0.0, %v2927
    %v2929 = vpop.f32.mrf.mxu0
    %2930 = vmatprep.mubr.f32.mxu0 0.0
    %2931 = vmatmul.mubr.f32.gmra.mxu0 %v2855
    %v2932 = vpop.f32.mrf.mxu0
    %v2933 = vadd.f32 0.0, %v2932
    %v2934 = vpop.f32.mrf.mxu0
    %2935 = vdwg.mxu0
    %v2936 = vmul.f32 %v2837, 0.35355338
    %v2937 = vmul.f32 %v2842, 0.35355338
    %v2938 = vmul.f32 %v2928, 0.35355338
    %v2939 = vmul.f32 %v2933, 0.35355338
    %v2940 = vadd.f32 %v2936, %v71
    %v2941 = vadd.f32 %v2937, %v71
    %v2942 = vadd.f32 %v2938, %v71
    %v2943 = vadd.f32 %v2939, %v71
    %v2944 = vsel %vm484, %v2940, -inf
    %2945 = vmax.xlane.f32.xlu0 %v2944
    %v2946 = vpop.xlane.xlu0 %2945
    %v2947 = vsel %vm484, %v2941, -inf
    %2948 = vmax.xlane.f32.xlu0 %v2947
    %v2949 = vpop.xlane.xlu0 %2948
    %v2950 = vsel %vm484, %v2942, -inf
    %2951 = vmax.xlane.f32.xlu0 %v2950
    %v2952 = vpop.xlane.xlu0 %2951
    %v2953 = vsel %vm484, %v2943, -inf
    %2954 = vmax.xlane.f32.xlu0 %v2953
    %v2955 = vpop.xlane.xlu0 %2954
    %v2956 = vsub.f32 %v2940, %v2946
    %v2957 = vsub.f32 %v2941, %v2949
    %v2958 = vsub.f32 %v2942, %v2952
    %v2959 = vsub.f32 %v2943, %v2955
    %v2960 = vmul.f32 %v2956, 1.442695
    %v2961 = vpow.pop %v2960
    %v2962 = vmul.f32 %v2957, 1.442695
    %v2963 = vpow.pop %v2962
    %v2964 = vmul.f32 %v2958, 1.442695
    %v2965 = vpow.pop %v2964
    %v2966 = vmul.f32 %v2959, 1.442695
    %v2967 = vpow.pop %v2966
    %v2968 = vsel %vm484, %v2961, 0.0
    %2969 = vadd.xlane.f32.xlu0 %v2968
    %v2970 = vpop.xlane.xlu0 %2969
    %v2971 = vsel %vm484, %v2963, 0.0
    %2972 = vadd.xlane.f32.xlu0 %v2971
    %v2973 = vpop.xlane.xlu0 %2972
    %v2974 = vsel %vm484, %v2965, 0.0
    %2975 = vadd.xlane.f32.xlu0 %v2974
    %v2976 = vpop.xlane.xlu0 %2975
    %v2977 = vsel %vm484, %v2967, 0.0
    %2978 = vadd.xlane.f32.xlu0 %v2977
    %v2979 = vpop.xlane.xlu0 %2978
    %v2980 = vrcp.pop %v2970
    %v2981 = vrcp.pop %v2973
    %v2982 = vrcp.pop %v2976
    %v2983 = vrcp.pop %v2979
    %v2984 = vmul.f32 %v2961, %v2980
    %v2985 = vmul.f32 %v2963, %v2981
    %v2986 = vmul.f32 %v2965, %v2982
    %v2987 = vmul.f32 %v2967, %v2983
    %2990 = vrot.lane.b32.xlu0 %v2506, 96
    %v2991 = vpop.permute.xlu0 %2990
    %2992 = vrot.lane.b32.xlu0 %v2511, 96
    %v2993 = vpop.permute.xlu0 %2992
    %v2997 = vsel %vm484, %v2984, 0
    %v3000 = vsel %vm484, %v2985, 0
    %3002 = vmatprep.subr.mxu0 0.0
    %3003 = vmatpush1.msra.mxu0 0.0
    %3004 = vmatprep.subr.mxu0 0.0
    %3005 = vmatpush1.msra.mxu0 0.0
    %3006 = vmatprep.subr.mxu0 0.0
    %3007 = vmatpush1.msra.mxu0 0.0
    %3008 = vmatprep.subr.mxu0 0.0
    %3009 = vmatpush1.msra.mxu0 0.0
    %3010 = vmatprep.subr.mxu0 0.0
    %3011 = vmatpush1.msra.mxu0 0.0
    %3012 = vmatprep.subr.mxu0 0.0
    %3013 = vmatpush1.msra.mxu0 0.0
    %3014 = vmatprep.subr.mxu0 0.0
    %3015 = vmatpush1.msra.mxu0 0.0
    %3016 = vmatprep.subr.mxu0 0.0
    %3017 = vmatpush1.msra.mxu0 0.0
    %3018 = vmatprep.subr.mxu0 0.0
    %3019 = vmatpush1.msra.mxu0 0.0
    %3020 = vmatprep.subr.mxu0 0.0
    %3021 = vmatpush1.msra.mxu0 0.0
    %3022 = vmatprep.subr.mxu0 0.0
    %3023 = vmatpush1.msra.mxu0 0.0
    %3024 = vmatprep.subr.mxu0 0.0
    %3025 = vmatpush1.msra.mxu0 0.0
    %3026 = vmatprep.subr.mxu0 0.0
    %3027 = vmatpush1.msra.mxu0 0.0
    %3028 = vmatprep.subr.mxu0 0.0
    %3029 = vmatpush1.msra.mxu0 0.0
    %3030 = vmatprep.subr.mxu0 0.0
    %3031 = vmatpush1.msra.mxu0 %v2993
    %3032 = vmatprep.subr.mxu0 0.0
    %3033 = vmatpush1.msra.mxu0 %v2991
    %3034 = vmatprep.subr.mxu0 0.0
    %3035 = vmatpush2.msra.mxu0 0.0
    %3036 = vmatprep.subr.mxu0 0.0
    %3037 = vmatpush2.msra.mxu0 0.0
    %3038 = vmatprep.subr.mxu0 0.0
    %3039 = vmatpush2.msra.mxu0 0.0
    %3040 = vmatprep.subr.mxu0 0.0
    %3041 = vmatpush2.msra.mxu0 0.0
    %3042 = vmatprep.subr.mxu0 0.0
    %3043 = vmatpush2.msra.mxu0 0.0
    %3044 = vmatprep.subr.mxu0 0.0
    %3045 = vmatpush2.msra.mxu0 0.0
    %3046 = vmatprep.subr.mxu0 0.0
    %3047 = vmatpush2.msra.mxu0 0.0
    %3048 = vmatprep.subr.mxu0 0.0
    %3049 = vmatpush2.msra.mxu0 0.0
    %3050 = vmatprep.subr.mxu0 0.0
    %3051 = vmatpush2.msra.mxu0 0.0
    %3052 = vmatprep.subr.mxu0 0.0
    %3053 = vmatpush2.msra.mxu0 0.0
    %3054 = vmatprep.subr.mxu0 0.0
    %3055 = vmatpush2.msra.mxu0 0.0
    %3056 = vmatprep.subr.mxu0 0.0
    %3057 = vmatpush2.msra.mxu0 0.0
    %3058 = vmatprep.subr.mxu0 0.0
    %3059 = vmatpush2.msra.mxu0 0.0
    %3060 = vmatprep.subr.mxu0 0.0
    %3061 = vmatpush2.msra.mxu0 0.0
    %3062 = vmatprep.subr.mxu0 0.0
    %3063 = vmatpush2.msra.mxu0 0.0
    %3064 = vmatprep.subr.mxu0 0.0
    %3065 = vmatpush2.msra.mxu0 0.0
    %3066 = vmatprep.mubr.f32.mxu0 0.0
    %3067 = vmatmul.mubr.f32.gmra.mxu0 %v2997
    %v3068 = vpop.f32.mrf.mxu0
    %v3069 = vadd.f32 0.0, %v3068
    %v3070 = vpop.f32.mrf.mxu0
    %3071 = vmatprep.mubr.f32.mxu0 0.0
    %3072 = vmatmul.mubr.f32.gmra.mxu0 %v3000
    %v3073 = vpop.f32.mrf.mxu0
    %v3074 = vadd.f32 0.0, %v3073
    %v3075 = vpop.f32.mrf.mxu0
    %3076 = vdwg.mxu0
    %3079 = vrot.lane.b32.xlu0 %v2516, 96
    %v3080 = vpop.permute.xlu0 %3079
    %3081 = vrot.lane.b32.xlu0 %v2521, 96
    %v3082 = vpop.permute.xlu0 %3081
    %v3086 = vsel %vm484, %v2986, 0
    %v3089 = vsel %vm484, %v2987, 0
    %3091 = vmatprep.subr.mxu0 0.0
    %3092 = vmatpush1.msra.mxu0 0.0
    %3093 = vmatprep.subr.mxu0 0.0
    %3094 = vmatpush1.msra.mxu0 0.0
    %3095 = vmatprep.subr.mxu0 0.0
    %3096 = vmatpush1.msra.mxu0 0.0
    %3097 = vmatprep.subr.mxu0 0.0
    %3098 = vmatpush1.msra.mxu0 0.0
    %3099 = vmatprep.subr.mxu0 0.0
    %3100 = vmatpush1.msra.mxu0 0.0
    %3101 = vmatprep.subr.mxu0 0.0
    %3102 = vmatpush1.msra.mxu0 0.0
    %3103 = vmatprep.subr.mxu0 0.0
    %3104 = vmatpush1.msra.mxu0 0.0
    %3105 = vmatprep.subr.mxu0 0.0
    %3106 = vmatpush1.msra.mxu0 0.0
    %3107 = vmatprep.subr.mxu0 0.0
    %3108 = vmatpush1.msra.mxu0 0.0
    %3109 = vmatprep.subr.mxu0 0.0
    %3110 = vmatpush1.msra.mxu0 0.0
    %3111 = vmatprep.subr.mxu0 0.0
    %3112 = vmatpush1.msra.mxu0 0.0
    %3113 = vmatprep.subr.mxu0 0.0
    %3114 = vmatpush1.msra.mxu0 0.0
    %3115 = vmatprep.subr.mxu0 0.0
    %3116 = vmatpush1.msra.mxu0 0.0
    %3117 = vmatprep.subr.mxu0 0.0
    %3118 = vmatpush1.msra.mxu0 0.0
    %3119 = vmatprep.subr.mxu0 0.0
    %3120 = vmatpush1.msra.mxu0 %v3082
    %3121 = vmatprep.subr.mxu0 0.0
    %3122 = vmatpush1.msra.mxu0 %v3080
    %3123 = vmatprep.subr.mxu0 0.0
    %3124 = vmatpush2.msra.mxu0 0.0
    %3125 = vmatprep.subr.mxu0 0.0
    %3126 = vmatpush2.msra.mxu0 0.0
    %3127 = vmatprep.subr.mxu0 0.0
    %3128 = vmatpush2.msra.mxu0 0.0
    %3129 = vmatprep.subr.mxu0 0.0
    %3130 = vmatpush2.msra.mxu0 0.0
    %3131 = vmatprep.subr.mxu0 0.0
    %3132 = vmatpush2.msra.mxu0 0.0
    %3133 = vmatprep.subr.mxu0 0.0
    %3134 = vmatpush2.msra.mxu0 0.0
    %3135 = vmatprep.subr.mxu0 0.0
    %3136 = vmatpush2.msra.mxu0 0.0
    %3137 = vmatprep.subr.mxu0 0.0
    %3138 = vmatpush2.msra.mxu0 0.0
    %3139 = vmatprep.subr.mxu0 0.0
    %3140 = vmatpush2.msra.mxu0 0.0
    %3141 = vmatprep.subr.mxu0 0.0
    %3142 = vmatpush2.msra.mxu0 0.0
    %3143 = vmatprep.subr.mxu0 0.0
    %3144 = vmatpush2.msra.mxu0 0.0
    %3145 = vmatprep.subr.mxu0 0.0
    %3146 = vmatpush2.msra.mxu0 0.0
    %3147 = vmatprep.subr.mxu0 0.0
    %3148 = vmatpush2.msra.mxu0 0.0
    %3149 = vmatprep.subr.mxu0 0.0
    %3150 = vmatpush2.msra.mxu0 0.0
    %3151 = vmatprep.subr.mxu0 0.0
    %3152 = vmatpush2.msra.mxu0 0.0
    %3153 = vmatprep.subr.mxu0 0.0
    %3154 = vmatpush2.msra.mxu0 0.0
    %3155 = vmatprep.mubr.f32.mxu0 0.0
    %3156 = vmatmul.mubr.f32.gmra.mxu0 %v3086
    %v3157 = vpop.f32.mrf.mxu0
    %v3158 = vadd.f32 0.0, %v3157
    %v3159 = vpop.f32.mrf.mxu0
    %3160 = vmatprep.mubr.f32.mxu0 0.0
    %3161 = vmatmul.mubr.f32.gmra.mxu0 %v3089
    %v3162 = vpop.f32.mrf.mxu0
    %v3163 = vadd.f32 0.0, %v3162
    %v3164 = vpop.f32.mrf.mxu0
    %3165 = vdwg.mxu0
    %v3167 = vsel %vm484, %v2750, 0
    %v3170 = vsel %vm484, %v2751, 0
    %3172 = vmatprep.subr.mxu0 0.0
    %3173 = vmatpush1.msra.mxu0 0.0
    %3174 = vmatprep.subr.mxu0 0.0
    %3175 = vmatpush1.msra.mxu0 0.0
    %3176 = vmatprep.subr.mxu0 0.0
    %3177 = vmatpush1.msra.mxu0 0.0
    %3178 = vmatprep.subr.mxu0 0.0
    %3179 = vmatpush1.msra.mxu0 0.0
    %3180 = vmatprep.subr.mxu0 0.0
    %3181 = vmatpush1.msra.mxu0 0.0
    %3182 = vmatprep.subr.mxu0 0.0
    %3183 = vmatpush1.msra.mxu0 0.0
    %3184 = vmatprep.subr.mxu0 0.0
    %3185 = vmatpush1.msra.mxu0 0.0
    %3186 = vmatprep.subr.mxu0 0.0
    %3187 = vmatpush1.msra.mxu0 0.0
    %3188 = vmatprep.subr.mxu0 0.0
    %3189 = vmatpush1.msra.mxu0 0.0
    %3190 = vmatprep.subr.mxu0 0.0
    %3191 = vmatpush1.msra.mxu0 0.0
    %3192 = vmatprep.subr.mxu0 0.0
    %3193 = vmatpush1.msra.mxu0 0.0
    %3194 = vmatprep.subr.mxu0 0.0
    %3195 = vmatpush1.msra.mxu0 0.0
    %3196 = vmatprep.subr.mxu0 0.0
    %3197 = vmatpush1.msra.mxu0 0.0
    %3198 = vmatprep.subr.mxu0 0.0
    %3199 = vmatpush1.msra.mxu0 0.0
    %3200 = vmatprep.subr.mxu0 0.0
    %3201 = vmatpush1.msra.mxu0 %v2511
    %3202 = vmatprep.subr.mxu0 0.0
    %3203 = vmatpush1.msra.mxu0 %v2506
    %3204 = vmatprep.subr.mxu0 0.0
    %3205 = vmatpush2.msra.mxu0 0.0
    %3206 = vmatprep.subr.mxu0 0.0
    %3207 = vmatpush2.msra.mxu0 0.0
    %3208 = vmatprep.subr.mxu0 0.0
    %3209 = vmatpush2.msra.mxu0 0.0
    %3210 = vmatprep.subr.mxu0 0.0
    %3211 = vmatpush2.msra.mxu0 0.0
    %3212 = vmatprep.subr.mxu0 0.0
    %3213 = vmatpush2.msra.mxu0 0.0
    %3214 = vmatprep.subr.mxu0 0.0
    %3215 = vmatpush2.msra.mxu0 0.0
    %3216 = vmatprep.subr.mxu0 0.0
    %3217 = vmatpush2.msra.mxu0 0.0
    %3218 = vmatprep.subr.mxu0 0.0
    %3219 = vmatpush2.msra.mxu0 0.0
    %3220 = vmatprep.subr.mxu0 0.0
    %3221 = vmatpush2.msra.mxu0 0.0
    %3222 = vmatprep.subr.mxu0 0.0
    %3223 = vmatpush2.msra.mxu0 0.0
    %3224 = vmatprep.subr.mxu0 0.0
    %3225 = vmatpush2.msra.mxu0 0.0
    %3226 = vmatprep.subr.mxu0 0.0
    %3227 = vmatpush2.msra.mxu0 0.0
    %3228 = vmatprep.subr.mxu0 0.0
    %3229 = vmatpush2.msra.mxu0 0.0
    %3230 = vmatprep.subr.mxu0 0.0
    %3231 = vmatpush2.msra.mxu0 0.0
    %3232 = vmatprep.subr.mxu0 0.0
    %3233 = vmatpush2.msra.mxu0 0.0
    %3234 = vmatprep.subr.mxu0 0.0
    %3235 = vmatpush2.msra.mxu0 0.0
    %3236 = vmatprep.mubr.f32.mxu0 0.0
    %3237 = vmatmul.mubr.f32.gmra.mxu0 %v3167
    %v3238 = vpop.f32.mrf.mxu0
    %v3239 = vadd.f32 %v3069, %v3238
    %v3240 = vpop.f32.mrf.mxu0
    %3241 = vmatprep.mubr.f32.mxu0 0.0
    %3242 = vmatmul.mubr.f32.gmra.mxu0 %v3170
    %v3243 = vpop.f32.mrf.mxu0
    %v3244 = vadd.f32 %v3074, %v3243
    %v3245 = vpop.f32.mrf.mxu0
    %3246 = vdwg.mxu0
    %v3248 = vsel %vm484, %v2752, 0
    %v3251 = vsel %vm484, %v2753, 0
    %3253 = vmatprep.subr.mxu0 0.0
    %3254 = vmatpush1.msra.mxu0 0.0
    %3255 = vmatprep.subr.mxu0 0.0
    %3256 = vmatpush1.msra.mxu0 0.0
    %3257 = vmatprep.subr.mxu0 0.0
    %3258 = vmatpush1.msra.mxu0 0.0
    %3259 = vmatprep.subr.mxu0 0.0
    %3260 = vmatpush1.msra.mxu0 0.0
    %3261 = vmatprep.subr.mxu0 0.0
    %3262 = vmatpush1.msra.mxu0 0.0
    %3263 = vmatprep.subr.mxu0 0.0
    %3264 = vmatpush1.msra.mxu0 0.0
    %3265 = vmatprep.subr.mxu0 0.0
    %3266 = vmatpush1.msra.mxu0 0.0
    %3267 = vmatprep.subr.mxu0 0.0
    %3268 = vmatpush1.msra.mxu0 0.0
    %3269 = vmatprep.subr.mxu0 0.0
    %3270 = vmatpush1.msra.mxu0 0.0
    %3271 = vmatprep.subr.mxu0 0.0
    %3272 = vmatpush1.msra.mxu0 0.0
    %3273 = vmatprep.subr.mxu0 0.0
    %3274 = vmatpush1.msra.mxu0 0.0
    %3275 = vmatprep.subr.mxu0 0.0
    %3276 = vmatpush1.msra.mxu0 0.0
    %3277 = vmatprep.subr.mxu0 0.0
    %3278 = vmatpush1.msra.mxu0 0.0
    %3279 = vmatprep.subr.mxu0 0.0
    %3280 = vmatpush1.msra.mxu0 0.0
    %3281 = vmatprep.subr.mxu0 0.0
    %3282 = vmatpush1.msra.mxu0 %v2521
    %3283 = vmatprep.subr.mxu0 0.0
    %3284 = vmatpush1.msra.mxu0 %v2516
    %3285 = vmatprep.subr.mxu0 0.0
    %3286 = vmatpush2.msra.mxu0 0.0
    %3287 = vmatprep.subr.mxu0 0.0
    %3288 = vmatpush2.msra.mxu0 0.0
    %3289 = vmatprep.subr.mxu0 0.0
    %3290 = vmatpush2.msra.mxu0 0.0
    %3291 = vmatprep.subr.mxu0 0.0
    %3292 = vmatpush2.msra.mxu0 0.0
    %3293 = vmatprep.subr.mxu0 0.0
    %3294 = vmatpush2.msra.mxu0 0.0
    %3295 = vmatprep.subr.mxu0 0.0
    %3296 = vmatpush2.msra.mxu0 0.0
    %3297 = vmatprep.subr.mxu0 0.0
    %3298 = vmatpush2.msra.mxu0 0.0
    %3299 = vmatprep.subr.mxu0 0.0
    %3300 = vmatpush2.msra.mxu0 0.0
    %3301 = vmatprep.subr.mxu0 0.0
    %3302 = vmatpush2.msra.mxu0 0.0
    %3303 = vmatprep.subr.mxu0 0.0
    %3304 = vmatpush2.msra.mxu0 0.0
    %3305 = vmatprep.subr.mxu0 0.0
    %3306 = vmatpush2.msra.mxu0 0.0
    %3307 = vmatprep.subr.mxu0 0.0
    %3308 = vmatpush2.msra.mxu0 0.0
    %3309 = vmatprep.subr.mxu0 0.0
    %3310 = vmatpush2.msra.mxu0 0.0
    %3311 = vmatprep.subr.mxu0 0.0
    %3312 = vmatpush2.msra.mxu0 0.0
    %3313 = vmatprep.subr.mxu0 0.0
    %3314 = vmatpush2.msra.mxu0 0.0
    %3315 = vmatprep.subr.mxu0 0.0
    %3316 = vmatpush2.msra.mxu0 0.0
    %3317 = vmatprep.mubr.f32.mxu0 0.0
    %3318 = vmatmul.mubr.f32.gmra.mxu0 %v3248
    %v3319 = vpop.f32.mrf.mxu0
    %v3320 = vadd.f32 %v3158, %v3319
    %v3321 = vpop.f32.mrf.mxu0
    %3322 = vmatprep.mubr.f32.mxu0 0.0
    %3323 = vmatmul.mubr.f32.gmra.mxu0 %v3251
    %v3324 = vpop.f32.mrf.mxu0
    %v3325 = vadd.f32 %v3163, %v3324
    %v3326 = vpop.f32.mrf.mxu0
    %3327 = vdwg.mxu0
    %3328 = vrot.lane.b32.xlu0 %v2421, 112
    %v3329 = vpop.permute.xlu0 %3328
    %3330 = vrot.lane.b32.xlu0 %v2426, 112
    %v3331 = vpop.permute.xlu0 %3330
    %3332 = vrot.lane.b32.xlu0 %v2421, 80
    %v3333 = vpop.permute.xlu0 %3332
    %3334 = vrot.lane.b32.xlu0 %v2426, 80
    %v3335 = vpop.permute.xlu0 %3334
    %v3336 = vsel %vm303, %v3329, 0
    %v3338 = vsel %vm303, %v3331, 0
    %v3340 = vsel %vm303, %v3333, 0
    %v3342 = vsel %vm303, %v3335, 0
    %3344 = vmatprep.subr.mxu0 0.0
    %3345 = vmatpush1.xpose.msra.mxu0 0.0
    %3346 = vmatprep.subr.mxu0 0.0
    %3347 = vmatpush1.xpose.msra.mxu0 0.0
    %3348 = vmatprep.subr.mxu0 0.0
    %3349 = vmatpush1.xpose.msra.mxu0 0.0
    %3350 = vmatprep.subr.mxu0 0.0
    %3351 = vmatpush1.xpose.msra.mxu0 0.0
    %3352 = vmatprep.subr.mxu0 0.0
    %3353 = vmatpush1.xpose.msra.mxu0 0.0
    %3354 = vmatprep.subr.mxu0 0.0
    %3355 = vmatpush1.xpose.msra.mxu0 0.0
    %3356 = vmatprep.subr.mxu0 0.0
    %3357 = vmatpush1.xpose.msra.mxu0 0.0
    %3358 = vmatprep.subr.mxu0 0.0
    %3359 = vmatpush1.xpose.msra.mxu0 0.0
    %3360 = vmatprep.subr.mxu0 0.0
    %3361 = vmatpush1.xpose.msra.mxu0 0.0
    %3362 = vmatprep.subr.mxu0 0.0
    %3363 = vmatpush1.xpose.msra.mxu0 0.0
    %3364 = vmatprep.subr.mxu0 0.0
    %3365 = vmatpush1.xpose.msra.mxu0 0.0
    %3366 = vmatprep.subr.mxu0 0.0
    %3367 = vmatpush1.xpose.msra.mxu0 0.0
    %3368 = vmatprep.subr.mxu0 0.0
    %3369 = vmatpush1.xpose.msra.mxu0 0.0
    %3370 = vmatprep.subr.mxu0 0.0
    %3371 = vmatpush1.xpose.msra.mxu0 0.0
    %3372 = vmatprep.subr.mxu0 0.0
    %3373 = vmatpush1.xpose.msra.mxu0 %v3342
    %3374 = vmatprep.subr.mxu0 0.0
    %3375 = vmatpush1.xpose.msra.mxu0 %v3340
    %3376 = vmatprep.subr.mxu0 0.0
    %3377 = vmatpush2.xpose.msra.mxu0 0.0
    %3378 = vmatprep.subr.mxu0 0.0
    %3379 = vmatpush2.xpose.msra.mxu0 0.0
    %3380 = vmatprep.subr.mxu0 0.0
    %3381 = vmatpush2.xpose.msra.mxu0 0.0
    %3382 = vmatprep.subr.mxu0 0.0
    %3383 = vmatpush2.xpose.msra.mxu0 0.0
    %3384 = vmatprep.subr.mxu0 0.0
    %3385 = vmatpush2.xpose.msra.mxu0 0.0
    %3386 = vmatprep.subr.mxu0 0.0
    %3387 = vmatpush2.xpose.msra.mxu0 0.0
    %3388 = vmatprep.subr.mxu0 0.0
    %3389 = vmatpush2.xpose.msra.mxu0 0.0
    %3390 = vmatprep.subr.mxu0 0.0
    %3391 = vmatpush2.xpose.msra.mxu0 0.0
    %3392 = vmatprep.subr.mxu0 0.0
    %3393 = vmatpush2.xpose.msra.mxu0 0.0
    %3394 = vmatprep.subr.mxu0 0.0
    %3395 = vmatpush2.xpose.msra.mxu0 0.0
    %3396 = vmatprep.subr.mxu0 0.0
    %3397 = vmatpush2.xpose.msra.mxu0 0.0
    %3398 = vmatprep.subr.mxu0 0.0
    %3399 = vmatpush2.xpose.msra.mxu0 0.0
    %3400 = vmatprep.subr.mxu0 0.0
    %3401 = vmatpush2.xpose.msra.mxu0 0.0
    %3402 = vmatprep.subr.mxu0 0.0
    %3403 = vmatpush2.xpose.msra.mxu0 0.0
    %3404 = vmatprep.subr.mxu0 0.0
    %3405 = vmatpush2.xpose.msra.mxu0 0.0
    %3406 = vmatprep.subr.mxu0 0.0
    %3407 = vmatpush2.xpose.msra.mxu0 0.0
    %3408 = vmatprep.mubr.f32.mxu0 0.0
    %3409 = vmatmul.mubr.f32.gmra.mxu0 %v3336
    %v3410 = vpop.f32.mrf.mxu0
    %v3411 = vadd.f32 0.0, %v3410
    %v3412 = vpop.f32.mrf.mxu0
    %3413 = vmatprep.mubr.f32.mxu0 0.0
    %3414 = vmatmul.mubr.f32.gmra.mxu0 %v3338
    %v3415 = vpop.f32.mrf.mxu0
    %v3416 = vadd.f32 0.0, %v3415
    %v3417 = vpop.f32.mrf.mxu0
    %3418 = vdwg.mxu0
    %3419 = vrot.lane.b32.xlu0 %v2431, 112
    %v3420 = vpop.permute.xlu0 %3419
    %3421 = vrot.lane.b32.xlu0 %v2436, 112
    %v3422 = vpop.permute.xlu0 %3421
    %3423 = vrot.lane.b32.xlu0 %v2431, 80
    %v3424 = vpop.permute.xlu0 %3423
    %3425 = vrot.lane.b32.xlu0 %v2436, 80
    %v3426 = vpop.permute.xlu0 %3425
    %v3427 = vsel %vm303, %v3420, 0
    %v3429 = vsel %vm303, %v3422, 0
    %v3431 = vsel %vm303, %v3424, 0
    %v3433 = vsel %vm303, %v3426, 0
    %3435 = vmatprep.subr.mxu0 0.0
    %3436 = vmatpush1.xpose.msra.mxu0 0.0
    %3437 = vmatprep.subr.mxu0 0.0
    %3438 = vmatpush1.xpose.msra.mxu0 0.0
    %3439 = vmatprep.subr.mxu0 0.0
    %3440 = vmatpush1.xpose.msra.mxu0 0.0
    %3441 = vmatprep.subr.mxu0 0.0
    %3442 = vmatpush1.xpose.msra.mxu0 0.0
    %3443 = vmatprep.subr.mxu0 0.0
    %3444 = vmatpush1.xpose.msra.mxu0 0.0
    %3445 = vmatprep.subr.mxu0 0.0
    %3446 = vmatpush1.xpose.msra.mxu0 0.0
    %3447 = vmatprep.subr.mxu0 0.0
    %3448 = vmatpush1.xpose.msra.mxu0 0.0
    %3449 = vmatprep.subr.mxu0 0.0
    %3450 = vmatpush1.xpose.msra.mxu0 0.0
    %3451 = vmatprep.subr.mxu0 0.0
    %3452 = vmatpush1.xpose.msra.mxu0 0.0
    %3453 = vmatprep.subr.mxu0 0.0
    %3454 = vmatpush1.xpose.msra.mxu0 0.0
    %3455 = vmatprep.subr.mxu0 0.0
    %3456 = vmatpush1.xpose.msra.mxu0 0.0
    %3457 = vmatprep.subr.mxu0 0.0
    %3458 = vmatpush1.xpose.msra.mxu0 0.0
    %3459 = vmatprep.subr.mxu0 0.0
    %3460 = vmatpush1.xpose.msra.mxu0 0.0
    %3461 = vmatprep.subr.mxu0 0.0
    %3462 = vmatpush1.xpose.msra.mxu0 0.0
    %3463 = vmatprep.subr.mxu0 0.0
    %3464 = vmatpush1.xpose.msra.mxu0 %v3433
    %3465 = vmatprep.subr.mxu0 0.0
    %3466 = vmatpush1.xpose.msra.mxu0 %v3431
    %3467 = vmatprep.subr.mxu0 0.0
    %3468 = vmatpush2.xpose.msra.mxu0 0.0
    %3469 = vmatprep.subr.mxu0 0.0
    %3470 = vmatpush2.xpose.msra.mxu0 0.0
    %3471 = vmatprep.subr.mxu0 0.0
    %3472 = vmatpush2.xpose.msra.mxu0 0.0
    %3473 = vmatprep.subr.mxu0 0.0
    %3474 = vmatpush2.xpose.msra.mxu0 0.0
    %3475 = vmatprep.subr.mxu0 0.0
    %3476 = vmatpush2.xpose.msra.mxu0 0.0
    %3477 = vmatprep.subr.mxu0 0.0
    %3478 = vmatpush2.xpose.msra.mxu0 0.0
    %3479 = vmatprep.subr.mxu0 0.0
    %3480 = vmatpush2.xpose.msra.mxu0 0.0
    %3481 = vmatprep.subr.mxu0 0.0
    %3482 = vmatpush2.xpose.msra.mxu0 0.0
    %3483 = vmatprep.subr.mxu0 0.0
    %3484 = vmatpush2.xpose.msra.mxu0 0.0
    %3485 = vmatprep.subr.mxu0 0.0
    %3486 = vmatpush2.xpose.msra.mxu0 0.0
    %3487 = vmatprep.subr.mxu0 0.0
    %3488 = vmatpush2.xpose.msra.mxu0 0.0
    %3489 = vmatprep.subr.mxu0 0.0
    %3490 = vmatpush2.xpose.msra.mxu0 0.0
    %3491 = vmatprep.subr.mxu0 0.0
    %3492 = vmatpush2.xpose.msra.mxu0 0.0
    %3493 = vmatprep.subr.mxu0 0.0
    %3494 = vmatpush2.xpose.msra.mxu0 0.0
    %3495 = vmatprep.subr.mxu0 0.0
    %3496 = vmatpush2.xpose.msra.mxu0 0.0
    %3497 = vmatprep.subr.mxu0 0.0
    %3498 = vmatpush2.xpose.msra.mxu0 0.0
    %3499 = vmatprep.mubr.f32.mxu0 0.0
    %3500 = vmatmul.mubr.f32.gmra.mxu0 %v3427
    %v3501 = vpop.f32.mrf.mxu0
    %v3502 = vadd.f32 0.0, %v3501
    %v3503 = vpop.f32.mrf.mxu0
    %3504 = vmatprep.mubr.f32.mxu0 0.0
    %3505 = vmatmul.mubr.f32.gmra.mxu0 %v3429
    %v3506 = vpop.f32.mrf.mxu0
    %v3507 = vadd.f32 0.0, %v3506
    %v3508 = vpop.f32.mrf.mxu0
    %3509 = vdwg.mxu0
    %v3510 = vmul.f32 %v3411, 0.35355338
    %v3511 = vmul.f32 %v3416, 0.35355338
    %v3512 = vmul.f32 %v3502, 0.35355338
    %v3513 = vmul.f32 %v3507, 0.35355338
    %v3514 = vadd.f32 %v3510, %v71
    %v3515 = vadd.f32 %v3511, %v71
    %v3516 = vadd.f32 %v3512, %v71
    %v3517 = vadd.f32 %v3513, %v71
    %v3518 = vsel %vm484, %v3514, -inf
    %3519 = vmax.xlane.f32.xlu0 %v3518
    %v3520 = vpop.xlane.xlu0 %3519
    %v3521 = vsel %vm484, %v3515, -inf
    %3522 = vmax.xlane.f32.xlu0 %v3521
    %v3523 = vpop.xlane.xlu0 %3522
    %v3524 = vsel %vm484, %v3516, -inf
    %3525 = vmax.xlane.f32.xlu0 %v3524
    %v3526 = vpop.xlane.xlu0 %3525
    %v3527 = vsel %vm484, %v3517, -inf
    %3528 = vmax.xlane.f32.xlu0 %v3527
    %v3529 = vpop.xlane.xlu0 %3528
    %v3530 = vsub.f32 %v3514, %v3520
    %v3531 = vsub.f32 %v3515, %v3523
    %v3532 = vsub.f32 %v3516, %v3526
    %v3533 = vsub.f32 %v3517, %v3529
    %v3534 = vmul.f32 %v3530, 1.442695
    %v3535 = vpow.pop %v3534
    %v3536 = vmul.f32 %v3531, 1.442695
    %v3537 = vpow.pop %v3536
    %v3538 = vmul.f32 %v3532, 1.442695
    %v3539 = vpow.pop %v3538
    %v3540 = vmul.f32 %v3533, 1.442695
    %v3541 = vpow.pop %v3540
    %v3542 = vsel %vm484, %v3535, 0.0
    %3543 = vadd.xlane.f32.xlu0 %v3542
    %v3544 = vpop.xlane.xlu0 %3543
    %v3545 = vsel %vm484, %v3537, 0.0
    %3546 = vadd.xlane.f32.xlu0 %v3545
    %v3547 = vpop.xlane.xlu0 %3546
    %v3548 = vsel %vm484, %v3539, 0.0
    %3549 = vadd.xlane.f32.xlu0 %v3548
    %v3550 = vpop.xlane.xlu0 %3549
    %v3551 = vsel %vm484, %v3541, 0.0
    %3552 = vadd.xlane.f32.xlu0 %v3551
    %v3553 = vpop.xlane.xlu0 %3552
    %v3554 = vrcp.pop %v3544
    %v3555 = vrcp.pop %v3547
    %v3556 = vrcp.pop %v3550
    %v3557 = vrcp.pop %v3553
    %v3558 = vmul.f32 %v3535, %v3554
    %v3559 = vmul.f32 %v3537, %v3555
    %v3560 = vmul.f32 %v3539, %v3556
    %v3561 = vmul.f32 %v3541, %v3557
    %3562 = vrot.lane.b32.xlu0 %v2506, 64
    %v3563 = vpop.permute.xlu0 %3562
    %3564 = vrot.lane.b32.xlu0 %v2511, 64
    %v3565 = vpop.permute.xlu0 %3564
    %v3569 = vsel %vm484, %v3558, 0
    %v3572 = vsel %vm484, %v3559, 0
    %3574 = vmatprep.subr.mxu0 0.0
    %3575 = vmatpush1.msra.mxu0 0.0
    %3576 = vmatprep.subr.mxu0 0.0
    %3577 = vmatpush1.msra.mxu0 0.0
    %3578 = vmatprep.subr.mxu0 0.0
    %3579 = vmatpush1.msra.mxu0 0.0
    %3580 = vmatprep.subr.mxu0 0.0
    %3581 = vmatpush1.msra.mxu0 0.0
    %3582 = vmatprep.subr.mxu0 0.0
    %3583 = vmatpush1.msra.mxu0 0.0
    %3584 = vmatprep.subr.mxu0 0.0
    %3585 = vmatpush1.msra.mxu0 0.0
    %3586 = vmatprep.subr.mxu0 0.0
    %3587 = vmatpush1.msra.mxu0 0.0
    %3588 = vmatprep.subr.mxu0 0.0
    %3589 = vmatpush1.msra.mxu0 0.0
    %3590 = vmatprep.subr.mxu0 0.0
    %3591 = vmatpush1.msra.mxu0 0.0
    %3592 = vmatprep.subr.mxu0 0.0
    %3593 = vmatpush1.msra.mxu0 0.0
    %3594 = vmatprep.subr.mxu0 0.0
    %3595 = vmatpush1.msra.mxu0 0.0
    %3596 = vmatprep.subr.mxu0 0.0
    %3597 = vmatpush1.msra.mxu0 0.0
    %3598 = vmatprep.subr.mxu0 0.0
    %3599 = vmatpush1.msra.mxu0 0.0
    %3600 = vmatprep.subr.mxu0 0.0
    %3601 = vmatpush1.msra.mxu0 0.0
    %3602 = vmatprep.subr.mxu0 0.0
    %3603 = vmatpush1.msra.mxu0 %v3565
    %3604 = vmatprep.subr.mxu0 0.0
    %3605 = vmatpush1.msra.mxu0 %v3563
    %3606 = vmatprep.subr.mxu0 0.0
    %3607 = vmatpush2.msra.mxu0 0.0
    %3608 = vmatprep.subr.mxu0 0.0
    %3609 = vmatpush2.msra.mxu0 0.0
    %3610 = vmatprep.subr.mxu0 0.0
    %3611 = vmatpush2.msra.mxu0 0.0
    %3612 = vmatprep.subr.mxu0 0.0
    %3613 = vmatpush2.msra.mxu0 0.0
    %3614 = vmatprep.subr.mxu0 0.0
    %3615 = vmatpush2.msra.mxu0 0.0
    %3616 = vmatprep.subr.mxu0 0.0
    %3617 = vmatpush2.msra.mxu0 0.0
    %3618 = vmatprep.subr.mxu0 0.0
    %3619 = vmatpush2.msra.mxu0 0.0
    %3620 = vmatprep.subr.mxu0 0.0
    %3621 = vmatpush2.msra.mxu0 0.0
    %3622 = vmatprep.subr.mxu0 0.0
    %3623 = vmatpush2.msra.mxu0 0.0
    %3624 = vmatprep.subr.mxu0 0.0
    %3625 = vmatpush2.msra.mxu0 0.0
    %3626 = vmatprep.subr.mxu0 0.0
    %3627 = vmatpush2.msra.mxu0 0.0
    %3628 = vmatprep.subr.mxu0 0.0
    %3629 = vmatpush2.msra.mxu0 0.0
    %3630 = vmatprep.subr.mxu0 0.0
    %3631 = vmatpush2.msra.mxu0 0.0
    %3632 = vmatprep.subr.mxu0 0.0
    %3633 = vmatpush2.msra.mxu0 0.0
    %3634 = vmatprep.subr.mxu0 0.0
    %3635 = vmatpush2.msra.mxu0 0.0
    %3636 = vmatprep.subr.mxu0 0.0
    %3637 = vmatpush2.msra.mxu0 0.0
    %3638 = vmatprep.mubr.f32.mxu0 0.0
    %3639 = vmatmul.mubr.f32.gmra.mxu0 %v3569
    %v3640 = vpop.f32.mrf.mxu0
    %v3641 = vadd.f32 0.0, %v3640
    %v3642 = vpop.f32.mrf.mxu0
    %3643 = vmatprep.mubr.f32.mxu0 0.0
    %3644 = vmatmul.mubr.f32.gmra.mxu0 %v3572
    %v3645 = vpop.f32.mrf.mxu0
    %v3646 = vadd.f32 0.0, %v3645
    %v3647 = vpop.f32.mrf.mxu0
    %3648 = vdwg.mxu0
    %3649 = vrot.lane.b32.xlu0 %v2516, 64
    %v3650 = vpop.permute.xlu0 %3649
    %3651 = vrot.lane.b32.xlu0 %v2521, 64
    %v3652 = vpop.permute.xlu0 %3651
    %v3656 = vsel %vm484, %v3560, 0
    %v3659 = vsel %vm484, %v3561, 0
    %3661 = vmatprep.subr.mxu0 0.0
    %3662 = vmatpush1.msra.mxu0 0.0
    %3663 = vmatprep.subr.mxu0 0.0
    %3664 = vmatpush1.msra.mxu0 0.0
    %3665 = vmatprep.subr.mxu0 0.0
    %3666 = vmatpush1.msra.mxu0 0.0
    %3667 = vmatprep.subr.mxu0 0.0
    %3668 = vmatpush1.msra.mxu0 0.0
    %3669 = vmatprep.subr.mxu0 0.0
    %3670 = vmatpush1.msra.mxu0 0.0
    %3671 = vmatprep.subr.mxu0 0.0
    %3672 = vmatpush1.msra.mxu0 0.0
    %3673 = vmatprep.subr.mxu0 0.0
    %3674 = vmatpush1.msra.mxu0 0.0
    %3675 = vmatprep.subr.mxu0 0.0
    %3676 = vmatpush1.msra.mxu0 0.0
    %3677 = vmatprep.subr.mxu0 0.0
    %3678 = vmatpush1.msra.mxu0 0.0
    %3679 = vmatprep.subr.mxu0 0.0
    %3680 = vmatpush1.msra.mxu0 0.0
    %3681 = vmatprep.subr.mxu0 0.0
    %3682 = vmatpush1.msra.mxu0 0.0
    %3683 = vmatprep.subr.mxu0 0.0
    %3684 = vmatpush1.msra.mxu0 0.0
    %3685 = vmatprep.subr.mxu0 0.0
    %3686 = vmatpush1.msra.mxu0 0.0
    %3687 = vmatprep.subr.mxu0 0.0
    %3688 = vmatpush1.msra.mxu0 0.0
    %3689 = vmatprep.subr.mxu0 0.0
    %3690 = vmatpush1.msra.mxu0 %v3652
    %3691 = vmatprep.subr.mxu0 0.0
    %3692 = vmatpush1.msra.mxu0 %v3650
    %3693 = vmatprep.subr.mxu0 0.0
    %3694 = vmatpush2.msra.mxu0 0.0
    %3695 = vmatprep.subr.mxu0 0.0
    %3696 = vmatpush2.msra.mxu0 0.0
    %3697 = vmatprep.subr.mxu0 0.0
    %3698 = vmatpush2.msra.mxu0 0.0
    %3699 = vmatprep.subr.mxu0 0.0
    %3700 = vmatpush2.msra.mxu0 0.0
    %3701 = vmatprep.subr.mxu0 0.0
    %3702 = vmatpush2.msra.mxu0 0.0
    %3703 = vmatprep.subr.mxu0 0.0
    %3704 = vmatpush2.msra.mxu0 0.0
    %3705 = vmatprep.subr.mxu0 0.0
    %3706 = vmatpush2.msra.mxu0 0.0
    %3707 = vmatprep.subr.mxu0 0.0
    %3708 = vmatpush2.msra.mxu0 0.0
    %3709 = vmatprep.subr.mxu0 0.0
    %3710 = vmatpush2.msra.mxu0 0.0
    %3711 = vmatprep.subr.mxu0 0.0
    %3712 = vmatpush2.msra.mxu0 0.0
    %3713 = vmatprep.subr.mxu0 0.0
    %3714 = vmatpush2.msra.mxu0 0.0
    %3715 = vmatprep.subr.mxu0 0.0
    %3716 = vmatpush2.msra.mxu0 0.0
    %3717 = vmatprep.subr.mxu0 0.0
    %3718 = vmatpush2.msra.mxu0 0.0
    %3719 = vmatprep.subr.mxu0 0.0
    %3720 = vmatpush2.msra.mxu0 0.0
    %3721 = vmatprep.subr.mxu0 0.0
    %3722 = vmatpush2.msra.mxu0 0.0
    %3723 = vmatprep.subr.mxu0 0.0
    %3724 = vmatpush2.msra.mxu0 0.0
    %3725 = vmatprep.mubr.f32.mxu0 0.0
    %3726 = vmatmul.mubr.f32.gmra.mxu0 %v3656
    %v3727 = vpop.f32.mrf.mxu0
    %v3728 = vadd.f32 0.0, %v3727
    %v3729 = vpop.f32.mrf.mxu0
    %3730 = vmatprep.mubr.f32.mxu0 0.0
    %3731 = vmatmul.mubr.f32.gmra.mxu0 %v3659
    %v3732 = vpop.f32.mrf.mxu0
    %v3733 = vadd.f32 0.0, %v3732
    %v3734 = vpop.f32.mrf.mxu0
    %3735 = vdwg.mxu0
    %v3736 = vadd.f32 %v3239, %v3641
    %v3737 = vadd.f32 %v3244, %v3646
    %v3738 = vadd.f32 %v3320, %v3728
    %v3739 = vadd.f32 %v3325, %v3733
    %3740 = vrot.lane.b32.xlu0 %v2421, 104
    %v3741 = vpop.permute.xlu0 %3740
    %3742 = vrot.lane.b32.xlu0 %v2426, 104
    %v3743 = vpop.permute.xlu0 %3742
    %3744 = vrot.lane.b32.xlu0 %v2421, 72
    %v3745 = vpop.permute.xlu0 %3744
    %3746 = vrot.lane.b32.xlu0 %v2426, 72
    %v3747 = vpop.permute.xlu0 %3746
    %v3748 = vsel %vm303, %v3741, 0
    %v3750 = vsel %vm303, %v3743, 0
    %v3752 = vsel %vm303, %v3745, 0
    %v3754 = vsel %vm303, %v3747, 0
    %3756 = vmatprep.subr.mxu0 0.0
    %3757 = vmatpush1.xpose.msra.mxu0 0.0
    %3758 = vmatprep.subr.mxu0 0.0
    %3759 = vmatpush1.xpose.msra.mxu0 0.0
    %3760 = vmatprep.subr.mxu0 0.0
    %3761 = vmatpush1.xpose.msra.mxu0 0.0
    %3762 = vmatprep.subr.mxu0 0.0
    %3763 = vmatpush1.xpose.msra.mxu0 0.0
    %3764 = vmatprep.subr.mxu0 0.0
    %3765 = vmatpush1.xpose.msra.mxu0 0.0
    %3766 = vmatprep.subr.mxu0 0.0
    %3767 = vmatpush1.xpose.msra.mxu0 0.0
    %3768 = vmatprep.subr.mxu0 0.0
    %3769 = vmatpush1.xpose.msra.mxu0 0.0
    %3770 = vmatprep.subr.mxu0 0.0
    %3771 = vmatpush1.xpose.msra.mxu0 0.0
    %3772 = vmatprep.subr.mxu0 0.0
    %3773 = vmatpush1.xpose.msra.mxu0 0.0
    %3774 = vmatprep.subr.mxu0 0.0
    %3775 = vmatpush1.xpose.msra.mxu0 0.0
    %3776 = vmatprep.subr.mxu0 0.0
    %3777 = vmatpush1.xpose.msra.mxu0 0.0
    %3778 = vmatprep.subr.mxu0 0.0
    %3779 = vmatpush1.xpose.msra.mxu0 0.0
    %3780 = vmatprep.subr.mxu0 0.0
    %3781 = vmatpush1.xpose.msra.mxu0 0.0
    %3782 = vmatprep.subr.mxu0 0.0
    %3783 = vmatpush1.xpose.msra.mxu0 0.0
    %3784 = vmatprep.subr.mxu0 0.0
    %3785 = vmatpush1.xpose.msra.mxu0 %v3754
    %3786 = vmatprep.subr.mxu0 0.0
    %3787 = vmatpush1.xpose.msra.mxu0 %v3752
    %3788 = vmatprep.subr.mxu0 0.0
    %3789 = vmatpush2.xpose.msra.mxu0 0.0
    %3790 = vmatprep.subr.mxu0 0.0
    %3791 = vmatpush2.xpose.msra.mxu0 0.0
    %3792 = vmatprep.subr.mxu0 0.0
    %3793 = vmatpush2.xpose.msra.mxu0 0.0
    %3794 = vmatprep.subr.mxu0 0.0
    %3795 = vmatpush2.xpose.msra.mxu0 0.0
    %3796 = vmatprep.subr.mxu0 0.0
    %3797 = vmatpush2.xpose.msra.mxu0 0.0
    %3798 = vmatprep.subr.mxu0 0.0
    %3799 = vmatpush2.xpose.msra.mxu0 0.0
    %3800 = vmatprep.subr.mxu0 0.0
    %3801 = vmatpush2.xpose.msra.mxu0 0.0
    %3802 = vmatprep.subr.mxu0 0.0
    %3803 = vmatpush2.xpose.msra.mxu0 0.0
    %3804 = vmatprep.subr.mxu0 0.0
    %3805 = vmatpush2.xpose.msra.mxu0 0.0
    %3806 = vmatprep.subr.mxu0 0.0
    %3807 = vmatpush2.xpose.msra.mxu0 0.0
    %3808 = vmatprep.subr.mxu0 0.0
    %3809 = vmatpush2.xpose.msra.mxu0 0.0
    %3810 = vmatprep.subr.mxu0 0.0
    %3811 = vmatpush2.xpose.msra.mxu0 0.0
    %3812 = vmatprep.subr.mxu0 0.0
    %3813 = vmatpush2.xpose.msra.mxu0 0.0
    %3814 = vmatprep.subr.mxu0 0.0
    %3815 = vmatpush2.xpose.msra.mxu0 0.0
    %3816 = vmatprep.subr.mxu0 0.0
    %3817 = vmatpush2.xpose.msra.mxu0 0.0
    %3818 = vmatprep.subr.mxu0 0.0
    %3819 = vmatpush2.xpose.msra.mxu0 0.0
    %3820 = vmatprep.mubr.f32.mxu0 0.0
    %3821 = vmatmul.mubr.f32.gmra.mxu0 %v3748
    %v3822 = vpop.f32.mrf.mxu0
    %v3823 = vadd.f32 0.0, %v3822
    %v3824 = vpop.f32.mrf.mxu0
    %3825 = vmatprep.mubr.f32.mxu0 0.0
    %3826 = vmatmul.mubr.f32.gmra.mxu0 %v3750
    %v3827 = vpop.f32.mrf.mxu0
    %v3828 = vadd.f32 0.0, %v3827
    %v3829 = vpop.f32.mrf.mxu0
    %3830 = vdwg.mxu0
    %3831 = vrot.lane.b32.xlu0 %v2431, 104
    %v3832 = vpop.permute.xlu0 %3831
    %3833 = vrot.lane.b32.xlu0 %v2436, 104
    %v3834 = vpop.permute.xlu0 %3833
    %3835 = vrot.lane.b32.xlu0 %v2431, 72
    %v3836 = vpop.permute.xlu0 %3835
    %3837 = vrot.lane.b32.xlu0 %v2436, 72
    %v3838 = vpop.permute.xlu0 %3837
    %v3839 = vsel %vm303, %v3832, 0
    %v3841 = vsel %vm303, %v3834, 0
    %v3843 = vsel %vm303, %v3836, 0
    %v3845 = vsel %vm303, %v3838, 0
    %3847 = vmatprep.subr.mxu0 0.0
    %3848 = vmatpush1.xpose.msra.mxu0 0.0
    %3849 = vmatprep.subr.mxu0 0.0
    %3850 = vmatpush1.xpose.msra.mxu0 0.0
    %3851 = vmatprep.subr.mxu0 0.0
    %3852 = vmatpush1.xpose.msra.mxu0 0.0
    %3853 = vmatprep.subr.mxu0 0.0
    %3854 = vmatpush1.xpose.msra.mxu0 0.0
    %3855 = vmatprep.subr.mxu0 0.0
    %3856 = vmatpush1.xpose.msra.mxu0 0.0
    %3857 = vmatprep.subr.mxu0 0.0
    %3858 = vmatpush1.xpose.msra.mxu0 0.0
    %3859 = vmatprep.subr.mxu0 0.0
    %3860 = vmatpush1.xpose.msra.mxu0 0.0
    %3861 = vmatprep.subr.mxu0 0.0
    %3862 = vmatpush1.xpose.msra.mxu0 0.0
    %3863 = vmatprep.subr.mxu0 0.0
    %3864 = vmatpush1.xpose.msra.mxu0 0.0
    %3865 = vmatprep.subr.mxu0 0.0
    %3866 = vmatpush1.xpose.msra.mxu0 0.0
    %3867 = vmatprep.subr.mxu0 0.0
    %3868 = vmatpush1.xpose.msra.mxu0 0.0
    %3869 = vmatprep.subr.mxu0 0.0
    %3870 = vmatpush1.xpose.msra.mxu0 0.0
    %3871 = vmatprep.subr.mxu0 0.0
    %3872 = vmatpush1.xpose.msra.mxu0 0.0
    %3873 = vmatprep.subr.mxu0 0.0
    %3874 = vmatpush1.xpose.msra.mxu0 0.0
    %3875 = vmatprep.subr.mxu0 0.0
    %3876 = vmatpush1.xpose.msra.mxu0 %v3845
    %3877 = vmatprep.subr.mxu0 0.0
    %3878 = vmatpush1.xpose.msra.mxu0 %v3843
    %3879 = vmatprep.subr.mxu0 0.0
    %3880 = vmatpush2.xpose.msra.mxu0 0.0
    %3881 = vmatprep.subr.mxu0 0.0
    %3882 = vmatpush2.xpose.msra.mxu0 0.0
    %3883 = vmatprep.subr.mxu0 0.0
    %3884 = vmatpush2.xpose.msra.mxu0 0.0
    %3885 = vmatprep.subr.mxu0 0.0
    %3886 = vmatpush2.xpose.msra.mxu0 0.0
    %3887 = vmatprep.subr.mxu0 0.0
    %3888 = vmatpush2.xpose.msra.mxu0 0.0
    %3889 = vmatprep.subr.mxu0 0.0
    %3890 = vmatpush2.xpose.msra.mxu0 0.0
    %3891 = vmatprep.subr.mxu0 0.0
    %3892 = vmatpush2.xpose.msra.mxu0 0.0
    %3893 = vmatprep.subr.mxu0 0.0
    %3894 = vmatpush2.xpose.msra.mxu0 0.0
    %3895 = vmatprep.subr.mxu0 0.0
    %3896 = vmatpush2.xpose.msra.mxu0 0.0
    %3897 = vmatprep.subr.mxu0 0.0
    %3898 = vmatpush2.xpose.msra.mxu0 0.0
    %3899 = vmatprep.subr.mxu0 0.0
    %3900 = vmatpush2.xpose.msra.mxu0 0.0
    %3901 = vmatprep.subr.mxu0 0.0
    %3902 = vmatpush2.xpose.msra.mxu0 0.0
    %3903 = vmatprep.subr.mxu0 0.0
    %3904 = vmatpush2.xpose.msra.mxu0 0.0
    %3905 = vmatprep.subr.mxu0 0.0
    %3906 = vmatpush2.xpose.msra.mxu0 0.0
    %3907 = vmatprep.subr.mxu0 0.0
    %3908 = vmatpush2.xpose.msra.mxu0 0.0
    %3909 = vmatprep.subr.mxu0 0.0
    %3910 = vmatpush2.xpose.msra.mxu0 0.0
    %3911 = vmatprep.mubr.f32.mxu0 0.0
    %3912 = vmatmul.mubr.f32.gmra.mxu0 %v3839
    %v3913 = vpop.f32.mrf.mxu0
    %v3914 = vadd.f32 0.0, %v3913
    %v3915 = vpop.f32.mrf.mxu0
    %3916 = vmatprep.mubr.f32.mxu0 0.0
    %3917 = vmatmul.mubr.f32.gmra.mxu0 %v3841
    %v3918 = vpop.f32.mrf.mxu0
    %v3919 = vadd.f32 0.0, %v3918
    %v3920 = vpop.f32.mrf.mxu0
    %3921 = vdwg.mxu0
    %v3922 = vmul.f32 %v3823, 0.35355338
    %v3923 = vmul.f32 %v3828, 0.35355338
    %v3924 = vmul.f32 %v3914, 0.35355338
    %v3925 = vmul.f32 %v3919, 0.35355338
    %v3926 = vadd.f32 %v3922, %v71
    %v3927 = vadd.f32 %v3923, %v71
    %v3928 = vadd.f32 %v3924, %v71
    %v3929 = vadd.f32 %v3925, %v71
    %v3930 = vsel %vm484, %v3926, -inf
    %3931 = vmax.xlane.f32.xlu0 %v3930
    %v3932 = vpop.xlane.xlu0 %3931
    %v3933 = vsel %vm484, %v3927, -inf
    %3934 = vmax.xlane.f32.xlu0 %v3933
    %v3935 = vpop.xlane.xlu0 %3934
    %v3936 = vsel %vm484, %v3928, -inf
    %3937 = vmax.xlane.f32.xlu0 %v3936
    %v3938 = vpop.xlane.xlu0 %3937
    %v3939 = vsel %vm484, %v3929, -inf
    %3940 = vmax.xlane.f32.xlu0 %v3939
    %v3941 = vpop.xlane.xlu0 %3940
    %v3942 = vsub.f32 %v3926, %v3932
    %v3943 = vsub.f32 %v3927, %v3935
    %v3944 = vsub.f32 %v3928, %v3938
    %v3945 = vsub.f32 %v3929, %v3941
    %v3946 = vmul.f32 %v3942, 1.442695
    %v3947 = vpow.pop %v3946
    %v3948 = vmul.f32 %v3943, 1.442695
    %v3949 = vpow.pop %v3948
    %v3950 = vmul.f32 %v3944, 1.442695
    %v3951 = vpow.pop %v3950
    %v3952 = vmul.f32 %v3945, 1.442695
    %v3953 = vpow.pop %v3952
    %v3954 = vsel %vm484, %v3947, 0.0
    %3955 = vadd.xlane.f32.xlu0 %v3954
    %v3956 = vpop.xlane.xlu0 %3955
    %v3957 = vsel %vm484, %v3949, 0.0
    %3958 = vadd.xlane.f32.xlu0 %v3957
    %v3959 = vpop.xlane.xlu0 %3958
    %v3960 = vsel %vm484, %v3951, 0.0
    %3961 = vadd.xlane.f32.xlu0 %v3960
    %v3962 = vpop.xlane.xlu0 %3961
    %v3963 = vsel %vm484, %v3953, 0.0
    %3964 = vadd.xlane.f32.xlu0 %v3963
    %v3965 = vpop.xlane.xlu0 %3964
    %v3966 = vrcp.pop %v3956
    %v3967 = vrcp.pop %v3959
    %v3968 = vrcp.pop %v3962
    %v3969 = vrcp.pop %v3965
    %v3970 = vmul.f32 %v3947, %v3966
    %v3971 = vmul.f32 %v3949, %v3967
    %v3972 = vmul.f32 %v3951, %v3968
    %v3973 = vmul.f32 %v3953, %v3969
    %3974 = vrot.lane.b32.xlu0 %v2506, 32
    %v3975 = vpop.permute.xlu0 %3974
    %3976 = vrot.lane.b32.xlu0 %v2511, 32
    %v3977 = vpop.permute.xlu0 %3976
    %v3981 = vsel %vm484, %v3970, 0
    %v3984 = vsel %vm484, %v3971, 0
    %3986 = vmatprep.subr.mxu0 0.0
    %3987 = vmatpush1.msra.mxu0 0.0
    %3988 = vmatprep.subr.mxu0 0.0
    %3989 = vmatpush1.msra.mxu0 0.0
    %3990 = vmatprep.subr.mxu0 0.0
    %3991 = vmatpush1.msra.mxu0 0.0
    %3992 = vmatprep.subr.mxu0 0.0
    %3993 = vmatpush1.msra.mxu0 0.0
    %3994 = vmatprep.subr.mxu0 0.0
    %3995 = vmatpush1.msra.mxu0 0.0
    %3996 = vmatprep.subr.mxu0 0.0
    %3997 = vmatpush1.msra.mxu0 0.0
    %3998 = vmatprep.subr.mxu0 0.0
    %3999 = vmatpush1.msra.mxu0 0.0
    %4000 = vmatprep.subr.mxu0 0.0
    %4001 = vmatpush1.msra.mxu0 0.0
    %4002 = vmatprep.subr.mxu0 0.0
    %4003 = vmatpush1.msra.mxu0 0.0
    %4004 = vmatprep.subr.mxu0 0.0
    %4005 = vmatpush1.msra.mxu0 0.0
    %4006 = vmatprep.subr.mxu0 0.0
    %4007 = vmatpush1.msra.mxu0 0.0
    %4008 = vmatprep.subr.mxu0 0.0
    %4009 = vmatpush1.msra.mxu0 0.0
    %4010 = vmatprep.subr.mxu0 0.0
    %4011 = vmatpush1.msra.mxu0 0.0
    %4012 = vmatprep.subr.mxu0 0.0
    %4013 = vmatpush1.msra.mxu0 0.0
    %4014 = vmatprep.subr.mxu0 0.0
    %4015 = vmatpush1.msra.mxu0 %v3977
    %4016 = vmatprep.subr.mxu0 0.0
    %4017 = vmatpush1.msra.mxu0 %v3975
    %4018 = vmatprep.subr.mxu0 0.0
    %4019 = vmatpush2.msra.mxu0 0.0
    %4020 = vmatprep.subr.mxu0 0.0
    %4021 = vmatpush2.msra.mxu0 0.0
    %4022 = vmatprep.subr.mxu0 0.0
    %4023 = vmatpush2.msra.mxu0 0.0
    %4024 = vmatprep.subr.mxu0 0.0
    %4025 = vmatpush2.msra.mxu0 0.0
    %4026 = vmatprep.subr.mxu0 0.0
    %4027 = vmatpush2.msra.mxu0 0.0
    %4028 = vmatprep.subr.mxu0 0.0
    %4029 = vmatpush2.msra.mxu0 0.0
    %4030 = vmatprep.subr.mxu0 0.0
    %4031 = vmatpush2.msra.mxu0 0.0
    %4032 = vmatprep.subr.mxu0 0.0
    %4033 = vmatpush2.msra.mxu0 0.0
    %4034 = vmatprep.subr.mxu0 0.0
    %4035 = vmatpush2.msra.mxu0 0.0
    %4036 = vmatprep.subr.mxu0 0.0
    %4037 = vmatpush2.msra.mxu0 0.0
    %4038 = vmatprep.subr.mxu0 0.0
    %4039 = vmatpush2.msra.mxu0 0.0
    %4040 = vmatprep.subr.mxu0 0.0
    %4041 = vmatpush2.msra.mxu0 0.0
    %4042 = vmatprep.subr.mxu0 0.0
    %4043 = vmatpush2.msra.mxu0 0.0
    %4044 = vmatprep.subr.mxu0 0.0
    %4045 = vmatpush2.msra.mxu0 0.0
    %4046 = vmatprep.subr.mxu0 0.0
    %4047 = vmatpush2.msra.mxu0 0.0
    %4048 = vmatprep.subr.mxu0 0.0
    %4049 = vmatpush2.msra.mxu0 0.0
    %4050 = vmatprep.mubr.f32.mxu0 0.0
    %4051 = vmatmul.mubr.f32.gmra.mxu0 %v3981
    %v4052 = vpop.f32.mrf.mxu0
    %v4053 = vadd.f32 0.0, %v4052
    %v4054 = vpop.f32.mrf.mxu0
    %4055 = vmatprep.mubr.f32.mxu0 0.0
    %4056 = vmatmul.mubr.f32.gmra.mxu0 %v3984
    %v4057 = vpop.f32.mrf.mxu0
    %v4058 = vadd.f32 0.0, %v4057
    %v4059 = vpop.f32.mrf.mxu0
    %4060 = vdwg.mxu0
    %4061 = vrot.lane.b32.xlu0 %v2516, 32
    %v4062 = vpop.permute.xlu0 %4061
    %4063 = vrot.lane.b32.xlu0 %v2521, 32
    %v4064 = vpop.permute.xlu0 %4063
    %v4068 = vsel %vm484, %v3972, 0
    %v4071 = vsel %vm484, %v3973, 0
    %4073 = vmatprep.subr.mxu0 0.0
    %4074 = vmatpush1.msra.mxu0 0.0
    %4075 = vmatprep.subr.mxu0 0.0
    %4076 = vmatpush1.msra.mxu0 0.0
    %4077 = vmatprep.subr.mxu0 0.0
    %4078 = vmatpush1.msra.mxu0 0.0
    %4079 = vmatprep.subr.mxu0 0.0
    %4080 = vmatpush1.msra.mxu0 0.0
    %4081 = vmatprep.subr.mxu0 0.0
    %4082 = vmatpush1.msra.mxu0 0.0
    %4083 = vmatprep.subr.mxu0 0.0
    %4084 = vmatpush1.msra.mxu0 0.0
    %4085 = vmatprep.subr.mxu0 0.0
    %4086 = vmatpush1.msra.mxu0 0.0
    %4087 = vmatprep.subr.mxu0 0.0
    %4088 = vmatpush1.msra.mxu0 0.0
    %4089 = vmatprep.subr.mxu0 0.0
    %4090 = vmatpush1.msra.mxu0 0.0
    %4091 = vmatprep.subr.mxu0 0.0
    %4092 = vmatpush1.msra.mxu0 0.0
    %4093 = vmatprep.subr.mxu0 0.0
    %4094 = vmatpush1.msra.mxu0 0.0
    %4095 = vmatprep.subr.mxu0 0.0
    %4096 = vmatpush1.msra.mxu0 0.0
    %4097 = vmatprep.subr.mxu0 0.0
    %4098 = vmatpush1.msra.mxu0 0.0
    %4099 = vmatprep.subr.mxu0 0.0
    %4100 = vmatpush1.msra.mxu0 0.0
    %4101 = vmatprep.subr.mxu0 0.0
    %4102 = vmatpush1.msra.mxu0 %v4064
    %4103 = vmatprep.subr.mxu0 0.0
    %4104 = vmatpush1.msra.mxu0 %v4062
    %4105 = vmatprep.subr.mxu0 0.0
    %4106 = vmatpush2.msra.mxu0 0.0
    %4107 = vmatprep.subr.mxu0 0.0
    %4108 = vmatpush2.msra.mxu0 0.0
    %4109 = vmatprep.subr.mxu0 0.0
    %4110 = vmatpush2.msra.mxu0 0.0
    %4111 = vmatprep.subr.mxu0 0.0
    %4112 = vmatpush2.msra.mxu0 0.0
    %4113 = vmatprep.subr.mxu0 0.0
    %4114 = vmatpush2.msra.mxu0 0.0
    %4115 = vmatprep.subr.mxu0 0.0
    %4116 = vmatpush2.msra.mxu0 0.0
    %4117 = vmatprep.subr.mxu0 0.0
    %4118 = vmatpush2.msra.mxu0 0.0
    %4119 = vmatprep.subr.mxu0 0.0
    %4120 = vmatpush2.msra.mxu0 0.0
    %4121 = vmatprep.subr.mxu0 0.0
    %4122 = vmatpush2.msra.mxu0 0.0
    %4123 = vmatprep.subr.mxu0 0.0
    %4124 = vmatpush2.msra.mxu0 0.0
    %4125 = vmatprep.subr.mxu0 0.0
    %4126 = vmatpush2.msra.mxu0 0.0
    %4127 = vmatprep.subr.mxu0 0.0
    %4128 = vmatpush2.msra.mxu0 0.0
    %4129 = vmatprep.subr.mxu0 0.0
    %4130 = vmatpush2.msra.mxu0 0.0
    %4131 = vmatprep.subr.mxu0 0.0
    %4132 = vmatpush2.msra.mxu0 0.0
    %4133 = vmatprep.subr.mxu0 0.0
    %4134 = vmatpush2.msra.mxu0 0.0
    %4135 = vmatprep.subr.mxu0 0.0
    %4136 = vmatpush2.msra.mxu0 0.0
    %4137 = vmatprep.mubr.f32.mxu0 0.0
    %4138 = vmatmul.mubr.f32.gmra.mxu0 %v4068
    %v4139 = vpop.f32.mrf.mxu0
    %v4140 = vadd.f32 0.0, %v4139
    %v4141 = vpop.f32.mrf.mxu0
    %4142 = vmatprep.mubr.f32.mxu0 0.0
    %4143 = vmatmul.mubr.f32.gmra.mxu0 %v4071
    %v4144 = vpop.f32.mrf.mxu0
    %v4145 = vadd.f32 0.0, %v4144
    %v4146 = vpop.f32.mrf.mxu0
    %4147 = vdwg.mxu0
    %v4148 = vadd.f32 %v3736, %v4053
    %v4149 = vadd.f32 %v3737, %v4058
    %v4150 = vadd.f32 %v3738, %v4140
    %v4151 = vadd.f32 %v3739, %v4145
    %v4153 = vlaneseq
    %v4154 = vshrl.u32 %v4153, 7
    %v4155 = vsub.s32 0, %v4154
    %v4156 = vrot.slane %v2301, %v4155
    %v4158 = vadd.f32 %v4148, %v4156
    %v4159 = vadd.f32 %v4149, %v4156
    %v4160 = vadd.f32 %v4150, %v4156
    %v4161 = vadd.f32 %v4151, %v4156
    %v4162 = vadd.f32 %v2284, %v4158
    %v4163 = vadd.f32 %v2285, %v4159
    %v4164 = vadd.f32 %v2286, %v4160
    %v4165 = vadd.f32 %v2287, %v4161
    %v4166 = vsel %vm114, %v4162, 0.0
    %4167 = vadd.xlane.f32.xlu0 %v4166
    %v4168 = vpop.xlane.xlu0 %4167
    %v4169 = vsel %vm114, %v4163, 0.0
    %4170 = vadd.xlane.f32.xlu0 %v4169
    %v4171 = vpop.xlane.xlu0 %4170
    %v4172 = vsel %vm114, %v4164, 0.0
    %4173 = vadd.xlane.f32.xlu0 %v4172
    %v4174 = vpop.xlane.xlu0 %4173
    %v4175 = vsel %vm114, %v4165, 0.0
    %4176 = vadd.xlane.f32.xlu0 %v4175
    %v4177 = vpop.xlane.xlu0 %4176
    %v4178 = vmul.f32 %v4168, %v1953
    %v4179 = vmul.f32 %v4171, %v1953
    %v4180 = vmul.f32 %v4174, %v1953
    %v4181 = vmul.f32 %v4177, %v1953
    %v4182 = vsub.f32 %v4162, %v4178
    %v4183 = vsub.f32 %v4163, %v4179
    %v4184 = vsub.f32 %v4164, %v4180
    %v4185 = vsub.f32 %v4165, %v4181
    %v4186 = vmul.f32 %v4182, %v4182
    %v4187 = vmul.f32 %v4183, %v4183
    %v4188 = vmul.f32 %v4184, %v4184
    %v4189 = vmul.f32 %v4185, %v4185
    %v4190 = vsel %vm114, %v4186, 0.0
    %4191 = vadd.xlane.f32.xlu0 %v4190
    %v4192 = vpop.xlane.xlu0 %4191
    %v4193 = vsel %vm114, %v4187, 0.0
    %4194 = vadd.xlane.f32.xlu0 %v4193
    %v4195 = vpop.xlane.xlu0 %4194
    %v4196 = vsel %vm114, %v4188, 0.0
    %4197 = vadd.xlane.f32.xlu0 %v4196
    %v4198 = vpop.xlane.xlu0 %4197
    %v4199 = vsel %vm114, %v4189, 0.0
    %4200 = vadd.xlane.f32.xlu0 %v4199
    %v4201 = vpop.xlane.xlu0 %4200
    %v4202 = vmul.f32 %v4192, %v1953
    %v4203 = vmul.f32 %v4195, %v1953
    %v4204 = vmul.f32 %v4198, %v1953
    %v4205 = vmul.f32 %v4201, %v1953
    %v4206 = vadd.f32 %v4202, 1e-05
    %v4207 = vadd.f32 %v4203, 1e-05
    %v4208 = vadd.f32 %v4204, 1e-05
    %v4209 = vadd.f32 %v4205, 1e-05
    %v4210 = vrsqrt.pop %v4206
    %v4211 = vrsqrt.pop %v4207
    %v4212 = vrsqrt.pop %v4208
    %v4213 = vrsqrt.pop %v4209
    %v4214 = vmul.f32 %v4182, %v4210
    %v4215 = vmul.f32 %v4183, %v4211
    %v4216 = vmul.f32 %v4184, %v4212
    %v4217 = vmul.f32 %v4185, %v4213
    %v4219 = vlaneseq
    %v4220 = vshrl.u32 %v4219, 7
    %v4221 = vsub.s32 0, %v4220
    %v4222 = vrot.slane %v2303, %v4221
    %v4224 = vmul.f32 %v4214, %v4222
    %v4225 = vmul.f32 %v4215, %v4222
    %v4226 = vmul.f32 %v4216, %v4222
    %v4227 = vmul.f32 %v4217, %v4222
    %v4229 = vlaneseq
    %v4230 = vshrl.u32 %v4229, 7
    %v4231 = vsub.s32 0, %v4230
    %v4232 = vrot.slane %v2305, %v4231
    %v4234 = vadd.f32 %v4224, %v4232
    %v4235 = vadd.f32 %v4225, %v4232
    %v4236 = vadd.f32 %v4226, %v4232
    %v4237 = vadd.f32 %v4227, %v4232
    %v4239 = vlaneseq
    %v4240 = vshrl.u32 %v4239, 7
    %v4241 = vsub.s32 0, %v4240
    %v4242 = vrot.slane %v2312, %v4241
    %v4245 = vsel %vm114, %v4234, 0
    %v4248 = vsel %vm114, %v4235, 0
    %v4251 = vsel %vm114, %v4236, 0
    %v4254 = vsel %vm114, %v4237, 0
    %4256 = vmatprep.subr.mxu0 0.0
    %4257 = vmatpush1.msra.mxu0 0.0
    %4258 = vmatprep.subr.mxu0 0.0
    %4259 = vmatpush1.msra.mxu0 0.0
    %4260 = vmatprep.subr.mxu0 0.0
    %4261 = vmatpush1.msra.mxu0 0.0
    %4262 = vmatprep.subr.mxu0 0.0
    %4263 = vmatpush1.msra.mxu0 0.0
    %4264 = vmatprep.subr.mxu0 0.0
    %4265 = vmatpush1.msra.mxu0 0.0
    %4266 = vmatprep.subr.mxu0 0.0
    %4267 = vmatpush1.msra.mxu0 0.0
    %4268 = vmatprep.subr.mxu0 0.0
    %4269 = vmatpush1.msra.mxu0 0.0
    %4270 = vmatprep.subr.mxu0 0.0
    %4271 = vmatpush1.msra.mxu0 0.0
    %4272 = vmatprep.subr.mxu0 0.0
    %4273 = vmatpush1.msra.mxu0 0.0
    %4274 = vmatprep.subr.mxu0 0.0
    %4275 = vmatpush1.msra.mxu0 0.0
    %4276 = vmatprep.subr.mxu0 0.0
    %4277 = vmatpush1.msra.mxu0 0.0
    %4278 = vmatprep.subr.mxu0 0.0
    %4279 = vmatpush1.msra.mxu0 0.0
    %4280 = vmatprep.subr.mxu0 0.0
    %4281 = vmatpush1.msra.mxu0 %v2310
    %4282 = vmatprep.subr.mxu0 0.0
    %4283 = vmatpush1.msra.mxu0 %v2309
    %4284 = vmatprep.subr.mxu0 0.0
    %4285 = vmatpush1.msra.mxu0 %v2308
    %4286 = vmatprep.subr.mxu0 0.0
    %4287 = vmatpush1.msra.mxu0 %v2307
    %4288 = vmatprep.subr.mxu0 0.0
    %4289 = vmatpush2.msra.mxu0 0.0
    %4290 = vmatprep.subr.mxu0 0.0
    %4291 = vmatpush2.msra.mxu0 0.0
    %4292 = vmatprep.subr.mxu0 0.0
    %4293 = vmatpush2.msra.mxu0 0.0
    %4294 = vmatprep.subr.mxu0 0.0
    %4295 = vmatpush2.msra.mxu0 0.0
    %4296 = vmatprep.subr.mxu0 0.0
    %4297 = vmatpush2.msra.mxu0 0.0
    %4298 = vmatprep.subr.mxu0 0.0
    %4299 = vmatpush2.msra.mxu0 0.0
    %4300 = vmatprep.subr.mxu0 0.0
    %4301 = vmatpush2.msra.mxu0 0.0
    %4302 = vmatprep.subr.mxu0 0.0
    %4303 = vmatpush2.msra.mxu0 0.0
    %4304 = vmatprep.subr.mxu0 0.0
    %4305 = vmatpush2.msra.mxu0 0.0
    %4306 = vmatprep.subr.mxu0 0.0
    %4307 = vmatpush2.msra.mxu0 0.0
    %4308 = vmatprep.subr.mxu0 0.0
    %4309 = vmatpush2.msra.mxu0 0.0
    %4310 = vmatprep.subr.mxu0 0.0
    %4311 = vmatpush2.msra.mxu0 0.0
    %4312 = vmatprep.subr.mxu0 0.0
    %4313 = vmatpush2.msra.mxu0 0.0
    %4314 = vmatprep.subr.mxu0 0.0
    %4315 = vmatpush2.msra.mxu0 0.0
    %4316 = vmatprep.subr.mxu0 0.0
    %4317 = vmatpush2.msra.mxu0 0.0
    %4318 = vmatprep.subr.mxu0 0.0
    %4319 = vmatpush2.msra.mxu0 0.0
    %4320 = vmatprep.mubr.f32.mxu0 0.0
    %4321 = vmatmul.mubr.f32.gmra.mxu0 %v4245
    %v4322 = vpop.f32.mrf.mxu0
    %v4323 = vadd.f32 %v4242, %v4322
    %v4324 = vpop.f32.mrf.mxu0
    %4325 = vmatprep.mubr.f32.mxu0 0.0
    %4326 = vmatmul.mubr.f32.gmra.mxu0 %v4248
    %v4327 = vpop.f32.mrf.mxu0
    %v4328 = vadd.f32 %v4242, %v4327
    %v4329 = vpop.f32.mrf.mxu0
    %4330 = vmatprep.mubr.f32.mxu0 0.0
    %4331 = vmatmul.mubr.f32.gmra.mxu0 %v4251
    %v4332 = vpop.f32.mrf.mxu0
    %v4333 = vadd.f32 %v4242, %v4332
    %v4334 = vpop.f32.mrf.mxu0
    %4335 = vmatprep.mubr.f32.mxu0 0.0
    %4336 = vmatmul.mubr.f32.gmra.mxu0 %v4254
    %v4337 = vpop.f32.mrf.mxu0
    %v4338 = vadd.f32 %v4242, %v4337
    %v4339 = vpop.f32.mrf.mxu0
    %4340 = vdwg.mxu0
    %v4341 = vmax.f32 %v4323, 0.0
    %v4342 = vmax.f32 %v4328, 0.0
    %v4343 = vmax.f32 %v4333, 0.0
    %v4344 = vmax.f32 %v4338, 0.0
    %v4346 = vlaneseq
    %v4347 = vshrl.u32 %v4346, 7
    %v4348 = vsub.s32 0, %v4347
    %v4349 = vrot.slane %v2331, %v4348
    %4351 = vmatprep.subr.mxu0 0.0
    %4352 = vmatpush1.msra.mxu0 %v2329
    %4353 = vmatprep.subr.mxu0 0.0
    %4354 = vmatpush1.msra.mxu0 %v2328
    %4355 = vmatprep.subr.mxu0 0.0
    %4356 = vmatpush1.msra.mxu0 %v2327
    %4357 = vmatprep.subr.mxu0 0.0
    %4358 = vmatpush1.msra.mxu0 %v2326
    %4359 = vmatprep.subr.mxu0 0.0
    %4360 = vmatpush1.msra.mxu0 %v2325
    %4361 = vmatprep.subr.mxu0 0.0
    %4362 = vmatpush1.msra.mxu0 %v2324
    %4363 = vmatprep.subr.mxu0 0.0
    %4364 = vmatpush1.msra.mxu0 %v2323
    %4365 = vmatprep.subr.mxu0 0.0
    %4366 = vmatpush1.msra.mxu0 %v2322
    %4367 = vmatprep.subr.mxu0 0.0
    %4368 = vmatpush1.msra.mxu0 %v2321
    %4369 = vmatprep.subr.mxu0 0.0
    %4370 = vmatpush1.msra.mxu0 %v2320
    %4371 = vmatprep.subr.mxu0 0.0
    %4372 = vmatpush1.msra.mxu0 %v2319
    %4373 = vmatprep.subr.mxu0 0.0
    %4374 = vmatpush1.msra.mxu0 %v2318
    %4375 = vmatprep.subr.mxu0 0.0
    %4376 = vmatpush1.msra.mxu0 %v2317
    %4377 = vmatprep.subr.mxu0 0.0
    %4378 = vmatpush1.msra.mxu0 %v2316
    %4379 = vmatprep.subr.mxu0 0.0
    %4380 = vmatpush1.msra.mxu0 %v2315
    %4381 = vmatprep.subr.mxu0 0.0
    %4382 = vmatpush1.msra.mxu0 %v2314
    %4383 = vmatprep.subr.mxu0 0.0
    %4384 = vmatpush2.msra.mxu0 0.0
    %4385 = vmatprep.subr.mxu0 0.0
    %4386 = vmatpush2.msra.mxu0 0.0
    %4387 = vmatprep.subr.mxu0 0.0
    %4388 = vmatpush2.msra.mxu0 0.0
    %4389 = vmatprep.subr.mxu0 0.0
    %4390 = vmatpush2.msra.mxu0 0.0
    %4391 = vmatprep.subr.mxu0 0.0
    %4392 = vmatpush2.msra.mxu0 0.0
    %4393 = vmatprep.subr.mxu0 0.0
    %4394 = vmatpush2.msra.mxu0 0.0
    %4395 = vmatprep.subr.mxu0 0.0
    %4396 = vmatpush2.msra.mxu0 0.0
    %4397 = vmatprep.subr.mxu0 0.0
    %4398 = vmatpush2.msra.mxu0 0.0
    %4399 = vmatprep.subr.mxu0 0.0
    %4400 = vmatpush2.msra.mxu0 0.0
    %4401 = vmatprep.subr.mxu0 0.0
    %4402 = vmatpush2.msra.mxu0 0.0
    %4403 = vmatprep.subr.mxu0 0.0
    %4404 = vmatpush2.msra.mxu0 0.0
    %4405 = vmatprep.subr.mxu0 0.0
    %4406 = vmatpush2.msra.mxu0 0.0
    %4407 = vmatprep.subr.mxu0 0.0
    %4408 = vmatpush2.msra.mxu0 0.0
    %4409 = vmatprep.subr.mxu0 0.0
    %4410 = vmatpush2.msra.mxu0 0.0
    %4411 = vmatprep.subr.mxu0 0.0
    %4412 = vmatpush2.msra.mxu0 0.0
    %4413 = vmatprep.subr.mxu0 0.0
    %4414 = vmatpush2.msra.mxu0 0.0
    %4415 = vmatprep.mubr.f32.mxu0 0.0
    %4416 = vmatmul.mubr.f32.gmra.mxu0 %v4341
    %v4417 = vpop.f32.mrf.mxu0
    %v4418 = vadd.f32 %v4349, %v4417
    %v4419 = vpop.f32.mrf.mxu0
    %4420 = vmatprep.mubr.f32.mxu0 0.0
    %4421 = vmatmul.mubr.f32.gmra.mxu0 %v4342
    %v4422 = vpop.f32.mrf.mxu0
    %v4423 = vpop.f32.mrf.mxu0
    %4424 = vmatprep.mubr.f32.mxu0 0.0
    %4425 = vmatmul.mubr.f32.gmra.mxu0 %v4343
    %v4426 = vpop.f32.mrf.mxu0
    %v4427 = vadd.f32 %v4349, %v4426
    %v4428 = vpop.f32.mrf.mxu0
    %4429 = vmatprep.mubr.f32.mxu0 0.0
    %4430 = vmatmul.mubr.f32.gmra.mxu0 %v4344
    %v4431 = vpop.f32.mrf.mxu0
    %v4432 = vpop.f32.mrf.mxu0
    %4433 = vdwg.mxu0
    %v4434 = vadd.f32 %v4234, %v4418
    %v4435 = vadd.f32 %v4236, %v4427
    %v4436 = vsel %vm114, %v4434, 0.0
    %4437 = vadd.xlane.f32.xlu0 %v4436
    %v4438 = vpop.xlane.xlu0 %4437
    %v4439 = vsel %vm114, %v4435, 0.0
    %4440 = vadd.xlane.f32.xlu0 %v4439
    %v4441 = vpop.xlane.xlu0 %4440
    %v4442 = vmul.f32 %v4438, %v1953
    %v4443 = vmul.f32 %v4441, %v1953
    %v4444 = vsub.f32 %v4434, %v4442
    %v4445 = vsub.f32 %v4435, %v4443
    %v4446 = vmul.f32 %v4444, %v4444
    %v4447 = vmul.f32 %v4445, %v4445
    %v4448 = vsel %vm114, %v4446, 0.0
    %4449 = vadd.xlane.f32.xlu0 %v4448
    %v4450 = vpop.xlane.xlu0 %4449
    %v4451 = vsel %vm114, %v4447, 0.0
    %4452 = vadd.xlane.f32.xlu0 %v4451
    %v4453 = vpop.xlane.xlu0 %4452
    %v4454 = vmul.f32 %v4450, %v1953
    %v4455 = vmul.f32 %v4453, %v1953
    %v4456 = vadd.f32 %v4454, 1e-05
    %v4457 = vadd.f32 %v4455, 1e-05
    %v4458 = vrsqrt.pop %v4456
    %v4459 = vrsqrt.pop %v4457
    %v4460 = vmul.f32 %v4444, %v4458
    %v4461 = vmul.f32 %v4445, %v4459
    %v4463 = vlaneseq
    %v4464 = vshrl.u32 %v4463, 7
    %v4465 = vsub.s32 0, %v4464
    %v4466 = vrot.slane %v2333, %v4465
    %v4468 = vmul.f32 %v4460, %v4466
    %v4469 = vmul.f32 %v4461, %v4466
    %v4471 = vlaneseq
    %v4472 = vshrl.u32 %v4471, 7
    %v4473 = vsub.s32 0, %v4472
    %v4474 = vrot.slane %v2335, %v4473
    %v4476 = vadd.f32 %v4468, %v4474
    %v4477 = vadd.f32 %v4469, %v4474
    %v4478 = vld [vmem:[%s14] sm:$0xff]
    %v4479 = vld [vmem:[%s14 + $0x8] sm:$0xff]
    %v4480 = vld [vmem:[%s14 + $0x10] sm:$0xff]
    %v4481 = vld [vmem:[%s14 + $0x18] sm:$0xff]
    %v4482 = vld [vmem:[%s15] sm:$0x1]
    %v4484 = vlaneseq
    %v4485 = vshrl.u32 %v4484, 7
    %v4486 = vsub.s32 0, %v4485
    %v4487 = vrot.slane %v4482, %v4486
    %v4491 = vrot.slane %v4477, 7
    %vm4492 = vcmask 1041409
    %v4493 = vsel %vm4492, %v4491, %v4476
    %v4494 = vsel %vm114, %v4493, 0
    %4496 = vmatprep.subr.mxu0 0.0
    %4497 = vmatpush1.msra.mxu0 0.0
    %4498 = vmatprep.subr.mxu0 0.0
    %4499 = vmatpush1.msra.mxu0 0.0
    %4500 = vmatprep.subr.mxu0 0.0
    %4501 = vmatpush1.msra.mxu0 0.0
    %4502 = vmatprep.subr.mxu0 0.0
    %4503 = vmatpush1.msra.mxu0 0.0
    %4504 = vmatprep.subr.mxu0 0.0
    %4505 = vmatpush1.msra.mxu0 0.0
    %4506 = vmatprep.subr.mxu0 0.0
    %4507 = vmatpush1.msra.mxu0 0.0
    %4508 = vmatprep.subr.mxu0 0.0
    %4509 = vmatpush1.msra.mxu0 0.0
    %4510 = vmatprep.subr.mxu0 0.0
    %4511 = vmatpush1.msra.mxu0 0.0
    %4512 = vmatprep.subr.mxu0 0.0
    %4513 = vmatpush1.msra.mxu0 0.0
    %4514 = vmatprep.subr.mxu0 0.0
    %4515 = vmatpush1.msra.mxu0 0.0
    %4516 = vmatprep.subr.mxu0 0.0
    %4517 = vmatpush1.msra.mxu0 0.0
    %4518 = vmatprep.subr.mxu0 0.0
    %4519 = vmatpush1.msra.mxu0 0.0
    %4520 = vmatprep.subr.mxu0 0.0
    %4521 = vmatpush1.msra.mxu0 %v4481
    %4522 = vmatprep.subr.mxu0 0.0
    %4523 = vmatpush1.msra.mxu0 %v4480
    %4524 = vmatprep.subr.mxu0 0.0
    %4525 = vmatpush1.msra.mxu0 %v4479
    %4526 = vmatprep.subr.mxu0 0.0
    %4527 = vmatpush1.msra.mxu0 %v4478
    %4528 = vmatprep.subr.mxu0 0.0
    %4529 = vmatpush2.msra.mxu0 0.0
    %4530 = vmatprep.subr.mxu0 0.0
    %4531 = vmatpush2.msra.mxu0 0.0
    %4532 = vmatprep.subr.mxu0 0.0
    %4533 = vmatpush2.msra.mxu0 0.0
    %4534 = vmatprep.subr.mxu0 0.0
    %4535 = vmatpush2.msra.mxu0 0.0
    %4536 = vmatprep.subr.mxu0 0.0
    %4537 = vmatpush2.msra.mxu0 0.0
    %4538 = vmatprep.subr.mxu0 0.0
    %4539 = vmatpush2.msra.mxu0 0.0
    %4540 = vmatprep.subr.mxu0 0.0
    %4541 = vmatpush2.msra.mxu0 0.0
    %4542 = vmatprep.subr.mxu0 0.0
    %4543 = vmatpush2.msra.mxu0 0.0
    %4544 = vmatprep.subr.mxu0 0.0
    %4545 = vmatpush2.msra.mxu0 0.0
    %4546 = vmatprep.subr.mxu0 0.0
    %4547 = vmatpush2.msra.mxu0 0.0
    %4548 = vmatprep.subr.mxu0 0.0
    %4549 = vmatpush2.msra.mxu0 0.0
    %4550 = vmatprep.subr.mxu0 0.0
    %4551 = vmatpush2.msra.mxu0 0.0
    %4552 = vmatprep.subr.mxu0 0.0
    %4553 = vmatpush2.msra.mxu0 0.0
    %4554 = vmatprep.subr.mxu0 0.0
    %4555 = vmatpush2.msra.mxu0 0.0
    %4556 = vmatprep.subr.mxu0 0.0
    %4557 = vmatpush2.msra.mxu0 0.0
    %4558 = vmatprep.subr.mxu0 0.0
    %4559 = vmatpush2.msra.mxu0 0.0
    %4560 = vmatprep.mubr.f32.mxu0 0.0
    %4561 = vmatmul.mubr.f32.gmra.mxu0 %v4494
    %v4562 = vpop.f32.mrf.mxu0
    %v4563 = vadd.f32 %v4487, %v4562
    %v4564 = vpop.f32.mrf.mxu0
    %4565 = vdwg.mxu0
    %vm4566 = vcmask 123904
    %4567 = vst.msk [vmem:[#allocation2] sm:$0x3] %vm4566, %v4563
    // Predicated region
    $region66: #{tpu_custom_call.1} parent=1 // pred_check
      _
    $region67: #{tpu_custom_call.1} parent=1 // pred_check_branch
      %4569 = sbr.rel (0) target = $region69
    $region68: #{tpu_custom_call.1} parent=1 // pred_region
      %s4571 = ssub.s32 32, 32
      %4572 = vsyncadd [#allocation3], %s4571
      %s4574 = sshll.u32 [#allocation2], 4
      %s4575 = int_to_ptr.vmem [resolvable:$true] %s4574
      %4577 = dma.vmem_to_hbm [thread:$0]  %s4575, 32, %s16, [#allocation3]
    $region69: #{tpu_custom_call.1} parent=1 // pred_fallthru
      _
    // Predicated region
    $region70: #{tpu_custom_call.1} parent=1 // pred_check
      _
    $region71: #{tpu_custom_call.1} parent=1 // pred_check_branch
      %4579 = sbr.rel (0) target = $region73
    $region72: #{tpu_custom_call.1} parent=1 // pred_region
      %4580 = dma.done [#allocation3], 32
    $region73: #{tpu_custom_call.1} parent=1 // pred_fallthru
      _
    %4581 = vsyncpa [#allocation3], 1

</llo_original>
